<compile_context>
chip_gen: v7x
topology: tpu7x:2x2x1
jax: 0.10.0
libtpu: 0.0.40
codegen_flags: <defaults>
</compile_context>

<pallas_src>
import jax
import jax.numpy as jnp
from jax.experimental import pallas as pl
from jax.experimental.pallas import tpu as pltpu

# ----- scaled-down hyperparameters (structure identical to the PyTorch Net) -----
N = 2            # batch
WIN = 40         # input width            (original: 450)
K1 = 8           # conv1 out channels     (original: 1000)
K2 = 16          # conv2 out channels     (original: 2000)
W1 = 5           # conv1 kernel width     (original: 5)
W2 = 6           # conv2 kernel width     (original: 30)
POOL = 5         # MaxPool2d((1, 5), stride=(1, 1))
FC1, FC2, FC3, FC4 = 64, 32, 16, 2       # original: 3000, 800, 100, 2

WOUT1 = WIN - W1 + 1          # 36   conv1 out width (H collapses to 1)
WP1 = WOUT1 - POOL + 1        # 32   pool1 out width
WOUT2 = WP1 - W2 + 1          # 27   conv2 out width
WP2 = WOUT2 - POOL + 1        # 23   pool2 out width
TO_LINEAR = K2 * 1 * WP2      # 368  self._to_linear

HIGHEST = jax.lax.Precision.HIGHEST      # reference only — NOT used in-kernel


# ---------------------------------------------------------------------------
# Fused Pallas kernel: whole forward pass, everything VMEM-resident
# ---------------------------------------------------------------------------
def _net_fused_kernel(x_ref, w1_ref, b1_ref, w2_ref, b2_ref,
                      fw1_ref, fb1_ref, fw2_ref, fb2_ref,
                      fw3_ref, fb3_ref, fw4_ref, fb4_ref,
                      o_ref, flat_ref):
    w1 = w1_ref[...]        # (K1, 2*W1)  f32
    b1 = b1_ref[...]        # (K1, 1)
    w2 = w2_ref[...]        # (K2, K1*W2) f32
    b2 = b2_ref[...]        # (K2, 1)

    # -------- conv/pool pipeline, width-on-lanes, per batch element --------
    for n in range(N):                                  # static unroll (N=2)
        xn = x_ref[n]                                   # (2, WIN)

        # conv1 + ReLU  -> (K1, WOUT1): VPU tap-FMA (channels x sublane,
        # width x lane); taps are cheap lane-offset slices.
        acc1 = jnp.broadcast_to(b1, (K1, WOUT1))
        for hh in range(2):
            for dw in range(W1):
                col = hh * W1 + dw                      # OIHW flatten order
                acc1 = acc1 + w1[:, col:col + 1] * xn[hh:hh + 1, dw:dw + WOUT1]
        h1 = jnp.maximum(acc1, 0.0)

        # pool1: sliding max along the lane (width) axis
        p1 = h1[:, 0:WP1]
        for d in range(1, POOL):
            p1 = jnp.maximum(p1, h1[:, d:d + WP1])

        # conv2 + ReLU  -> (K2, WOUT2): VPU tap-FMA over (k1, dw) taps
        acc2 = jnp.broadcast_to(b2, (K2, WOUT2))
        for c in range(K1):
            for dw in range(W2):
                col = c * W2 + dw                       # OIHW flatten order
                acc2 = acc2 + w2[:, col:col + 1] * p1[c:c + 1, dw:dw + WOUT2]
        h2 = jnp.maximum(acc2, 0.0)

        # pool2
        p2 = h2[:, 0:WP2]
        for d in range(1, POOL):
            p2 = jnp.maximum(p2, h2[:, d:d + WP2])

        # NCHW flatten (channel-major, width inner) written straight into the
        # VMEM scratch row — reproduces PyTorch's .view(-1, _to_linear) with
        # no runtime transpose.
        for c in range(K2):
            flat_ref[n:n + 1, c * WP2:(c + 1) * WP2] = p2[c:c + 1, :]

    # ------------------- FC stack on the MXU (bf16 operands, f32 acc) -------
    xf = flat_ref[...]                                   # (N, TO_LINEAR) f32
    z = jnp.dot(xf.astype(jnp.bfloat16), fw1_ref[...],
                preferred_element_type=jnp.float32) + fb1_ref[...]
    z = jnp.maximum(z, 0.0)
    z = jnp.dot(z.astype(jnp.bfloat16), fw2_ref[...],
                preferred_element_type=jnp.float32) + fb2_ref[...]
    z = jnp.maximum(z, 0.0)
    z = jnp.dot(z.astype(jnp.bfloat16), fw3_ref[...],
                preferred_element_type=jnp.float32) + fb3_ref[...]
    z = jnp.maximum(z, 0.0)
    z = jnp.dot(z.astype(jnp.bfloat16), fw4_ref[...],
                preferred_element_type=jnp.float32) + fb4_ref[...]
    o_ref[...] = z.astype(o_ref.dtype)


def _full_spec(shape):
    zeros = (0,) * len(shape)
    return pl.BlockSpec(shape, lambda i, _z=zeros: _z)


@jax.jit
def net_forward(x, kparams):
    """x: (N, 1, 2, WIN) NCHW.  kparams: kernel-layout params (prepare_params)."""
    (w1, b1, w2, b2, fw1, fb1, fw2, fb2, fw3, fb3, fw4, fb4) = kparams
    x3 = x.reshape(N, 2, WIN)           # free unit-dim removal (no data motion)
    args = (x3, w1, b1, w2, b2, fw1, fb1, fw2, fb2, fw3, fb3, fw4, fb4)
    return pl.pallas_call(
        _net_fused_kernel,
        out_shape=jax.ShapeDtypeStruct((N, FC4), jnp.float32),
        grid=(1,),
        in_specs=[_full_spec(a.shape) for a in args],
        out_specs=_full_spec((N, FC4)),
        scratch_shapes=[pltpu.VMEM((N, TO_LINEAR), jnp.float32)],
        compiler_params=pltpu.CompilerParams(
            dimension_semantics=("arbitrary",)),
    )(*args)


# ---------------------------------------------------------------------------
# One-time parameter preparation (all reshapes/transposes/casts hoisted here)
# ---------------------------------------------------------------------------
def prepare_params(params):
    (w1, b1, w2, b2, fw1, fb1, fw2, fb2, fw3, fb3, fw4, fb4) = params
    return (
        w1.reshape(K1, 2 * W1),                   # conv1 taps, f32 (VPU path)
        b1.reshape(K1, 1),
        w2.reshape(K2, K1 * W2),                  # conv2 taps, f32
        b2.reshape(K2, 1),
        fw1.T.astype(jnp.bfloat16),               # (TO_LINEAR, FC1) bf16 MXU operand
        fb1.reshape(1, FC1),
        fw2.T.astype(jnp.bfloat16), fb2.reshape(1, FC2),
        fw3.T.astype(jnp.bfloat16), fb3.reshape(1, FC3),
        fw4.T.astype(jnp.bfloat16), fb4.reshape(1, FC4),
    )


# ---------------------------------------------------------------------------
# Pure-JAX reference (lax.conv, f32 HIGHEST) used only to validate semantics
# ---------------------------------------------------------------------------
def _maxpool_ref(x):                               # x: NCHW, pool (1, POOL)
    wout = x.shape[-1] - POOL + 1
    return jnp.max(jnp.stack([x[..., d:d + wout] for d in range(POOL)], 0), 0)


def reference_forward(x, params):
    (w1, b1, w2, b2, fw1, fb1, fw2, fb2, fw3, fb3, fw4, fb4) = params
    dn = ("NCHW", "OIHW", "NCHW")
    h = jax.lax.conv_general_dilated(x, w1, (2, 1), "VALID",
                                     dimension_numbers=dn, precision=HIGHEST)
    h = _maxpool_ref(jax.nn.relu(h + b1.reshape(1, K1, 1, 1)))
    h = jax.lax.conv_general_dilated(h, w2, (1, 1), "VALID",
                                     dimension_numbers=dn, precision=HIGHEST)
    h = _maxpool_ref(jax.nn.relu(h + b2.reshape(1, K2, 1, 1)))
    h = h.reshape(N, -1)
    h = jax.nn.relu(jnp.dot(h, fw1.T, precision=HIGHEST) + fb1)
    h = jax.nn.relu(jnp.dot(h, fw2.T, precision=HIGHEST) + fb2)
    h = jax.nn.relu(jnp.dot(h, fw3.T, precision=HIGHEST) + fb3)
    return jnp.dot(h, fw4.T, precision=HIGHEST) + fb4


# ---------------------------------------------------------------------------
def init_params(key):
    ks = jax.random.split(key, 12)
    s = 0.05
    w1 = s * jax.random.normal(ks[0], (K1, 1, 2, W1), jnp.float32)
    b1 = s * jax.random.normal(ks[1], (K1,), jnp.float32)
    w2 = s * jax.random.normal(ks[2], (K2, K1, 1, W2), jnp.float32)
    b2 = s * jax.random.normal(ks[3], (K2,), jnp.float32)
    fw1 = s * jax.random.normal(ks[4], (FC1, TO_LINEAR), jnp.float32)
    fb1 = s * jax.random.normal(ks[5], (FC1,), jnp.float32)
    fw2 = s * jax.random.normal(ks[6], (FC2, FC1), jnp.float32)
    fb2 = s * jax.random.normal(ks[7], (FC2,), jnp.float32)
    fw3 = s * jax.random.normal(ks[8], (FC3, FC2), jnp.float32)
    fb3 = s * jax.random.normal(ks[9], (FC3,), jnp.float32)
    fw4 = s * jax.random.normal(ks[10], (FC4, FC3), jnp.float32)
    fb4 = s * jax.random.normal(ks[11], (FC4,), jnp.float32)
    return (w1, b1, w2, b2, fw1, fb1, fw2, fb2, fw3, fb3, fw4, fb4)


if __name__ == "__main__":
    # TODO(synk): the PyTorch module's print_and_write_to_file (records
    # self._to_linear to a results file) is host I/O with no kernel
    # equivalent; intentionally omitted.
    key = jax.random.PRNGKey(0)
    k_x, k_p = jax.random.split(key)
    x = jax.random.normal(k_x, (N, 1, 2, WIN), jnp.float32)   # NCHW input
    params = init_params(k_p)
    kparams = prepare_params(params)      # one-time layout prep, not per call

    out = jax.block_until_ready(net_forward(x, kparams))
    ref = jax.block_until_ready(reference_forward(x, params))

    assert out.shape == (N, FC4), out.shape
    # FC stack uses bf16 MXU operands (f32 accumulate); compare against the
    # f32 HIGHEST-precision reference with a bf16-appropriate tolerance.
    assert jnp.allclose(out, ref, rtol=5e-2, atol=5e-3), (out, ref)
    print("KERNEL_OK")
</pallas_src>

<mosaic_0001>
module attributes {stable_mosaic.version = 11 : i64} {
  func.func @_net_fused_kernel(%arg0: i32, %arg1: memref<2x2x40xf32, #tpu.memory_space<vmem>>, %arg2: memref<8x10xf32, #tpu.memory_space<vmem>>, %arg3: memref<8x1xf32, #tpu.memory_space<vmem>>, %arg4: memref<16x48xf32, #tpu.memory_space<vmem>>, %arg5: memref<16x1xf32, #tpu.memory_space<vmem>>, %arg6: memref<368x64xbf16, #tpu.memory_space<vmem>>, %arg7: memref<1x64xf32, #tpu.memory_space<vmem>>, %arg8: memref<64x32xbf16, #tpu.memory_space<vmem>>, %arg9: memref<1x32xf32, #tpu.memory_space<vmem>>, %arg10: memref<32x16xbf16, #tpu.memory_space<vmem>>, %arg11: memref<1x16xf32, #tpu.memory_space<vmem>>, %arg12: memref<16x2xbf16, #tpu.memory_space<vmem>>, %arg13: memref<1x2xf32, #tpu.memory_space<vmem>>, %arg14: memref<2x2xf32, #tpu.memory_space<vmem>>, %arg15: memref<2x368xf32, #tpu.memory_space<vmem>>) attributes {dimension_semantics = [#tpu.dimension_semantics<arbitrary>], iteration_bounds = array<i64: 1>, scalar_prefetch = 0 : i64, scratch_operands = 1 : i64, tpu.core_type = #tpu.core_type<tc>, window_params = [{pipeline_mode = #tpu.pipeline_mode<synchronous>, transform_indices = @transform_0, window_bounds = array<i64: 2, 2, 40>}, {pipeline_mode = #tpu.pipeline_mode<synchronous>, transform_indices = @transform_1, window_bounds = array<i64: 8, 10>}, {pipeline_mode = #tpu.pipeline_mode<synchronous>, transform_indices = @transform_2, window_bounds = array<i64: 8, 1>}, {pipeline_mode = #tpu.pipeline_mode<synchronous>, transform_indices = @transform_3, window_bounds = array<i64: 16, 48>}, {pipeline_mode = #tpu.pipeline_mode<synchronous>, transform_indices = @transform_4, window_bounds = array<i64: 16, 1>}, {pipeline_mode = #tpu.pipeline_mode<synchronous>, transform_indices = @transform_5, window_bounds = array<i64: 368, 64>}, {pipeline_mode = #tpu.pipeline_mode<synchronous>, transform_indices = @transform_6, window_bounds = array<i64: 1, 64>}, {pipeline_mode = #tpu.pipeline_mode<synchronous>, transform_indices = @transform_7, window_bounds = array<i64: 64, 32>}, {pipeline_mode = #tpu.pipeline_mode<synchronous>, transform_indices = @transform_8, window_bounds = array<i64: 1, 32>}, {pipeline_mode = #tpu.pipeline_mode<synchronous>, transform_indices = @transform_9, window_bounds = array<i64: 32, 16>}, {pipeline_mode = #tpu.pipeline_mode<synchronous>, transform_indices = @transform_10, window_bounds = array<i64: 1, 16>}, {pipeline_mode = #tpu.pipeline_mode<synchronous>, transform_indices = @transform_11, window_bounds = array<i64: 16, 2>}, {pipeline_mode = #tpu.pipeline_mode<synchronous>, transform_indices = @transform_12, window_bounds = array<i64: 1, 2>}, {pipeline_mode = #tpu.pipeline_mode<synchronous>, transform_indices = @transform_13, window_bounds = array<i64: 2, 2>}]} {
    %c0 = arith.constant 0 : index
    %c0_0 = arith.constant 0 : index
    %0 = vector.load %arg2[%c0, %c0_0] : memref<8x10xf32, #tpu.memory_space<vmem>>, vector<8x10xf32>
    %c0_1 = arith.constant 0 : index
    %c0_2 = arith.constant 0 : index
    %1 = vector.load %arg3[%c0_1, %c0_2] : memref<8x1xf32, #tpu.memory_space<vmem>>, vector<8x1xf32>
    %c0_3 = arith.constant 0 : index
    %c0_4 = arith.constant 0 : index
    %2 = vector.load %arg4[%c0_3, %c0_4] : memref<16x48xf32, #tpu.memory_space<vmem>>, vector<16x48xf32>
    %c0_5 = arith.constant 0 : index
    %c0_6 = arith.constant 0 : index
    %3 = vector.load %arg5[%c0_5, %c0_6] : memref<16x1xf32, #tpu.memory_space<vmem>>, vector<16x1xf32>
    %c0_7 = arith.constant 0 : index
    %c0_8 = arith.constant 0 : index
    %c0_9 = arith.constant 0 : index
    %4 = vector.load %arg1[%c0_7, %c0_8, %c0_9] : memref<2x2x40xf32, #tpu.memory_space<vmem>>, vector<1x2x40xf32>
    %5 = vector.shape_cast %4 : vector<1x2x40xf32> to vector<2x40xf32>
    %6 = vector.shape_cast %1 : vector<8x1xf32> to vector<8x1xf32>
    %7 = vector.broadcast %6 : vector<8x1xf32> to vector<8x36xf32>
    %8 = vector.extract_strided_slice %0 {offsets = [0, 0], sizes = [8, 1], strides = [1, 1]} : vector<8x10xf32> to vector<8x1xf32>
    %9 = vector.extract_strided_slice %5 {offsets = [0, 0], sizes = [1, 36], strides = [1, 1]} : vector<2x40xf32> to vector<1x36xf32>
    %10 = vector.broadcast %8 : vector<8x1xf32> to vector<8x36xf32>
    %11 = vector.broadcast %9 : vector<1x36xf32> to vector<8x36xf32>
    %12 = arith.mulf %10, %11 : vector<8x36xf32>
    %13 = arith.addf %7, %12 : vector<8x36xf32>
    %14 = vector.extract_strided_slice %0 {offsets = [0, 1], sizes = [8, 1], strides = [1, 1]} : vector<8x10xf32> to vector<8x1xf32>
    %15 = vector.extract_strided_slice %5 {offsets = [0, 1], sizes = [1, 36], strides = [1, 1]} : vector<2x40xf32> to vector<1x36xf32>
    %16 = vector.broadcast %14 : vector<8x1xf32> to vector<8x36xf32>
    %17 = vector.broadcast %15 : vector<1x36xf32> to vector<8x36xf32>
    %18 = arith.mulf %16, %17 : vector<8x36xf32>
    %19 = arith.addf %13, %18 : vector<8x36xf32>
    %20 = vector.extract_strided_slice %0 {offsets = [0, 2], sizes = [8, 1], strides = [1, 1]} : vector<8x10xf32> to vector<8x1xf32>
    %21 = vector.extract_strided_slice %5 {offsets = [0, 2], sizes = [1, 36], strides = [1, 1]} : vector<2x40xf32> to vector<1x36xf32>
    %22 = vector.broadcast %20 : vector<8x1xf32> to vector<8x36xf32>
    %23 = vector.broadcast %21 : vector<1x36xf32> to vector<8x36xf32>
    %24 = arith.mulf %22, %23 : vector<8x36xf32>
    %25 = arith.addf %19, %24 : vector<8x36xf32>
    %26 = vector.extract_strided_slice %0 {offsets = [0, 3], sizes = [8, 1], strides = [1, 1]} : vector<8x10xf32> to vector<8x1xf32>
    %27 = vector.extract_strided_slice %5 {offsets = [0, 3], sizes = [1, 36], strides = [1, 1]} : vector<2x40xf32> to vector<1x36xf32>
    %28 = vector.broadcast %26 : vector<8x1xf32> to vector<8x36xf32>
    %29 = vector.broadcast %27 : vector<1x36xf32> to vector<8x36xf32>
    %30 = arith.mulf %28, %29 : vector<8x36xf32>
    %31 = arith.addf %25, %30 : vector<8x36xf32>
    %32 = vector.extract_strided_slice %0 {offsets = [0, 4], sizes = [8, 1], strides = [1, 1]} : vector<8x10xf32> to vector<8x1xf32>
    %33 = vector.extract_strided_slice %5 {offsets = [0, 4], sizes = [1, 36], strides = [1, 1]} : vector<2x40xf32> to vector<1x36xf32>
    %34 = vector.broadcast %32 : vector<8x1xf32> to vector<8x36xf32>
    %35 = vector.broadcast %33 : vector<1x36xf32> to vector<8x36xf32>
    %36 = arith.mulf %34, %35 : vector<8x36xf32>
    %37 = arith.addf %31, %36 : vector<8x36xf32>
    %38 = vector.extract_strided_slice %0 {offsets = [0, 5], sizes = [8, 1], strides = [1, 1]} : vector<8x10xf32> to vector<8x1xf32>
    %39 = vector.extract_strided_slice %5 {offsets = [1, 0], sizes = [1, 36], strides = [1, 1]} : vector<2x40xf32> to vector<1x36xf32>
    %40 = vector.broadcast %38 : vector<8x1xf32> to vector<8x36xf32>
    %41 = vector.broadcast %39 : vector<1x36xf32> to vector<8x36xf32>
    %42 = arith.mulf %40, %41 : vector<8x36xf32>
    %43 = arith.addf %37, %42 : vector<8x36xf32>
    %44 = vector.extract_strided_slice %0 {offsets = [0, 6], sizes = [8, 1], strides = [1, 1]} : vector<8x10xf32> to vector<8x1xf32>
    %45 = vector.extract_strided_slice %5 {offsets = [1, 1], sizes = [1, 36], strides = [1, 1]} : vector<2x40xf32> to vector<1x36xf32>
    %46 = vector.broadcast %44 : vector<8x1xf32> to vector<8x36xf32>
    %47 = vector.broadcast %45 : vector<1x36xf32> to vector<8x36xf32>
    %48 = arith.mulf %46, %47 : vector<8x36xf32>
    %49 = arith.addf %43, %48 : vector<8x36xf32>
    %50 = vector.extract_strided_slice %0 {offsets = [0, 7], sizes = [8, 1], strides = [1, 1]} : vector<8x10xf32> to vector<8x1xf32>
    %51 = vector.extract_strided_slice %5 {offsets = [1, 2], sizes = [1, 36], strides = [1, 1]} : vector<2x40xf32> to vector<1x36xf32>
    %52 = vector.broadcast %50 : vector<8x1xf32> to vector<8x36xf32>
    %53 = vector.broadcast %51 : vector<1x36xf32> to vector<8x36xf32>
    %54 = arith.mulf %52, %53 : vector<8x36xf32>
    %55 = arith.addf %49, %54 : vector<8x36xf32>
    %56 = vector.extract_strided_slice %0 {offsets = [0, 8], sizes = [8, 1], strides = [1, 1]} : vector<8x10xf32> to vector<8x1xf32>
    %57 = vector.extract_strided_slice %5 {offsets = [1, 3], sizes = [1, 36], strides = [1, 1]} : vector<2x40xf32> to vector<1x36xf32>
    %58 = vector.broadcast %56 : vector<8x1xf32> to vector<8x36xf32>
    %59 = vector.broadcast %57 : vector<1x36xf32> to vector<8x36xf32>
    %60 = arith.mulf %58, %59 : vector<8x36xf32>
    %61 = arith.addf %55, %60 : vector<8x36xf32>
    %62 = vector.extract_strided_slice %0 {offsets = [0, 9], sizes = [8, 1], strides = [1, 1]} : vector<8x10xf32> to vector<8x1xf32>
    %63 = vector.extract_strided_slice %5 {offsets = [1, 4], sizes = [1, 36], strides = [1, 1]} : vector<2x40xf32> to vector<1x36xf32>
    %64 = vector.broadcast %62 : vector<8x1xf32> to vector<8x36xf32>
    %65 = vector.broadcast %63 : vector<1x36xf32> to vector<8x36xf32>
    %66 = arith.mulf %64, %65 : vector<8x36xf32>
    %67 = arith.addf %61, %66 : vector<8x36xf32>
    %cst = arith.constant 0.000000e+00 : f32
    %68 = vector.broadcast %cst : f32 to vector<8x36xf32>
    %69 = arith.maximumf %67, %68 : vector<8x36xf32>
    %70 = vector.extract_strided_slice %69 {offsets = [0, 0], sizes = [8, 32], strides = [1, 1]} : vector<8x36xf32> to vector<8x32xf32>
    %71 = vector.extract_strided_slice %69 {offsets = [0, 1], sizes = [8, 32], strides = [1, 1]} : vector<8x36xf32> to vector<8x32xf32>
    %72 = arith.maximumf %70, %71 : vector<8x32xf32>
    %73 = vector.extract_strided_slice %69 {offsets = [0, 2], sizes = [8, 32], strides = [1, 1]} : vector<8x36xf32> to vector<8x32xf32>
    %74 = arith.maximumf %72, %73 : vector<8x32xf32>
    %75 = vector.extract_strided_slice %69 {offsets = [0, 3], sizes = [8, 32], strides = [1, 1]} : vector<8x36xf32> to vector<8x32xf32>
    %76 = arith.maximumf %74, %75 : vector<8x32xf32>
    %77 = vector.extract_strided_slice %69 {offsets = [0, 4], sizes = [8, 32], strides = [1, 1]} : vector<8x36xf32> to vector<8x32xf32>
    %78 = arith.maximumf %76, %77 : vector<8x32xf32>
    %79 = vector.shape_cast %3 : vector<16x1xf32> to vector<16x1xf32>
    %80 = vector.broadcast %79 : vector<16x1xf32> to vector<16x27xf32>
    %81 = vector.extract_strided_slice %2 {offsets = [0, 0], sizes = [16, 1], strides = [1, 1]} : vector<16x48xf32> to vector<16x1xf32>
    %82 = vector.extract_strided_slice %78 {offsets = [0, 0], sizes = [1, 27], strides = [1, 1]} : vector<8x32xf32> to vector<1x27xf32>
    %83 = vector.broadcast %81 : vector<16x1xf32> to vector<16x27xf32>
    %84 = vector.broadcast %82 : vector<1x27xf32> to vector<16x27xf32>
    %85 = arith.mulf %83, %84 : vector<16x27xf32>
    %86 = arith.addf %80, %85 : vector<16x27xf32>
    %87 = vector.extract_strided_slice %2 {offsets = [0, 1], sizes = [16, 1], strides = [1, 1]} : vector<16x48xf32> to vector<16x1xf32>
    %88 = vector.extract_strided_slice %78 {offsets = [0, 1], sizes = [1, 27], strides = [1, 1]} : vector<8x32xf32> to vector<1x27xf32>
    %89 = vector.broadcast %87 : vector<16x1xf32> to vector<16x27xf32>
    %90 = vector.broadcast %88 : vector<1x27xf32> to vector<16x27xf32>
    %91 = arith.mulf %89, %90 : vector<16x27xf32>
    %92 = arith.addf %86, %91 : vector<16x27xf32>
    %93 = vector.extract_strided_slice %2 {offsets = [0, 2], sizes = [16, 1], strides = [1, 1]} : vector<16x48xf32> to vector<16x1xf32>
    %94 = vector.extract_strided_slice %78 {offsets = [0, 2], sizes = [1, 27], strides = [1, 1]} : vector<8x32xf32> to vector<1x27xf32>
    %95 = vector.broadcast %93 : vector<16x1xf32> to vector<16x27xf32>
    %96 = vector.broadcast %94 : vector<1x27xf32> to vector<16x27xf32>
    %97 = arith.mulf %95, %96 : vector<16x27xf32>
    %98 = arith.addf %92, %97 : vector<16x27xf32>
    %99 = vector.extract_strided_slice %2 {offsets = [0, 3], sizes = [16, 1], strides = [1, 1]} : vector<16x48xf32> to vector<16x1xf32>
    %100 = vector.extract_strided_slice %78 {offsets = [0, 3], sizes = [1, 27], strides = [1, 1]} : vector<8x32xf32> to vector<1x27xf32>
    %101 = vector.broadcast %99 : vector<16x1xf32> to vector<16x27xf32>
    %102 = vector.broadcast %100 : vector<1x27xf32> to vector<16x27xf32>
    %103 = arith.mulf %101, %102 : vector<16x27xf32>
    %104 = arith.addf %98, %103 : vector<16x27xf32>
    %105 = vector.extract_strided_slice %2 {offsets = [0, 4], sizes = [16, 1], strides = [1, 1]} : vector<16x48xf32> to vector<16x1xf32>
    %106 = vector.extract_strided_slice %78 {offsets = [0, 4], sizes = [1, 27], strides = [1, 1]} : vector<8x32xf32> to vector<1x27xf32>
    %107 = vector.broadcast %105 : vector<16x1xf32> to vector<16x27xf32>
    %108 = vector.broadcast %106 : vector<1x27xf32> to vector<16x27xf32>
    %109 = arith.mulf %107, %108 : vector<16x27xf32>
    %110 = arith.addf %104, %109 : vector<16x27xf32>
    %111 = vector.extract_strided_slice %2 {offsets = [0, 5], sizes = [16, 1], strides = [1, 1]} : vector<16x48xf32> to vector<16x1xf32>
    %112 = vector.extract_strided_slice %78 {offsets = [0, 5], sizes = [1, 27], strides = [1, 1]} : vector<8x32xf32> to vector<1x27xf32>
    %113 = vector.broadcast %111 : vector<16x1xf32> to vector<16x27xf32>
    %114 = vector.broadcast %112 : vector<1x27xf32> to vector<16x27xf32>
    %115 = arith.mulf %113, %114 : vector<16x27xf32>
    %116 = arith.addf %110, %115 : vector<16x27xf32>
    %117 = vector.extract_strided_slice %2 {offsets = [0, 6], sizes = [16, 1], strides = [1, 1]} : vector<16x48xf32> to vector<16x1xf32>
    %118 = vector.extract_strided_slice %78 {offsets = [1, 0], sizes = [1, 27], strides = [1, 1]} : vector<8x32xf32> to vector<1x27xf32>
    %119 = vector.broadcast %117 : vector<16x1xf32> to vector<16x27xf32>
    %120 = vector.broadcast %118 : vector<1x27xf32> to vector<16x27xf32>
    %121 = arith.mulf %119, %120 : vector<16x27xf32>
    %122 = arith.addf %116, %121 : vector<16x27xf32>
    %123 = vector.extract_strided_slice %2 {offsets = [0, 7], sizes = [16, 1], strides = [1, 1]} : vector<16x48xf32> to vector<16x1xf32>
    %124 = vector.extract_strided_slice %78 {offsets = [1, 1], sizes = [1, 27], strides = [1, 1]} : vector<8x32xf32> to vector<1x27xf32>
    %125 = vector.broadcast %123 : vector<16x1xf32> to vector<16x27xf32>
    %126 = vector.broadcast %124 : vector<1x27xf32> to vector<16x27xf32>
    %127 = arith.mulf %125, %126 : vector<16x27xf32>
    %128 = arith.addf %122, %127 : vector<16x27xf32>
    %129 = vector.extract_strided_slice %2 {offsets = [0, 8], sizes = [16, 1], strides = [1, 1]} : vector<16x48xf32> to vector<16x1xf32>
    %130 = vector.extract_strided_slice %78 {offsets = [1, 2], sizes = [1, 27], strides = [1, 1]} : vector<8x32xf32> to vector<1x27xf32>
    %131 = vector.broadcast %129 : vector<16x1xf32> to vector<16x27xf32>
    %132 = vector.broadcast %130 : vector<1x27xf32> to vector<16x27xf32>
    %133 = arith.mulf %131, %132 : vector<16x27xf32>
    %134 = arith.addf %128, %133 : vector<16x27xf32>
    %135 = vector.extract_strided_slice %2 {offsets = [0, 9], sizes = [16, 1], strides = [1, 1]} : vector<16x48xf32> to vector<16x1xf32>
    %136 = vector.extract_strided_slice %78 {offsets = [1, 3], sizes = [1, 27], strides = [1, 1]} : vector<8x32xf32> to vector<1x27xf32>
    %137 = vector.broadcast %135 : vector<16x1xf32> to vector<16x27xf32>
    %138 = vector.broadcast %136 : vector<1x27xf32> to vector<16x27xf32>
    %139 = arith.mulf %137, %138 : vector<16x27xf32>
    %140 = arith.addf %134, %139 : vector<16x27xf32>
    %141 = vector.extract_strided_slice %2 {offsets = [0, 10], sizes = [16, 1], strides = [1, 1]} : vector<16x48xf32> to vector<16x1xf32>
    %142 = vector.extract_strided_slice %78 {offsets = [1, 4], sizes = [1, 27], strides = [1, 1]} : vector<8x32xf32> to vector<1x27xf32>
    %143 = vector.broadcast %141 : vector<16x1xf32> to vector<16x27xf32>
    %144 = vector.broadcast %142 : vector<1x27xf32> to vector<16x27xf32>
    %145 = arith.mulf %143, %144 : vector<16x27xf32>
    %146 = arith.addf %140, %145 : vector<16x27xf32>
    %147 = vector.extract_strided_slice %2 {offsets = [0, 11], sizes = [16, 1], strides = [1, 1]} : vector<16x48xf32> to vector<16x1xf32>
    %148 = vector.extract_strided_slice %78 {offsets = [1, 5], sizes = [1, 27], strides = [1, 1]} : vector<8x32xf32> to vector<1x27xf32>
    %149 = vector.broadcast %147 : vector<16x1xf32> to vector<16x27xf32>
    %150 = vector.broadcast %148 : vector<1x27xf32> to vector<16x27xf32>
    %151 = arith.mulf %149, %150 : vector<16x27xf32>
    %152 = arith.addf %146, %151 : vector<16x27xf32>
    %153 = vector.extract_strided_slice %2 {offsets = [0, 12], sizes = [16, 1], strides = [1, 1]} : vector<16x48xf32> to vector<16x1xf32>
    %154 = vector.extract_strided_slice %78 {offsets = [2, 0], sizes = [1, 27], strides = [1, 1]} : vector<8x32xf32> to vector<1x27xf32>
    %155 = vector.broadcast %153 : vector<16x1xf32> to vector<16x27xf32>
    %156 = vector.broadcast %154 : vector<1x27xf32> to vector<16x27xf32>
    %157 = arith.mulf %155, %156 : vector<16x27xf32>
    %158 = arith.addf %152, %157 : vector<16x27xf32>
    %159 = vector.extract_strided_slice %2 {offsets = [0, 13], sizes = [16, 1], strides = [1, 1]} : vector<16x48xf32> to vector<16x1xf32>
    %160 = vector.extract_strided_slice %78 {offsets = [2, 1], sizes = [1, 27], strides = [1, 1]} : vector<8x32xf32> to vector<1x27xf32>
    %161 = vector.broadcast %159 : vector<16x1xf32> to vector<16x27xf32>
    %162 = vector.broadcast %160 : vector<1x27xf32> to vector<16x27xf32>
    %163 = arith.mulf %161, %162 : vector<16x27xf32>
    %164 = arith.addf %158, %163 : vector<16x27xf32>
    %165 = vector.extract_strided_slice %2 {offsets = [0, 14], sizes = [16, 1], strides = [1, 1]} : vector<16x48xf32> to vector<16x1xf32>
    %166 = vector.extract_strided_slice %78 {offsets = [2, 2], sizes = [1, 27], strides = [1, 1]} : vector<8x32xf32> to vector<1x27xf32>
    %167 = vector.broadcast %165 : vector<16x1xf32> to vector<16x27xf32>
    %168 = vector.broadcast %166 : vector<1x27xf32> to vector<16x27xf32>
    %169 = arith.mulf %167, %168 : vector<16x27xf32>
    %170 = arith.addf %164, %169 : vector<16x27xf32>
    %171 = vector.extract_strided_slice %2 {offsets = [0, 15], sizes = [16, 1], strides = [1, 1]} : vector<16x48xf32> to vector<16x1xf32>
    %172 = vector.extract_strided_slice %78 {offsets = [2, 3], sizes = [1, 27], strides = [1, 1]} : vector<8x32xf32> to vector<1x27xf32>
    %173 = vector.broadcast %171 : vector<16x1xf32> to vector<16x27xf32>
    %174 = vector.broadcast %172 : vector<1x27xf32> to vector<16x27xf32>
    %175 = arith.mulf %173, %174 : vector<16x27xf32>
    %176 = arith.addf %170, %175 : vector<16x27xf32>
    %177 = vector.extract_strided_slice %2 {offsets = [0, 16], sizes = [16, 1], strides = [1, 1]} : vector<16x48xf32> to vector<16x1xf32>
    %178 = vector.extract_strided_slice %78 {offsets = [2, 4], sizes = [1, 27], strides = [1, 1]} : vector<8x32xf32> to vector<1x27xf32>
    %179 = vector.broadcast %177 : vector<16x1xf32> to vector<16x27xf32>
    %180 = vector.broadcast %178 : vector<1x27xf32> to vector<16x27xf32>
    %181 = arith.mulf %179, %180 : vector<16x27xf32>
    %182 = arith.addf %176, %181 : vector<16x27xf32>
    %183 = vector.extract_strided_slice %2 {offsets = [0, 17], sizes = [16, 1], strides = [1, 1]} : vector<16x48xf32> to vector<16x1xf32>
    %184 = vector.extract_strided_slice %78 {offsets = [2, 5], sizes = [1, 27], strides = [1, 1]} : vector<8x32xf32> to vector<1x27xf32>
    %185 = vector.broadcast %183 : vector<16x1xf32> to vector<16x27xf32>
    %186 = vector.broadcast %184 : vector<1x27xf32> to vector<16x27xf32>
    %187 = arith.mulf %185, %186 : vector<16x27xf32>
    %188 = arith.addf %182, %187 : vector<16x27xf32>
    %189 = vector.extract_strided_slice %2 {offsets = [0, 18], sizes = [16, 1], strides = [1, 1]} : vector<16x48xf32> to vector<16x1xf32>
    %190 = vector.extract_strided_slice %78 {offsets = [3, 0], sizes = [1, 27], strides = [1, 1]} : vector<8x32xf32> to vector<1x27xf32>
    %191 = vector.broadcast %189 : vector<16x1xf32> to vector<16x27xf32>
    %192 = vector.broadcast %190 : vector<1x27xf32> to vector<16x27xf32>
    %193 = arith.mulf %191, %192 : vector<16x27xf32>
    %194 = arith.addf %188, %193 : vector<16x27xf32>
    %195 = vector.extract_strided_slice %2 {offsets = [0, 19], sizes = [16, 1], strides = [1, 1]} : vector<16x48xf32> to vector<16x1xf32>
    %196 = vector.extract_strided_slice %78 {offsets = [3, 1], sizes = [1, 27], strides = [1, 1]} : vector<8x32xf32> to vector<1x27xf32>
    %197 = vector.broadcast %195 : vector<16x1xf32> to vector<16x27xf32>
    %198 = vector.broadcast %196 : vector<1x27xf32> to vector<16x27xf32>
    %199 = arith.mulf %197, %198 : vector<16x27xf32>
    %200 = arith.addf %194, %199 : vector<16x27xf32>
    %201 = vector.extract_strided_slice %2 {offsets = [0, 20], sizes = [16, 1], strides = [1, 1]} : vector<16x48xf32> to vector<16x1xf32>
    %202 = vector.extract_strided_slice %78 {offsets = [3, 2], sizes = [1, 27], strides = [1, 1]} : vector<8x32xf32> to vector<1x27xf32>
    %203 = vector.broadcast %201 : vector<16x1xf32> to vector<16x27xf32>
    %204 = vector.broadcast %202 : vector<1x27xf32> to vector<16x27xf32>
    %205 = arith.mulf %203, %204 : vector<16x27xf32>
    %206 = arith.addf %200, %205 : vector<16x27xf32>
    %207 = vector.extract_strided_slice %2 {offsets = [0, 21], sizes = [16, 1], strides = [1, 1]} : vector<16x48xf32> to vector<16x1xf32>
    %208 = vector.extract_strided_slice %78 {offsets = [3, 3], sizes = [1, 27], strides = [1, 1]} : vector<8x32xf32> to vector<1x27xf32>
    %209 = vector.broadcast %207 : vector<16x1xf32> to vector<16x27xf32>
    %210 = vector.broadcast %208 : vector<1x27xf32> to vector<16x27xf32>
    %211 = arith.mulf %209, %210 : vector<16x27xf32>
    %212 = arith.addf %206, %211 : vector<16x27xf32>
    %213 = vector.extract_strided_slice %2 {offsets = [0, 22], sizes = [16, 1], strides = [1, 1]} : vector<16x48xf32> to vector<16x1xf32>
    %214 = vector.extract_strided_slice %78 {offsets = [3, 4], sizes = [1, 27], strides = [1, 1]} : vector<8x32xf32> to vector<1x27xf32>
    %215 = vector.broadcast %213 : vector<16x1xf32> to vector<16x27xf32>
    %216 = vector.broadcast %214 : vector<1x27xf32> to vector<16x27xf32>
    %217 = arith.mulf %215, %216 : vector<16x27xf32>
    %218 = arith.addf %212, %217 : vector<16x27xf32>
    %219 = vector.extract_strided_slice %2 {offsets = [0, 23], sizes = [16, 1], strides = [1, 1]} : vector<16x48xf32> to vector<16x1xf32>
    %220 = vector.extract_strided_slice %78 {offsets = [3, 5], sizes = [1, 27], strides = [1, 1]} : vector<8x32xf32> to vector<1x27xf32>
    %221 = vector.broadcast %219 : vector<16x1xf32> to vector<16x27xf32>
    %222 = vector.broadcast %220 : vector<1x27xf32> to vector<16x27xf32>
    %223 = arith.mulf %221, %222 : vector<16x27xf32>
    %224 = arith.addf %218, %223 : vector<16x27xf32>
    %225 = vector.extract_strided_slice %2 {offsets = [0, 24], sizes = [16, 1], strides = [1, 1]} : vector<16x48xf32> to vector<16x1xf32>
    %226 = vector.extract_strided_slice %78 {offsets = [4, 0], sizes = [1, 27], strides = [1, 1]} : vector<8x32xf32> to vector<1x27xf32>
    %227 = vector.broadcast %225 : vector<16x1xf32> to vector<16x27xf32>
    %228 = vector.broadcast %226 : vector<1x27xf32> to vector<16x27xf32>
    %229 = arith.mulf %227, %228 : vector<16x27xf32>
    %230 = arith.addf %224, %229 : vector<16x27xf32>
    %231 = vector.extract_strided_slice %2 {offsets = [0, 25], sizes = [16, 1], strides = [1, 1]} : vector<16x48xf32> to vector<16x1xf32>
    %232 = vector.extract_strided_slice %78 {offsets = [4, 1], sizes = [1, 27], strides = [1, 1]} : vector<8x32xf32> to vector<1x27xf32>
    %233 = vector.broadcast %231 : vector<16x1xf32> to vector<16x27xf32>
    %234 = vector.broadcast %232 : vector<1x27xf32> to vector<16x27xf32>
    %235 = arith.mulf %233, %234 : vector<16x27xf32>
    %236 = arith.addf %230, %235 : vector<16x27xf32>
    %237 = vector.extract_strided_slice %2 {offsets = [0, 26], sizes = [16, 1], strides = [1, 1]} : vector<16x48xf32> to vector<16x1xf32>
    %238 = vector.extract_strided_slice %78 {offsets = [4, 2], sizes = [1, 27], strides = [1, 1]} : vector<8x32xf32> to vector<1x27xf32>
    %239 = vector.broadcast %237 : vector<16x1xf32> to vector<16x27xf32>
    %240 = vector.broadcast %238 : vector<1x27xf32> to vector<16x27xf32>
    %241 = arith.mulf %239, %240 : vector<16x27xf32>
    %242 = arith.addf %236, %241 : vector<16x27xf32>
    %243 = vector.extract_strided_slice %2 {offsets = [0, 27], sizes = [16, 1], strides = [1, 1]} : vector<16x48xf32> to vector<16x1xf32>
    %244 = vector.extract_strided_slice %78 {offsets = [4, 3], sizes = [1, 27], strides = [1, 1]} : vector<8x32xf32> to vector<1x27xf32>
    %245 = vector.broadcast %243 : vector<16x1xf32> to vector<16x27xf32>
    %246 = vector.broadcast %244 : vector<1x27xf32> to vector<16x27xf32>
    %247 = arith.mulf %245, %246 : vector<16x27xf32>
    %248 = arith.addf %242, %247 : vector<16x27xf32>
    %249 = vector.extract_strided_slice %2 {offsets = [0, 28], sizes = [16, 1], strides = [1, 1]} : vector<16x48xf32> to vector<16x1xf32>
    %250 = vector.extract_strided_slice %78 {offsets = [4, 4], sizes = [1, 27], strides = [1, 1]} : vector<8x32xf32> to vector<1x27xf32>
    %251 = vector.broadcast %249 : vector<16x1xf32> to vector<16x27xf32>
    %252 = vector.broadcast %250 : vector<1x27xf32> to vector<16x27xf32>
    %253 = arith.mulf %251, %252 : vector<16x27xf32>
    %254 = arith.addf %248, %253 : vector<16x27xf32>
    %255 = vector.extract_strided_slice %2 {offsets = [0, 29], sizes = [16, 1], strides = [1, 1]} : vector<16x48xf32> to vector<16x1xf32>
    %256 = vector.extract_strided_slice %78 {offsets = [4, 5], sizes = [1, 27], strides = [1, 1]} : vector<8x32xf32> to vector<1x27xf32>
    %257 = vector.broadcast %255 : vector<16x1xf32> to vector<16x27xf32>
    %258 = vector.broadcast %256 : vector<1x27xf32> to vector<16x27xf32>
    %259 = arith.mulf %257, %258 : vector<16x27xf32>
    %260 = arith.addf %254, %259 : vector<16x27xf32>
    %261 = vector.extract_strided_slice %2 {offsets = [0, 30], sizes = [16, 1], strides = [1, 1]} : vector<16x48xf32> to vector<16x1xf32>
    %262 = vector.extract_strided_slice %78 {offsets = [5, 0], sizes = [1, 27], strides = [1, 1]} : vector<8x32xf32> to vector<1x27xf32>
    %263 = vector.broadcast %261 : vector<16x1xf32> to vector<16x27xf32>
    %264 = vector.broadcast %262 : vector<1x27xf32> to vector<16x27xf32>
    %265 = arith.mulf %263, %264 : vector<16x27xf32>
    %266 = arith.addf %260, %265 : vector<16x27xf32>
    %267 = vector.extract_strided_slice %2 {offsets = [0, 31], sizes = [16, 1], strides = [1, 1]} : vector<16x48xf32> to vector<16x1xf32>
    %268 = vector.extract_strided_slice %78 {offsets = [5, 1], sizes = [1, 27], strides = [1, 1]} : vector<8x32xf32> to vector<1x27xf32>
    %269 = vector.broadcast %267 : vector<16x1xf32> to vector<16x27xf32>
    %270 = vector.broadcast %268 : vector<1x27xf32> to vector<16x27xf32>
    %271 = arith.mulf %269, %270 : vector<16x27xf32>
    %272 = arith.addf %266, %271 : vector<16x27xf32>
    %273 = vector.extract_strided_slice %2 {offsets = [0, 32], sizes = [16, 1], strides = [1, 1]} : vector<16x48xf32> to vector<16x1xf32>
    %274 = vector.extract_strided_slice %78 {offsets = [5, 2], sizes = [1, 27], strides = [1, 1]} : vector<8x32xf32> to vector<1x27xf32>
    %275 = vector.broadcast %273 : vector<16x1xf32> to vector<16x27xf32>
    %276 = vector.broadcast %274 : vector<1x27xf32> to vector<16x27xf32>
    %277 = arith.mulf %275, %276 : vector<16x27xf32>
    %278 = arith.addf %272, %277 : vector<16x27xf32>
    %279 = vector.extract_strided_slice %2 {offsets = [0, 33], sizes = [16, 1], strides = [1, 1]} : vector<16x48xf32> to vector<16x1xf32>
    %280 = vector.extract_strided_slice %78 {offsets = [5, 3], sizes = [1, 27], strides = [1, 1]} : vector<8x32xf32> to vector<1x27xf32>
    %281 = vector.broadcast %279 : vector<16x1xf32> to vector<16x27xf32>
    %282 = vector.broadcast %280 : vector<1x27xf32> to vector<16x27xf32>
    %283 = arith.mulf %281, %282 : vector<16x27xf32>
    %284 = arith.addf %278, %283 : vector<16x27xf32>
    %285 = vector.extract_strided_slice %2 {offsets = [0, 34], sizes = [16, 1], strides = [1, 1]} : vector<16x48xf32> to vector<16x1xf32>
    %286 = vector.extract_strided_slice %78 {offsets = [5, 4], sizes = [1, 27], strides = [1, 1]} : vector<8x32xf32> to vector<1x27xf32>
    %287 = vector.broadcast %285 : vector<16x1xf32> to vector<16x27xf32>
    %288 = vector.broadcast %286 : vector<1x27xf32> to vector<16x27xf32>
    %289 = arith.mulf %287, %288 : vector<16x27xf32>
    %290 = arith.addf %284, %289 : vector<16x27xf32>
    %291 = vector.extract_strided_slice %2 {offsets = [0, 35], sizes = [16, 1], strides = [1, 1]} : vector<16x48xf32> to vector<16x1xf32>
    %292 = vector.extract_strided_slice %78 {offsets = [5, 5], sizes = [1, 27], strides = [1, 1]} : vector<8x32xf32> to vector<1x27xf32>
    %293 = vector.broadcast %291 : vector<16x1xf32> to vector<16x27xf32>
    %294 = vector.broadcast %292 : vector<1x27xf32> to vector<16x27xf32>
    %295 = arith.mulf %293, %294 : vector<16x27xf32>
    %296 = arith.addf %290, %295 : vector<16x27xf32>
    %297 = vector.extract_strided_slice %2 {offsets = [0, 36], sizes = [16, 1], strides = [1, 1]} : vector<16x48xf32> to vector<16x1xf32>
    %298 = vector.extract_strided_slice %78 {offsets = [6, 0], sizes = [1, 27], strides = [1, 1]} : vector<8x32xf32> to vector<1x27xf32>
    %299 = vector.broadcast %297 : vector<16x1xf32> to vector<16x27xf32>
    %300 = vector.broadcast %298 : vector<1x27xf32> to vector<16x27xf32>
    %301 = arith.mulf %299, %300 : vector<16x27xf32>
    %302 = arith.addf %296, %301 : vector<16x27xf32>
    %303 = vector.extract_strided_slice %2 {offsets = [0, 37], sizes = [16, 1], strides = [1, 1]} : vector<16x48xf32> to vector<16x1xf32>
    %304 = vector.extract_strided_slice %78 {offsets = [6, 1], sizes = [1, 27], strides = [1, 1]} : vector<8x32xf32> to vector<1x27xf32>
    %305 = vector.broadcast %303 : vector<16x1xf32> to vector<16x27xf32>
    %306 = vector.broadcast %304 : vector<1x27xf32> to vector<16x27xf32>
    %307 = arith.mulf %305, %306 : vector<16x27xf32>
    %308 = arith.addf %302, %307 : vector<16x27xf32>
    %309 = vector.extract_strided_slice %2 {offsets = [0, 38], sizes = [16, 1], strides = [1, 1]} : vector<16x48xf32> to vector<16x1xf32>
    %310 = vector.extract_strided_slice %78 {offsets = [6, 2], sizes = [1, 27], strides = [1, 1]} : vector<8x32xf32> to vector<1x27xf32>
    %311 = vector.broadcast %309 : vector<16x1xf32> to vector<16x27xf32>
    %312 = vector.broadcast %310 : vector<1x27xf32> to vector<16x27xf32>
    %313 = arith.mulf %311, %312 : vector<16x27xf32>
    %314 = arith.addf %308, %313 : vector<16x27xf32>
    %315 = vector.extract_strided_slice %2 {offsets = [0, 39], sizes = [16, 1], strides = [1, 1]} : vector<16x48xf32> to vector<16x1xf32>
    %316 = vector.extract_strided_slice %78 {offsets = [6, 3], sizes = [1, 27], strides = [1, 1]} : vector<8x32xf32> to vector<1x27xf32>
    %317 = vector.broadcast %315 : vector<16x1xf32> to vector<16x27xf32>
    %318 = vector.broadcast %316 : vector<1x27xf32> to vector<16x27xf32>
    %319 = arith.mulf %317, %318 : vector<16x27xf32>
    %320 = arith.addf %314, %319 : vector<16x27xf32>
    %321 = vector.extract_strided_slice %2 {offsets = [0, 40], sizes = [16, 1], strides = [1, 1]} : vector<16x48xf32> to vector<16x1xf32>
    %322 = vector.extract_strided_slice %78 {offsets = [6, 4], sizes = [1, 27], strides = [1, 1]} : vector<8x32xf32> to vector<1x27xf32>
    %323 = vector.broadcast %321 : vector<16x1xf32> to vector<16x27xf32>
    %324 = vector.broadcast %322 : vector<1x27xf32> to vector<16x27xf32>
    %325 = arith.mulf %323, %324 : vector<16x27xf32>
    %326 = arith.addf %320, %325 : vector<16x27xf32>
    %327 = vector.extract_strided_slice %2 {offsets = [0, 41], sizes = [16, 1], strides = [1, 1]} : vector<16x48xf32> to vector<16x1xf32>
    %328 = vector.extract_strided_slice %78 {offsets = [6, 5], sizes = [1, 27], strides = [1, 1]} : vector<8x32xf32> to vector<1x27xf32>
    %329 = vector.broadcast %327 : vector<16x1xf32> to vector<16x27xf32>
    %330 = vector.broadcast %328 : vector<1x27xf32> to vector<16x27xf32>
    %331 = arith.mulf %329, %330 : vector<16x27xf32>
    %332 = arith.addf %326, %331 : vector<16x27xf32>
    %333 = vector.extract_strided_slice %2 {offsets = [0, 42], sizes = [16, 1], strides = [1, 1]} : vector<16x48xf32> to vector<16x1xf32>
    %334 = vector.extract_strided_slice %78 {offsets = [7, 0], sizes = [1, 27], strides = [1, 1]} : vector<8x32xf32> to vector<1x27xf32>
    %335 = vector.broadcast %333 : vector<16x1xf32> to vector<16x27xf32>
    %336 = vector.broadcast %334 : vector<1x27xf32> to vector<16x27xf32>
    %337 = arith.mulf %335, %336 : vector<16x27xf32>
    %338 = arith.addf %332, %337 : vector<16x27xf32>
    %339 = vector.extract_strided_slice %2 {offsets = [0, 43], sizes = [16, 1], strides = [1, 1]} : vector<16x48xf32> to vector<16x1xf32>
    %340 = vector.extract_strided_slice %78 {offsets = [7, 1], sizes = [1, 27], strides = [1, 1]} : vector<8x32xf32> to vector<1x27xf32>
    %341 = vector.broadcast %339 : vector<16x1xf32> to vector<16x27xf32>
    %342 = vector.broadcast %340 : vector<1x27xf32> to vector<16x27xf32>
    %343 = arith.mulf %341, %342 : vector<16x27xf32>
    %344 = arith.addf %338, %343 : vector<16x27xf32>
    %345 = vector.extract_strided_slice %2 {offsets = [0, 44], sizes = [16, 1], strides = [1, 1]} : vector<16x48xf32> to vector<16x1xf32>
    %346 = vector.extract_strided_slice %78 {offsets = [7, 2], sizes = [1, 27], strides = [1, 1]} : vector<8x32xf32> to vector<1x27xf32>
    %347 = vector.broadcast %345 : vector<16x1xf32> to vector<16x27xf32>
    %348 = vector.broadcast %346 : vector<1x27xf32> to vector<16x27xf32>
    %349 = arith.mulf %347, %348 : vector<16x27xf32>
    %350 = arith.addf %344, %349 : vector<16x27xf32>
    %351 = vector.extract_strided_slice %2 {offsets = [0, 45], sizes = [16, 1], strides = [1, 1]} : vector<16x48xf32> to vector<16x1xf32>
    %352 = vector.extract_strided_slice %78 {offsets = [7, 3], sizes = [1, 27], strides = [1, 1]} : vector<8x32xf32> to vector<1x27xf32>
    %353 = vector.broadcast %351 : vector<16x1xf32> to vector<16x27xf32>
    %354 = vector.broadcast %352 : vector<1x27xf32> to vector<16x27xf32>
    %355 = arith.mulf %353, %354 : vector<16x27xf32>
    %356 = arith.addf %350, %355 : vector<16x27xf32>
    %357 = vector.extract_strided_slice %2 {offsets = [0, 46], sizes = [16, 1], strides = [1, 1]} : vector<16x48xf32> to vector<16x1xf32>
    %358 = vector.extract_strided_slice %78 {offsets = [7, 4], sizes = [1, 27], strides = [1, 1]} : vector<8x32xf32> to vector<1x27xf32>
    %359 = vector.broadcast %357 : vector<16x1xf32> to vector<16x27xf32>
    %360 = vector.broadcast %358 : vector<1x27xf32> to vector<16x27xf32>
    %361 = arith.mulf %359, %360 : vector<16x27xf32>
    %362 = arith.addf %356, %361 : vector<16x27xf32>
    %363 = vector.extract_strided_slice %2 {offsets = [0, 47], sizes = [16, 1], strides = [1, 1]} : vector<16x48xf32> to vector<16x1xf32>
    %364 = vector.extract_strided_slice %78 {offsets = [7, 5], sizes = [1, 27], strides = [1, 1]} : vector<8x32xf32> to vector<1x27xf32>
    %365 = vector.broadcast %363 : vector<16x1xf32> to vector<16x27xf32>
    %366 = vector.broadcast %364 : vector<1x27xf32> to vector<16x27xf32>
    %367 = arith.mulf %365, %366 : vector<16x27xf32>
    %368 = arith.addf %362, %367 : vector<16x27xf32>
    %cst_10 = arith.constant 0.000000e+00 : f32
    %369 = vector.broadcast %cst_10 : f32 to vector<16x27xf32>
    %370 = arith.maximumf %368, %369 : vector<16x27xf32>
    %371 = vector.extract_strided_slice %370 {offsets = [0, 0], sizes = [16, 23], strides = [1, 1]} : vector<16x27xf32> to vector<16x23xf32>
    %372 = vector.extract_strided_slice %370 {offsets = [0, 1], sizes = [16, 23], strides = [1, 1]} : vector<16x27xf32> to vector<16x23xf32>
    %373 = arith.maximumf %371, %372 : vector<16x23xf32>
    %374 = vector.extract_strided_slice %370 {offsets = [0, 2], sizes = [16, 23], strides = [1, 1]} : vector<16x27xf32> to vector<16x23xf32>
    %375 = arith.maximumf %373, %374 : vector<16x23xf32>
    %376 = vector.extract_strided_slice %370 {offsets = [0, 3], sizes = [16, 23], strides = [1, 1]} : vector<16x27xf32> to vector<16x23xf32>
    %377 = arith.maximumf %375, %376 : vector<16x23xf32>
    %378 = vector.extract_strided_slice %370 {offsets = [0, 4], sizes = [16, 23], strides = [1, 1]} : vector<16x27xf32> to vector<16x23xf32>
    %379 = arith.maximumf %377, %378 : vector<16x23xf32>
    %380 = vector.extract_strided_slice %379 {offsets = [0, 0], sizes = [1, 23], strides = [1, 1]} : vector<16x23xf32> to vector<1x23xf32>
    %c0_11 = arith.constant 0 : index
    %c0_12 = arith.constant 0 : index
    %381 = vector.load %arg15[%c0_11, %c0_12] : memref<2x368xf32, #tpu.memory_space<vmem>>, vector<1x23xf32>
    tpu.vector_store %arg15[%c0_11, %c0_12], %380 {strides = array<i32>} : memref<2x368xf32, #tpu.memory_space<vmem>>, vector<1x23xf32>,
    %382 = vector.extract_strided_slice %379 {offsets = [1, 0], sizes = [1, 23], strides = [1, 1]} : vector<16x23xf32> to vector<1x23xf32>
    %c0_13 = arith.constant 0 : index
    %c23 = arith.constant 23 : index
    %383 = vector.load %arg15[%c0_13, %c23] : memref<2x368xf32, #tpu.memory_space<vmem>>, vector<1x23xf32>
    tpu.vector_store %arg15[%c0_13, %c23], %382 {strides = array<i32>} : memref<2x368xf32, #tpu.memory_space<vmem>>, vector<1x23xf32>,
    %384 = vector.extract_strided_slice %379 {offsets = [2, 0], sizes = [1, 23], strides = [1, 1]} : vector<16x23xf32> to vector<1x23xf32>
    %c0_14 = arith.constant 0 : index
    %c46 = arith.constant 46 : index
    %385 = vector.load %arg15[%c0_14, %c46] : memref<2x368xf32, #tpu.memory_space<vmem>>, vector<1x23xf32>
    tpu.vector_store %arg15[%c0_14, %c46], %384 {strides = array<i32>} : memref<2x368xf32, #tpu.memory_space<vmem>>, vector<1x23xf32>,
    %386 = vector.extract_strided_slice %379 {offsets = [3, 0], sizes = [1, 23], strides = [1, 1]} : vector<16x23xf32> to vector<1x23xf32>
    %c0_15 = arith.constant 0 : index
    %c69 = arith.constant 69 : index
    %387 = vector.load %arg15[%c0_15, %c69] : memref<2x368xf32, #tpu.memory_space<vmem>>, vector<1x23xf32>
    tpu.vector_store %arg15[%c0_15, %c69], %386 {strides = array<i32>} : memref<2x368xf32, #tpu.memory_space<vmem>>, vector<1x23xf32>,
    %388 = vector.extract_strided_slice %379 {offsets = [4, 0], sizes = [1, 23], strides = [1, 1]} : vector<16x23xf32> to vector<1x23xf32>
    %c0_16 = arith.constant 0 : index
    %c92 = arith.constant 92 : index
    %389 = vector.load %arg15[%c0_16, %c92] : memref<2x368xf32, #tpu.memory_space<vmem>>, vector<1x23xf32>
    tpu.vector_store %arg15[%c0_16, %c92], %388 {strides = array<i32>} : memref<2x368xf32, #tpu.memory_space<vmem>>, vector<1x23xf32>,
    %390 = vector.extract_strided_slice %379 {offsets = [5, 0], sizes = [1, 23], strides = [1, 1]} : vector<16x23xf32> to vector<1x23xf32>
    %c0_17 = arith.constant 0 : index
    %c115 = arith.constant 115 : index
    %391 = vector.load %arg15[%c0_17, %c115] : memref<2x368xf32, #tpu.memory_space<vmem>>, vector<1x23xf32>
    tpu.vector_store %arg15[%c0_17, %c115], %390 {strides = array<i32>} : memref<2x368xf32, #tpu.memory_space<vmem>>, vector<1x23xf32>,
    %392 = vector.extract_strided_slice %379 {offsets = [6, 0], sizes = [1, 23], strides = [1, 1]} : vector<16x23xf32> to vector<1x23xf32>
    %c0_18 = arith.constant 0 : index
    %c138 = arith.constant 138 : index
    %393 = vector.load %arg15[%c0_18, %c138] : memref<2x368xf32, #tpu.memory_space<vmem>>, vector<1x23xf32>
    tpu.vector_store %arg15[%c0_18, %c138], %392 {strides = array<i32>} : memref<2x368xf32, #tpu.memory_space<vmem>>, vector<1x23xf32>,
    %394 = vector.extract_strided_slice %379 {offsets = [7, 0], sizes = [1, 23], strides = [1, 1]} : vector<16x23xf32> to vector<1x23xf32>
    %c0_19 = arith.constant 0 : index
    %c161 = arith.constant 161 : index
    %395 = vector.load %arg15[%c0_19, %c161] : memref<2x368xf32, #tpu.memory_space<vmem>>, vector<1x23xf32>
    tpu.vector_store %arg15[%c0_19, %c161], %394 {strides = array<i32>} : memref<2x368xf32, #tpu.memory_space<vmem>>, vector<1x23xf32>,
    %396 = vector.extract_strided_slice %379 {offsets = [8, 0], sizes = [1, 23], strides = [1, 1]} : vector<16x23xf32> to vector<1x23xf32>
    %c0_20 = arith.constant 0 : index
    %c184 = arith.constant 184 : index
    %397 = vector.load %arg15[%c0_20, %c184] : memref<2x368xf32, #tpu.memory_space<vmem>>, vector<1x23xf32>
    tpu.vector_store %arg15[%c0_20, %c184], %396 {strides = array<i32>} : memref<2x368xf32, #tpu.memory_space<vmem>>, vector<1x23xf32>,
    %398 = vector.extract_strided_slice %379 {offsets = [9, 0], sizes = [1, 23], strides = [1, 1]} : vector<16x23xf32> to vector<1x23xf32>
    %c0_21 = arith.constant 0 : index
    %c207 = arith.constant 207 : index
    %399 = vector.load %arg15[%c0_21, %c207] : memref<2x368xf32, #tpu.memory_space<vmem>>, vector<1x23xf32>
    tpu.vector_store %arg15[%c0_21, %c207], %398 {strides = array<i32>} : memref<2x368xf32, #tpu.memory_space<vmem>>, vector<1x23xf32>,
    %400 = vector.extract_strided_slice %379 {offsets = [10, 0], sizes = [1, 23], strides = [1, 1]} : vector<16x23xf32> to vector<1x23xf32>
    %c0_22 = arith.constant 0 : index
    %c230 = arith.constant 230 : index
    %401 = vector.load %arg15[%c0_22, %c230] : memref<2x368xf32, #tpu.memory_space<vmem>>, vector<1x23xf32>
    tpu.vector_store %arg15[%c0_22, %c230], %400 {strides = array<i32>} : memref<2x368xf32, #tpu.memory_space<vmem>>, vector<1x23xf32>,
    %402 = vector.extract_strided_slice %379 {offsets = [11, 0], sizes = [1, 23], strides = [1, 1]} : vector<16x23xf32> to vector<1x23xf32>
    %c0_23 = arith.constant 0 : index
    %c253 = arith.constant 253 : index
    %403 = vector.load %arg15[%c0_23, %c253] : memref<2x368xf32, #tpu.memory_space<vmem>>, vector<1x23xf32>
    tpu.vector_store %arg15[%c0_23, %c253], %402 {strides = array<i32>} : memref<2x368xf32, #tpu.memory_space<vmem>>, vector<1x23xf32>,
    %404 = vector.extract_strided_slice %379 {offsets = [12, 0], sizes = [1, 23], strides = [1, 1]} : vector<16x23xf32> to vector<1x23xf32>
    %c0_24 = arith.constant 0 : index
    %c276 = arith.constant 276 : index
    %405 = vector.load %arg15[%c0_24, %c276] : memref<2x368xf32, #tpu.memory_space<vmem>>, vector<1x23xf32>
    tpu.vector_store %arg15[%c0_24, %c276], %404 {strides = array<i32>} : memref<2x368xf32, #tpu.memory_space<vmem>>, vector<1x23xf32>,
    %406 = vector.extract_strided_slice %379 {offsets = [13, 0], sizes = [1, 23], strides = [1, 1]} : vector<16x23xf32> to vector<1x23xf32>
    %c0_25 = arith.constant 0 : index
    %c299 = arith.constant 299 : index
    %407 = vector.load %arg15[%c0_25, %c299] : memref<2x368xf32, #tpu.memory_space<vmem>>, vector<1x23xf32>
    tpu.vector_store %arg15[%c0_25, %c299], %406 {strides = array<i32>} : memref<2x368xf32, #tpu.memory_space<vmem>>, vector<1x23xf32>,
    %408 = vector.extract_strided_slice %379 {offsets = [14, 0], sizes = [1, 23], strides = [1, 1]} : vector<16x23xf32> to vector<1x23xf32>
    %c0_26 = arith.constant 0 : index
    %c322 = arith.constant 322 : index
    %409 = vector.load %arg15[%c0_26, %c322] : memref<2x368xf32, #tpu.memory_space<vmem>>, vector<1x23xf32>
    tpu.vector_store %arg15[%c0_26, %c322], %408 {strides = array<i32>} : memref<2x368xf32, #tpu.memory_space<vmem>>, vector<1x23xf32>,
    %410 = vector.extract_strided_slice %379 {offsets = [15, 0], sizes = [1, 23], strides = [1, 1]} : vector<16x23xf32> to vector<1x23xf32>
    %c0_27 = arith.constant 0 : index
    %c345 = arith.constant 345 : index
    %411 = vector.load %arg15[%c0_27, %c345] : memref<2x368xf32, #tpu.memory_space<vmem>>, vector<1x23xf32>
    tpu.vector_store %arg15[%c0_27, %c345], %410 {strides = array<i32>} : memref<2x368xf32, #tpu.memory_space<vmem>>, vector<1x23xf32>,
    %c1 = arith.constant 1 : index
    %c0_28 = arith.constant 0 : index
    %c0_29 = arith.constant 0 : index
    %412 = vector.load %arg1[%c1, %c0_28, %c0_29] : memref<2x2x40xf32, #tpu.memory_space<vmem>>, vector<1x2x40xf32>
    %413 = vector.shape_cast %412 : vector<1x2x40xf32> to vector<2x40xf32>
    %414 = vector.shape_cast %1 : vector<8x1xf32> to vector<8x1xf32>
    %415 = vector.broadcast %414 : vector<8x1xf32> to vector<8x36xf32>
    %416 = vector.extract_strided_slice %0 {offsets = [0, 0], sizes = [8, 1], strides = [1, 1]} : vector<8x10xf32> to vector<8x1xf32>
    %417 = vector.extract_strided_slice %413 {offsets = [0, 0], sizes = [1, 36], strides = [1, 1]} : vector<2x40xf32> to vector<1x36xf32>
    %418 = vector.broadcast %416 : vector<8x1xf32> to vector<8x36xf32>
    %419 = vector.broadcast %417 : vector<1x36xf32> to vector<8x36xf32>
    %420 = arith.mulf %418, %419 : vector<8x36xf32>
    %421 = arith.addf %415, %420 : vector<8x36xf32>
    %422 = vector.extract_strided_slice %0 {offsets = [0, 1], sizes = [8, 1], strides = [1, 1]} : vector<8x10xf32> to vector<8x1xf32>
    %423 = vector.extract_strided_slice %413 {offsets = [0, 1], sizes = [1, 36], strides = [1, 1]} : vector<2x40xf32> to vector<1x36xf32>
    %424 = vector.broadcast %422 : vector<8x1xf32> to vector<8x36xf32>
    %425 = vector.broadcast %423 : vector<1x36xf32> to vector<8x36xf32>
    %426 = arith.mulf %424, %425 : vector<8x36xf32>
    %427 = arith.addf %421, %426 : vector<8x36xf32>
    %428 = vector.extract_strided_slice %0 {offsets = [0, 2], sizes = [8, 1], strides = [1, 1]} : vector<8x10xf32> to vector<8x1xf32>
    %429 = vector.extract_strided_slice %413 {offsets = [0, 2], sizes = [1, 36], strides = [1, 1]} : vector<2x40xf32> to vector<1x36xf32>
    %430 = vector.broadcast %428 : vector<8x1xf32> to vector<8x36xf32>
    %431 = vector.broadcast %429 : vector<1x36xf32> to vector<8x36xf32>
    %432 = arith.mulf %430, %431 : vector<8x36xf32>
    %433 = arith.addf %427, %432 : vector<8x36xf32>
    %434 = vector.extract_strided_slice %0 {offsets = [0, 3], sizes = [8, 1], strides = [1, 1]} : vector<8x10xf32> to vector<8x1xf32>
    %435 = vector.extract_strided_slice %413 {offsets = [0, 3], sizes = [1, 36], strides = [1, 1]} : vector<2x40xf32> to vector<1x36xf32>
    %436 = vector.broadcast %434 : vector<8x1xf32> to vector<8x36xf32>
    %437 = vector.broadcast %435 : vector<1x36xf32> to vector<8x36xf32>
    %438 = arith.mulf %436, %437 : vector<8x36xf32>
    %439 = arith.addf %433, %438 : vector<8x36xf32>
    %440 = vector.extract_strided_slice %0 {offsets = [0, 4], sizes = [8, 1], strides = [1, 1]} : vector<8x10xf32> to vector<8x1xf32>
    %441 = vector.extract_strided_slice %413 {offsets = [0, 4], sizes = [1, 36], strides = [1, 1]} : vector<2x40xf32> to vector<1x36xf32>
    %442 = vector.broadcast %440 : vector<8x1xf32> to vector<8x36xf32>
    %443 = vector.broadcast %441 : vector<1x36xf32> to vector<8x36xf32>
    %444 = arith.mulf %442, %443 : vector<8x36xf32>
    %445 = arith.addf %439, %444 : vector<8x36xf32>
    %446 = vector.extract_strided_slice %0 {offsets = [0, 5], sizes = [8, 1], strides = [1, 1]} : vector<8x10xf32> to vector<8x1xf32>
    %447 = vector.extract_strided_slice %413 {offsets = [1, 0], sizes = [1, 36], strides = [1, 1]} : vector<2x40xf32> to vector<1x36xf32>
    %448 = vector.broadcast %446 : vector<8x1xf32> to vector<8x36xf32>
    %449 = vector.broadcast %447 : vector<1x36xf32> to vector<8x36xf32>
    %450 = arith.mulf %448, %449 : vector<8x36xf32>
    %451 = arith.addf %445, %450 : vector<8x36xf32>
    %452 = vector.extract_strided_slice %0 {offsets = [0, 6], sizes = [8, 1], strides = [1, 1]} : vector<8x10xf32> to vector<8x1xf32>
    %453 = vector.extract_strided_slice %413 {offsets = [1, 1], sizes = [1, 36], strides = [1, 1]} : vector<2x40xf32> to vector<1x36xf32>
    %454 = vector.broadcast %452 : vector<8x1xf32> to vector<8x36xf32>
    %455 = vector.broadcast %453 : vector<1x36xf32> to vector<8x36xf32>
    %456 = arith.mulf %454, %455 : vector<8x36xf32>
    %457 = arith.addf %451, %456 : vector<8x36xf32>
    %458 = vector.extract_strided_slice %0 {offsets = [0, 7], sizes = [8, 1], strides = [1, 1]} : vector<8x10xf32> to vector<8x1xf32>
    %459 = vector.extract_strided_slice %413 {offsets = [1, 2], sizes = [1, 36], strides = [1, 1]} : vector<2x40xf32> to vector<1x36xf32>
    %460 = vector.broadcast %458 : vector<8x1xf32> to vector<8x36xf32>
    %461 = vector.broadcast %459 : vector<1x36xf32> to vector<8x36xf32>
    %462 = arith.mulf %460, %461 : vector<8x36xf32>
    %463 = arith.addf %457, %462 : vector<8x36xf32>
    %464 = vector.extract_strided_slice %0 {offsets = [0, 8], sizes = [8, 1], strides = [1, 1]} : vector<8x10xf32> to vector<8x1xf32>
    %465 = vector.extract_strided_slice %413 {offsets = [1, 3], sizes = [1, 36], strides = [1, 1]} : vector<2x40xf32> to vector<1x36xf32>
    %466 = vector.broadcast %464 : vector<8x1xf32> to vector<8x36xf32>
    %467 = vector.broadcast %465 : vector<1x36xf32> to vector<8x36xf32>
    %468 = arith.mulf %466, %467 : vector<8x36xf32>
    %469 = arith.addf %463, %468 : vector<8x36xf32>
    %470 = vector.extract_strided_slice %0 {offsets = [0, 9], sizes = [8, 1], strides = [1, 1]} : vector<8x10xf32> to vector<8x1xf32>
    %471 = vector.extract_strided_slice %413 {offsets = [1, 4], sizes = [1, 36], strides = [1, 1]} : vector<2x40xf32> to vector<1x36xf32>
    %472 = vector.broadcast %470 : vector<8x1xf32> to vector<8x36xf32>
    %473 = vector.broadcast %471 : vector<1x36xf32> to vector<8x36xf32>
    %474 = arith.mulf %472, %473 : vector<8x36xf32>
    %475 = arith.addf %469, %474 : vector<8x36xf32>
    %cst_30 = arith.constant 0.000000e+00 : f32
    %476 = vector.broadcast %cst_30 : f32 to vector<8x36xf32>
    %477 = arith.maximumf %475, %476 : vector<8x36xf32>
    %478 = vector.extract_strided_slice %477 {offsets = [0, 0], sizes = [8, 32], strides = [1, 1]} : vector<8x36xf32> to vector<8x32xf32>
    %479 = vector.extract_strided_slice %477 {offsets = [0, 1], sizes = [8, 32], strides = [1, 1]} : vector<8x36xf32> to vector<8x32xf32>
    %480 = arith.maximumf %478, %479 : vector<8x32xf32>
    %481 = vector.extract_strided_slice %477 {offsets = [0, 2], sizes = [8, 32], strides = [1, 1]} : vector<8x36xf32> to vector<8x32xf32>
    %482 = arith.maximumf %480, %481 : vector<8x32xf32>
    %483 = vector.extract_strided_slice %477 {offsets = [0, 3], sizes = [8, 32], strides = [1, 1]} : vector<8x36xf32> to vector<8x32xf32>
    %484 = arith.maximumf %482, %483 : vector<8x32xf32>
    %485 = vector.extract_strided_slice %477 {offsets = [0, 4], sizes = [8, 32], strides = [1, 1]} : vector<8x36xf32> to vector<8x32xf32>
    %486 = arith.maximumf %484, %485 : vector<8x32xf32>
    %487 = vector.shape_cast %3 : vector<16x1xf32> to vector<16x1xf32>
    %488 = vector.broadcast %487 : vector<16x1xf32> to vector<16x27xf32>
    %489 = vector.extract_strided_slice %2 {offsets = [0, 0], sizes = [16, 1], strides = [1, 1]} : vector<16x48xf32> to vector<16x1xf32>
    %490 = vector.extract_strided_slice %486 {offsets = [0, 0], sizes = [1, 27], strides = [1, 1]} : vector<8x32xf32> to vector<1x27xf32>
    %491 = vector.broadcast %489 : vector<16x1xf32> to vector<16x27xf32>
    %492 = vector.broadcast %490 : vector<1x27xf32> to vector<16x27xf32>
    %493 = arith.mulf %491, %492 : vector<16x27xf32>
    %494 = arith.addf %488, %493 : vector<16x27xf32>
    %495 = vector.extract_strided_slice %2 {offsets = [0, 1], sizes = [16, 1], strides = [1, 1]} : vector<16x48xf32> to vector<16x1xf32>
    %496 = vector.extract_strided_slice %486 {offsets = [0, 1], sizes = [1, 27], strides = [1, 1]} : vector<8x32xf32> to vector<1x27xf32>
    %497 = vector.broadcast %495 : vector<16x1xf32> to vector<16x27xf32>
    %498 = vector.broadcast %496 : vector<1x27xf32> to vector<16x27xf32>
    %499 = arith.mulf %497, %498 : vector<16x27xf32>
    %500 = arith.addf %494, %499 : vector<16x27xf32>
    %501 = vector.extract_strided_slice %2 {offsets = [0, 2], sizes = [16, 1], strides = [1, 1]} : vector<16x48xf32> to vector<16x1xf32>
    %502 = vector.extract_strided_slice %486 {offsets = [0, 2], sizes = [1, 27], strides = [1, 1]} : vector<8x32xf32> to vector<1x27xf32>
    %503 = vector.broadcast %501 : vector<16x1xf32> to vector<16x27xf32>
    %504 = vector.broadcast %502 : vector<1x27xf32> to vector<16x27xf32>
    %505 = arith.mulf %503, %504 : vector<16x27xf32>
    %506 = arith.addf %500, %505 : vector<16x27xf32>
    %507 = vector.extract_strided_slice %2 {offsets = [0, 3], sizes = [16, 1], strides = [1, 1]} : vector<16x48xf32> to vector<16x1xf32>
    %508 = vector.extract_strided_slice %486 {offsets = [0, 3], sizes = [1, 27], strides = [1, 1]} : vector<8x32xf32> to vector<1x27xf32>
    %509 = vector.broadcast %507 : vector<16x1xf32> to vector<16x27xf32>
    %510 = vector.broadcast %508 : vector<1x27xf32> to vector<16x27xf32>
    %511 = arith.mulf %509, %510 : vector<16x27xf32>
    %512 = arith.addf %506, %511 : vector<16x27xf32>
    %513 = vector.extract_strided_slice %2 {offsets = [0, 4], sizes = [16, 1], strides = [1, 1]} : vector<16x48xf32> to vector<16x1xf32>
    %514 = vector.extract_strided_slice %486 {offsets = [0, 4], sizes = [1, 27], strides = [1, 1]} : vector<8x32xf32> to vector<1x27xf32>
    %515 = vector.broadcast %513 : vector<16x1xf32> to vector<16x27xf32>
    %516 = vector.broadcast %514 : vector<1x27xf32> to vector<16x27xf32>
    %517 = arith.mulf %515, %516 : vector<16x27xf32>
    %518 = arith.addf %512, %517 : vector<16x27xf32>
    %519 = vector.extract_strided_slice %2 {offsets = [0, 5], sizes = [16, 1], strides = [1, 1]} : vector<16x48xf32> to vector<16x1xf32>
    %520 = vector.extract_strided_slice %486 {offsets = [0, 5], sizes = [1, 27], strides = [1, 1]} : vector<8x32xf32> to vector<1x27xf32>
    %521 = vector.broadcast %519 : vector<16x1xf32> to vector<16x27xf32>
    %522 = vector.broadcast %520 : vector<1x27xf32> to vector<16x27xf32>
    %523 = arith.mulf %521, %522 : vector<16x27xf32>
    %524 = arith.addf %518, %523 : vector<16x27xf32>
    %525 = vector.extract_strided_slice %2 {offsets = [0, 6], sizes = [16, 1], strides = [1, 1]} : vector<16x48xf32> to vector<16x1xf32>
    %526 = vector.extract_strided_slice %486 {offsets = [1, 0], sizes = [1, 27], strides = [1, 1]} : vector<8x32xf32> to vector<1x27xf32>
    %527 = vector.broadcast %525 : vector<16x1xf32> to vector<16x27xf32>
    %528 = vector.broadcast %526 : vector<1x27xf32> to vector<16x27xf32>
    %529 = arith.mulf %527, %528 : vector<16x27xf32>
    %530 = arith.addf %524, %529 : vector<16x27xf32>
    %531 = vector.extract_strided_slice %2 {offsets = [0, 7], sizes = [16, 1], strides = [1, 1]} : vector<16x48xf32> to vector<16x1xf32>
    %532 = vector.extract_strided_slice %486 {offsets = [1, 1], sizes = [1, 27], strides = [1, 1]} : vector<8x32xf32> to vector<1x27xf32>
    %533 = vector.broadcast %531 : vector<16x1xf32> to vector<16x27xf32>
    %534 = vector.broadcast %532 : vector<1x27xf32> to vector<16x27xf32>
    %535 = arith.mulf %533, %534 : vector<16x27xf32>
    %536 = arith.addf %530, %535 : vector<16x27xf32>
    %537 = vector.extract_strided_slice %2 {offsets = [0, 8], sizes = [16, 1], strides = [1, 1]} : vector<16x48xf32> to vector<16x1xf32>
    %538 = vector.extract_strided_slice %486 {offsets = [1, 2], sizes = [1, 27], strides = [1, 1]} : vector<8x32xf32> to vector<1x27xf32>
    %539 = vector.broadcast %537 : vector<16x1xf32> to vector<16x27xf32>
    %540 = vector.broadcast %538 : vector<1x27xf32> to vector<16x27xf32>
    %541 = arith.mulf %539, %540 : vector<16x27xf32>
    %542 = arith.addf %536, %541 : vector<16x27xf32>
    %543 = vector.extract_strided_slice %2 {offsets = [0, 9], sizes = [16, 1], strides = [1, 1]} : vector<16x48xf32> to vector<16x1xf32>
    %544 = vector.extract_strided_slice %486 {offsets = [1, 3], sizes = [1, 27], strides = [1, 1]} : vector<8x32xf32> to vector<1x27xf32>
    %545 = vector.broadcast %543 : vector<16x1xf32> to vector<16x27xf32>
    %546 = vector.broadcast %544 : vector<1x27xf32> to vector<16x27xf32>
    %547 = arith.mulf %545, %546 : vector<16x27xf32>
    %548 = arith.addf %542, %547 : vector<16x27xf32>
    %549 = vector.extract_strided_slice %2 {offsets = [0, 10], sizes = [16, 1], strides = [1, 1]} : vector<16x48xf32> to vector<16x1xf32>
    %550 = vector.extract_strided_slice %486 {offsets = [1, 4], sizes = [1, 27], strides = [1, 1]} : vector<8x32xf32> to vector<1x27xf32>
    %551 = vector.broadcast %549 : vector<16x1xf32> to vector<16x27xf32>
    %552 = vector.broadcast %550 : vector<1x27xf32> to vector<16x27xf32>
    %553 = arith.mulf %551, %552 : vector<16x27xf32>
    %554 = arith.addf %548, %553 : vector<16x27xf32>
    %555 = vector.extract_strided_slice %2 {offsets = [0, 11], sizes = [16, 1], strides = [1, 1]} : vector<16x48xf32> to vector<16x1xf32>
    %556 = vector.extract_strided_slice %486 {offsets = [1, 5], sizes = [1, 27], strides = [1, 1]} : vector<8x32xf32> to vector<1x27xf32>
    %557 = vector.broadcast %555 : vector<16x1xf32> to vector<16x27xf32>
    %558 = vector.broadcast %556 : vector<1x27xf32> to vector<16x27xf32>
    %559 = arith.mulf %557, %558 : vector<16x27xf32>
    %560 = arith.addf %554, %559 : vector<16x27xf32>
    %561 = vector.extract_strided_slice %2 {offsets = [0, 12], sizes = [16, 1], strides = [1, 1]} : vector<16x48xf32> to vector<16x1xf32>
    %562 = vector.extract_strided_slice %486 {offsets = [2, 0], sizes = [1, 27], strides = [1, 1]} : vector<8x32xf32> to vector<1x27xf32>
    %563 = vector.broadcast %561 : vector<16x1xf32> to vector<16x27xf32>
    %564 = vector.broadcast %562 : vector<1x27xf32> to vector<16x27xf32>
    %565 = arith.mulf %563, %564 : vector<16x27xf32>
    %566 = arith.addf %560, %565 : vector<16x27xf32>
    %567 = vector.extract_strided_slice %2 {offsets = [0, 13], sizes = [16, 1], strides = [1, 1]} : vector<16x48xf32> to vector<16x1xf32>
    %568 = vector.extract_strided_slice %486 {offsets = [2, 1], sizes = [1, 27], strides = [1, 1]} : vector<8x32xf32> to vector<1x27xf32>
    %569 = vector.broadcast %567 : vector<16x1xf32> to vector<16x27xf32>
    %570 = vector.broadcast %568 : vector<1x27xf32> to vector<16x27xf32>
    %571 = arith.mulf %569, %570 : vector<16x27xf32>
    %572 = arith.addf %566, %571 : vector<16x27xf32>
    %573 = vector.extract_strided_slice %2 {offsets = [0, 14], sizes = [16, 1], strides = [1, 1]} : vector<16x48xf32> to vector<16x1xf32>
    %574 = vector.extract_strided_slice %486 {offsets = [2, 2], sizes = [1, 27], strides = [1, 1]} : vector<8x32xf32> to vector<1x27xf32>
    %575 = vector.broadcast %573 : vector<16x1xf32> to vector<16x27xf32>
    %576 = vector.broadcast %574 : vector<1x27xf32> to vector<16x27xf32>
    %577 = arith.mulf %575, %576 : vector<16x27xf32>
    %578 = arith.addf %572, %577 : vector<16x27xf32>
    %579 = vector.extract_strided_slice %2 {offsets = [0, 15], sizes = [16, 1], strides = [1, 1]} : vector<16x48xf32> to vector<16x1xf32>
    %580 = vector.extract_strided_slice %486 {offsets = [2, 3], sizes = [1, 27], strides = [1, 1]} : vector<8x32xf32> to vector<1x27xf32>
    %581 = vector.broadcast %579 : vector<16x1xf32> to vector<16x27xf32>
    %582 = vector.broadcast %580 : vector<1x27xf32> to vector<16x27xf32>
    %583 = arith.mulf %581, %582 : vector<16x27xf32>
    %584 = arith.addf %578, %583 : vector<16x27xf32>
    %585 = vector.extract_strided_slice %2 {offsets = [0, 16], sizes = [16, 1], strides = [1, 1]} : vector<16x48xf32> to vector<16x1xf32>
    %586 = vector.extract_strided_slice %486 {offsets = [2, 4], sizes = [1, 27], strides = [1, 1]} : vector<8x32xf32> to vector<1x27xf32>
    %587 = vector.broadcast %585 : vector<16x1xf32> to vector<16x27xf32>
    %588 = vector.broadcast %586 : vector<1x27xf32> to vector<16x27xf32>
    %589 = arith.mulf %587, %588 : vector<16x27xf32>
    %590 = arith.addf %584, %589 : vector<16x27xf32>
    %591 = vector.extract_strided_slice %2 {offsets = [0, 17], sizes = [16, 1], strides = [1, 1]} : vector<16x48xf32> to vector<16x1xf32>
    %592 = vector.extract_strided_slice %486 {offsets = [2, 5], sizes = [1, 27], strides = [1, 1]} : vector<8x32xf32> to vector<1x27xf32>
    %593 = vector.broadcast %591 : vector<16x1xf32> to vector<16x27xf32>
    %594 = vector.broadcast %592 : vector<1x27xf32> to vector<16x27xf32>
    %595 = arith.mulf %593, %594 : vector<16x27xf32>
    %596 = arith.addf %590, %595 : vector<16x27xf32>
    %597 = vector.extract_strided_slice %2 {offsets = [0, 18], sizes = [16, 1], strides = [1, 1]} : vector<16x48xf32> to vector<16x1xf32>
    %598 = vector.extract_strided_slice %486 {offsets = [3, 0], sizes = [1, 27], strides = [1, 1]} : vector<8x32xf32> to vector<1x27xf32>
    %599 = vector.broadcast %597 : vector<16x1xf32> to vector<16x27xf32>
    %600 = vector.broadcast %598 : vector<1x27xf32> to vector<16x27xf32>
    %601 = arith.mulf %599, %600 : vector<16x27xf32>
    %602 = arith.addf %596, %601 : vector<16x27xf32>
    %603 = vector.extract_strided_slice %2 {offsets = [0, 19], sizes = [16, 1], strides = [1, 1]} : vector<16x48xf32> to vector<16x1xf32>
    %604 = vector.extract_strided_slice %486 {offsets = [3, 1], sizes = [1, 27], strides = [1, 1]} : vector<8x32xf32> to vector<1x27xf32>
    %605 = vector.broadcast %603 : vector<16x1xf32> to vector<16x27xf32>
    %606 = vector.broadcast %604 : vector<1x27xf32> to vector<16x27xf32>
    %607 = arith.mulf %605, %606 : vector<16x27xf32>
    %608 = arith.addf %602, %607 : vector<16x27xf32>
    %609 = vector.extract_strided_slice %2 {offsets = [0, 20], sizes = [16, 1], strides = [1, 1]} : vector<16x48xf32> to vector<16x1xf32>
    %610 = vector.extract_strided_slice %486 {offsets = [3, 2], sizes = [1, 27], strides = [1, 1]} : vector<8x32xf32> to vector<1x27xf32>
    %611 = vector.broadcast %609 : vector<16x1xf32> to vector<16x27xf32>
    %612 = vector.broadcast %610 : vector<1x27xf32> to vector<16x27xf32>
    %613 = arith.mulf %611, %612 : vector<16x27xf32>
    %614 = arith.addf %608, %613 : vector<16x27xf32>
    %615 = vector.extract_strided_slice %2 {offsets = [0, 21], sizes = [16, 1], strides = [1, 1]} : vector<16x48xf32> to vector<16x1xf32>
    %616 = vector.extract_strided_slice %486 {offsets = [3, 3], sizes = [1, 27], strides = [1, 1]} : vector<8x32xf32> to vector<1x27xf32>
    %617 = vector.broadcast %615 : vector<16x1xf32> to vector<16x27xf32>
    %618 = vector.broadcast %616 : vector<1x27xf32> to vector<16x27xf32>
    %619 = arith.mulf %617, %618 : vector<16x27xf32>
    %620 = arith.addf %614, %619 : vector<16x27xf32>
    %621 = vector.extract_strided_slice %2 {offsets = [0, 22], sizes = [16, 1], strides = [1, 1]} : vector<16x48xf32> to vector<16x1xf32>
    %622 = vector.extract_strided_slice %486 {offsets = [3, 4], sizes = [1, 27], strides = [1, 1]} : vector<8x32xf32> to vector<1x27xf32>
    %623 = vector.broadcast %621 : vector<16x1xf32> to vector<16x27xf32>
    %624 = vector.broadcast %622 : vector<1x27xf32> to vector<16x27xf32>
    %625 = arith.mulf %623, %624 : vector<16x27xf32>
    %626 = arith.addf %620, %625 : vector<16x27xf32>
    %627 = vector.extract_strided_slice %2 {offsets = [0, 23], sizes = [16, 1], strides = [1, 1]} : vector<16x48xf32> to vector<16x1xf32>
    %628 = vector.extract_strided_slice %486 {offsets = [3, 5], sizes = [1, 27], strides = [1, 1]} : vector<8x32xf32> to vector<1x27xf32>
    %629 = vector.broadcast %627 : vector<16x1xf32> to vector<16x27xf32>
    %630 = vector.broadcast %628 : vector<1x27xf32> to vector<16x27xf32>
    %631 = arith.mulf %629, %630 : vector<16x27xf32>
    %632 = arith.addf %626, %631 : vector<16x27xf32>
    %633 = vector.extract_strided_slice %2 {offsets = [0, 24], sizes = [16, 1], strides = [1, 1]} : vector<16x48xf32> to vector<16x1xf32>
    %634 = vector.extract_strided_slice %486 {offsets = [4, 0], sizes = [1, 27], strides = [1, 1]} : vector<8x32xf32> to vector<1x27xf32>
    %635 = vector.broadcast %633 : vector<16x1xf32> to vector<16x27xf32>
    %636 = vector.broadcast %634 : vector<1x27xf32> to vector<16x27xf32>
    %637 = arith.mulf %635, %636 : vector<16x27xf32>
    %638 = arith.addf %632, %637 : vector<16x27xf32>
    %639 = vector.extract_strided_slice %2 {offsets = [0, 25], sizes = [16, 1], strides = [1, 1]} : vector<16x48xf32> to vector<16x1xf32>
    %640 = vector.extract_strided_slice %486 {offsets = [4, 1], sizes = [1, 27], strides = [1, 1]} : vector<8x32xf32> to vector<1x27xf32>
    %641 = vector.broadcast %639 : vector<16x1xf32> to vector<16x27xf32>
    %642 = vector.broadcast %640 : vector<1x27xf32> to vector<16x27xf32>
    %643 = arith.mulf %641, %642 : vector<16x27xf32>
    %644 = arith.addf %638, %643 : vector<16x27xf32>
    %645 = vector.extract_strided_slice %2 {offsets = [0, 26], sizes = [16, 1], strides = [1, 1]} : vector<16x48xf32> to vector<16x1xf32>
    %646 = vector.extract_strided_slice %486 {offsets = [4, 2], sizes = [1, 27], strides = [1, 1]} : vector<8x32xf32> to vector<1x27xf32>
    %647 = vector.broadcast %645 : vector<16x1xf32> to vector<16x27xf32>
    %648 = vector.broadcast %646 : vector<1x27xf32> to vector<16x27xf32>
    %649 = arith.mulf %647, %648 : vector<16x27xf32>
    %650 = arith.addf %644, %649 : vector<16x27xf32>
    %651 = vector.extract_strided_slice %2 {offsets = [0, 27], sizes = [16, 1], strides = [1, 1]} : vector<16x48xf32> to vector<16x1xf32>
    %652 = vector.extract_strided_slice %486 {offsets = [4, 3], sizes = [1, 27], strides = [1, 1]} : vector<8x32xf32> to vector<1x27xf32>
    %653 = vector.broadcast %651 : vector<16x1xf32> to vector<16x27xf32>
    %654 = vector.broadcast %652 : vector<1x27xf32> to vector<16x27xf32>
    %655 = arith.mulf %653, %654 : vector<16x27xf32>
    %656 = arith.addf %650, %655 : vector<16x27xf32>
    %657 = vector.extract_strided_slice %2 {offsets = [0, 28], sizes = [16, 1], strides = [1, 1]} : vector<16x48xf32> to vector<16x1xf32>
    %658 = vector.extract_strided_slice %486 {offsets = [4, 4], sizes = [1, 27], strides = [1, 1]} : vector<8x32xf32> to vector<1x27xf32>
    %659 = vector.broadcast %657 : vector<16x1xf32> to vector<16x27xf32>
    %660 = vector.broadcast %658 : vector<1x27xf32> to vector<16x27xf32>
    %661 = arith.mulf %659, %660 : vector<16x27xf32>
    %662 = arith.addf %656, %661 : vector<16x27xf32>
    %663 = vector.extract_strided_slice %2 {offsets = [0, 29], sizes = [16, 1], strides = [1, 1]} : vector<16x48xf32> to vector<16x1xf32>
    %664 = vector.extract_strided_slice %486 {offsets = [4, 5], sizes = [1, 27], strides = [1, 1]} : vector<8x32xf32> to vector<1x27xf32>
    %665 = vector.broadcast %663 : vector<16x1xf32> to vector<16x27xf32>
    %666 = vector.broadcast %664 : vector<1x27xf32> to vector<16x27xf32>
    %667 = arith.mulf %665, %666 : vector<16x27xf32>
    %668 = arith.addf %662, %667 : vector<16x27xf32>
    %669 = vector.extract_strided_slice %2 {offsets = [0, 30], sizes = [16, 1], strides = [1, 1]} : vector<16x48xf32> to vector<16x1xf32>
    %670 = vector.extract_strided_slice %486 {offsets = [5, 0], sizes = [1, 27], strides = [1, 1]} : vector<8x32xf32> to vector<1x27xf32>
    %671 = vector.broadcast %669 : vector<16x1xf32> to vector<16x27xf32>
    %672 = vector.broadcast %670 : vector<1x27xf32> to vector<16x27xf32>
    %673 = arith.mulf %671, %672 : vector<16x27xf32>
    %674 = arith.addf %668, %673 : vector<16x27xf32>
    %675 = vector.extract_strided_slice %2 {offsets = [0, 31], sizes = [16, 1], strides = [1, 1]} : vector<16x48xf32> to vector<16x1xf32>
    %676 = vector.extract_strided_slice %486 {offsets = [5, 1], sizes = [1, 27], strides = [1, 1]} : vector<8x32xf32> to vector<1x27xf32>
    %677 = vector.broadcast %675 : vector<16x1xf32> to vector<16x27xf32>
    %678 = vector.broadcast %676 : vector<1x27xf32> to vector<16x27xf32>
    %679 = arith.mulf %677, %678 : vector<16x27xf32>
    %680 = arith.addf %674, %679 : vector<16x27xf32>
    %681 = vector.extract_strided_slice %2 {offsets = [0, 32], sizes = [16, 1], strides = [1, 1]} : vector<16x48xf32> to vector<16x1xf32>
    %682 = vector.extract_strided_slice %486 {offsets = [5, 2], sizes = [1, 27], strides = [1, 1]} : vector<8x32xf32> to vector<1x27xf32>
    %683 = vector.broadcast %681 : vector<16x1xf32> to vector<16x27xf32>
    %684 = vector.broadcast %682 : vector<1x27xf32> to vector<16x27xf32>
    %685 = arith.mulf %683, %684 : vector<16x27xf32>
    %686 = arith.addf %680, %685 : vector<16x27xf32>
    %687 = vector.extract_strided_slice %2 {offsets = [0, 33], sizes = [16, 1], strides = [1, 1]} : vector<16x48xf32> to vector<16x1xf32>
    %688 = vector.extract_strided_slice %486 {offsets = [5, 3], sizes = [1, 27], strides = [1, 1]} : vector<8x32xf32> to vector<1x27xf32>
    %689 = vector.broadcast %687 : vector<16x1xf32> to vector<16x27xf32>
    %690 = vector.broadcast %688 : vector<1x27xf32> to vector<16x27xf32>
    %691 = arith.mulf %689, %690 : vector<16x27xf32>
    %692 = arith.addf %686, %691 : vector<16x27xf32>
    %693 = vector.extract_strided_slice %2 {offsets = [0, 34], sizes = [16, 1], strides = [1, 1]} : vector<16x48xf32> to vector<16x1xf32>
    %694 = vector.extract_strided_slice %486 {offsets = [5, 4], sizes = [1, 27], strides = [1, 1]} : vector<8x32xf32> to vector<1x27xf32>
    %695 = vector.broadcast %693 : vector<16x1xf32> to vector<16x27xf32>
    %696 = vector.broadcast %694 : vector<1x27xf32> to vector<16x27xf32>
    %697 = arith.mulf %695, %696 : vector<16x27xf32>
    %698 = arith.addf %692, %697 : vector<16x27xf32>
    %699 = vector.extract_strided_slice %2 {offsets = [0, 35], sizes = [16, 1], strides = [1, 1]} : vector<16x48xf32> to vector<16x1xf32>
    %700 = vector.extract_strided_slice %486 {offsets = [5, 5], sizes = [1, 27], strides = [1, 1]} : vector<8x32xf32> to vector<1x27xf32>
    %701 = vector.broadcast %699 : vector<16x1xf32> to vector<16x27xf32>
    %702 = vector.broadcast %700 : vector<1x27xf32> to vector<16x27xf32>
    %703 = arith.mulf %701, %702 : vector<16x27xf32>
    %704 = arith.addf %698, %703 : vector<16x27xf32>
    %705 = vector.extract_strided_slice %2 {offsets = [0, 36], sizes = [16, 1], strides = [1, 1]} : vector<16x48xf32> to vector<16x1xf32>
    %706 = vector.extract_strided_slice %486 {offsets = [6, 0], sizes = [1, 27], strides = [1, 1]} : vector<8x32xf32> to vector<1x27xf32>
    %707 = vector.broadcast %705 : vector<16x1xf32> to vector<16x27xf32>
    %708 = vector.broadcast %706 : vector<1x27xf32> to vector<16x27xf32>
    %709 = arith.mulf %707, %708 : vector<16x27xf32>
    %710 = arith.addf %704, %709 : vector<16x27xf32>
    %711 = vector.extract_strided_slice %2 {offsets = [0, 37], sizes = [16, 1], strides = [1, 1]} : vector<16x48xf32> to vector<16x1xf32>
    %712 = vector.extract_strided_slice %486 {offsets = [6, 1], sizes = [1, 27], strides = [1, 1]} : vector<8x32xf32> to vector<1x27xf32>
    %713 = vector.broadcast %711 : vector<16x1xf32> to vector<16x27xf32>
    %714 = vector.broadcast %712 : vector<1x27xf32> to vector<16x27xf32>
    %715 = arith.mulf %713, %714 : vector<16x27xf32>
    %716 = arith.addf %710, %715 : vector<16x27xf32>
    %717 = vector.extract_strided_slice %2 {offsets = [0, 38], sizes = [16, 1], strides = [1, 1]} : vector<16x48xf32> to vector<16x1xf32>
    %718 = vector.extract_strided_slice %486 {offsets = [6, 2], sizes = [1, 27], strides = [1, 1]} : vector<8x32xf32> to vector<1x27xf32>
    %719 = vector.broadcast %717 : vector<16x1xf32> to vector<16x27xf32>
    %720 = vector.broadcast %718 : vector<1x27xf32> to vector<16x27xf32>
    %721 = arith.mulf %719, %720 : vector<16x27xf32>
    %722 = arith.addf %716, %721 : vector<16x27xf32>
    %723 = vector.extract_strided_slice %2 {offsets = [0, 39], sizes = [16, 1], strides = [1, 1]} : vector<16x48xf32> to vector<16x1xf32>
    %724 = vector.extract_strided_slice %486 {offsets = [6, 3], sizes = [1, 27], strides = [1, 1]} : vector<8x32xf32> to vector<1x27xf32>
    %725 = vector.broadcast %723 : vector<16x1xf32> to vector<16x27xf32>
    %726 = vector.broadcast %724 : vector<1x27xf32> to vector<16x27xf32>
    %727 = arith.mulf %725, %726 : vector<16x27xf32>
    %728 = arith.addf %722, %727 : vector<16x27xf32>
    %729 = vector.extract_strided_slice %2 {offsets = [0, 40], sizes = [16, 1], strides = [1, 1]} : vector<16x48xf32> to vector<16x1xf32>
    %730 = vector.extract_strided_slice %486 {offsets = [6, 4], sizes = [1, 27], strides = [1, 1]} : vector<8x32xf32> to vector<1x27xf32>
    %731 = vector.broadcast %729 : vector<16x1xf32> to vector<16x27xf32>
    %732 = vector.broadcast %730 : vector<1x27xf32> to vector<16x27xf32>
    %733 = arith.mulf %731, %732 : vector<16x27xf32>
    %734 = arith.addf %728, %733 : vector<16x27xf32>
    %735 = vector.extract_strided_slice %2 {offsets = [0, 41], sizes = [16, 1], strides = [1, 1]} : vector<16x48xf32> to vector<16x1xf32>
    %736 = vector.extract_strided_slice %486 {offsets = [6, 5], sizes = [1, 27], strides = [1, 1]} : vector<8x32xf32> to vector<1x27xf32>
    %737 = vector.broadcast %735 : vector<16x1xf32> to vector<16x27xf32>
    %738 = vector.broadcast %736 : vector<1x27xf32> to vector<16x27xf32>
    %739 = arith.mulf %737, %738 : vector<16x27xf32>
    %740 = arith.addf %734, %739 : vector<16x27xf32>
    %741 = vector.extract_strided_slice %2 {offsets = [0, 42], sizes = [16, 1], strides = [1, 1]} : vector<16x48xf32> to vector<16x1xf32>
    %742 = vector.extract_strided_slice %486 {offsets = [7, 0], sizes = [1, 27], strides = [1, 1]} : vector<8x32xf32> to vector<1x27xf32>
    %743 = vector.broadcast %741 : vector<16x1xf32> to vector<16x27xf32>
    %744 = vector.broadcast %742 : vector<1x27xf32> to vector<16x27xf32>
    %745 = arith.mulf %743, %744 : vector<16x27xf32>
    %746 = arith.addf %740, %745 : vector<16x27xf32>
    %747 = vector.extract_strided_slice %2 {offsets = [0, 43], sizes = [16, 1], strides = [1, 1]} : vector<16x48xf32> to vector<16x1xf32>
    %748 = vector.extract_strided_slice %486 {offsets = [7, 1], sizes = [1, 27], strides = [1, 1]} : vector<8x32xf32> to vector<1x27xf32>
    %749 = vector.broadcast %747 : vector<16x1xf32> to vector<16x27xf32>
    %750 = vector.broadcast %748 : vector<1x27xf32> to vector<16x27xf32>
    %751 = arith.mulf %749, %750 : vector<16x27xf32>
    %752 = arith.addf %746, %751 : vector<16x27xf32>
    %753 = vector.extract_strided_slice %2 {offsets = [0, 44], sizes = [16, 1], strides = [1, 1]} : vector<16x48xf32> to vector<16x1xf32>
    %754 = vector.extract_strided_slice %486 {offsets = [7, 2], sizes = [1, 27], strides = [1, 1]} : vector<8x32xf32> to vector<1x27xf32>
    %755 = vector.broadcast %753 : vector<16x1xf32> to vector<16x27xf32>
    %756 = vector.broadcast %754 : vector<1x27xf32> to vector<16x27xf32>
    %757 = arith.mulf %755, %756 : vector<16x27xf32>
    %758 = arith.addf %752, %757 : vector<16x27xf32>
    %759 = vector.extract_strided_slice %2 {offsets = [0, 45], sizes = [16, 1], strides = [1, 1]} : vector<16x48xf32> to vector<16x1xf32>
    %760 = vector.extract_strided_slice %486 {offsets = [7, 3], sizes = [1, 27], strides = [1, 1]} : vector<8x32xf32> to vector<1x27xf32>
    %761 = vector.broadcast %759 : vector<16x1xf32> to vector<16x27xf32>
    %762 = vector.broadcast %760 : vector<1x27xf32> to vector<16x27xf32>
    %763 = arith.mulf %761, %762 : vector<16x27xf32>
    %764 = arith.addf %758, %763 : vector<16x27xf32>
    %765 = vector.extract_strided_slice %2 {offsets = [0, 46], sizes = [16, 1], strides = [1, 1]} : vector<16x48xf32> to vector<16x1xf32>
    %766 = vector.extract_strided_slice %486 {offsets = [7, 4], sizes = [1, 27], strides = [1, 1]} : vector<8x32xf32> to vector<1x27xf32>
    %767 = vector.broadcast %765 : vector<16x1xf32> to vector<16x27xf32>
    %768 = vector.broadcast %766 : vector<1x27xf32> to vector<16x27xf32>
    %769 = arith.mulf %767, %768 : vector<16x27xf32>
    %770 = arith.addf %764, %769 : vector<16x27xf32>
    %771 = vector.extract_strided_slice %2 {offsets = [0, 47], sizes = [16, 1], strides = [1, 1]} : vector<16x48xf32> to vector<16x1xf32>
    %772 = vector.extract_strided_slice %486 {offsets = [7, 5], sizes = [1, 27], strides = [1, 1]} : vector<8x32xf32> to vector<1x27xf32>
    %773 = vector.broadcast %771 : vector<16x1xf32> to vector<16x27xf32>
    %774 = vector.broadcast %772 : vector<1x27xf32> to vector<16x27xf32>
    %775 = arith.mulf %773, %774 : vector<16x27xf32>
    %776 = arith.addf %770, %775 : vector<16x27xf32>
    %cst_31 = arith.constant 0.000000e+00 : f32
    %777 = vector.broadcast %cst_31 : f32 to vector<16x27xf32>
    %778 = arith.maximumf %776, %777 : vector<16x27xf32>
    %779 = vector.extract_strided_slice %778 {offsets = [0, 0], sizes = [16, 23], strides = [1, 1]} : vector<16x27xf32> to vector<16x23xf32>
    %780 = vector.extract_strided_slice %778 {offsets = [0, 1], sizes = [16, 23], strides = [1, 1]} : vector<16x27xf32> to vector<16x23xf32>
    %781 = arith.maximumf %779, %780 : vector<16x23xf32>
    %782 = vector.extract_strided_slice %778 {offsets = [0, 2], sizes = [16, 23], strides = [1, 1]} : vector<16x27xf32> to vector<16x23xf32>
    %783 = arith.maximumf %781, %782 : vector<16x23xf32>
    %784 = vector.extract_strided_slice %778 {offsets = [0, 3], sizes = [16, 23], strides = [1, 1]} : vector<16x27xf32> to vector<16x23xf32>
    %785 = arith.maximumf %783, %784 : vector<16x23xf32>
    %786 = vector.extract_strided_slice %778 {offsets = [0, 4], sizes = [16, 23], strides = [1, 1]} : vector<16x27xf32> to vector<16x23xf32>
    %787 = arith.maximumf %785, %786 : vector<16x23xf32>
    %788 = vector.extract_strided_slice %787 {offsets = [0, 0], sizes = [1, 23], strides = [1, 1]} : vector<16x23xf32> to vector<1x23xf32>
    %c1_32 = arith.constant 1 : index
    %c0_33 = arith.constant 0 : index
    %789 = vector.load %arg15[%c1_32, %c0_33] : memref<2x368xf32, #tpu.memory_space<vmem>>, vector<1x23xf32>
    tpu.vector_store %arg15[%c1_32, %c0_33], %788 {strides = array<i32>} : memref<2x368xf32, #tpu.memory_space<vmem>>, vector<1x23xf32>,
    %790 = vector.extract_strided_slice %787 {offsets = [1, 0], sizes = [1, 23], strides = [1, 1]} : vector<16x23xf32> to vector<1x23xf32>
    %c1_34 = arith.constant 1 : index
    %c23_35 = arith.constant 23 : index
    %791 = vector.load %arg15[%c1_34, %c23_35] : memref<2x368xf32, #tpu.memory_space<vmem>>, vector<1x23xf32>
    tpu.vector_store %arg15[%c1_34, %c23_35], %790 {strides = array<i32>} : memref<2x368xf32, #tpu.memory_space<vmem>>, vector<1x23xf32>,
    %792 = vector.extract_strided_slice %787 {offsets = [2, 0], sizes = [1, 23], strides = [1, 1]} : vector<16x23xf32> to vector<1x23xf32>
    %c1_36 = arith.constant 1 : index
    %c46_37 = arith.constant 46 : index
    %793 = vector.load %arg15[%c1_36, %c46_37] : memref<2x368xf32, #tpu.memory_space<vmem>>, vector<1x23xf32>
    tpu.vector_store %arg15[%c1_36, %c46_37], %792 {strides = array<i32>} : memref<2x368xf32, #tpu.memory_space<vmem>>, vector<1x23xf32>,
    %794 = vector.extract_strided_slice %787 {offsets = [3, 0], sizes = [1, 23], strides = [1, 1]} : vector<16x23xf32> to vector<1x23xf32>
    %c1_38 = arith.constant 1 : index
    %c69_39 = arith.constant 69 : index
    %795 = vector.load %arg15[%c1_38, %c69_39] : memref<2x368xf32, #tpu.memory_space<vmem>>, vector<1x23xf32>
    tpu.vector_store %arg15[%c1_38, %c69_39], %794 {strides = array<i32>} : memref<2x368xf32, #tpu.memory_space<vmem>>, vector<1x23xf32>,
    %796 = vector.extract_strided_slice %787 {offsets = [4, 0], sizes = [1, 23], strides = [1, 1]} : vector<16x23xf32> to vector<1x23xf32>
    %c1_40 = arith.constant 1 : index
    %c92_41 = arith.constant 92 : index
    %797 = vector.load %arg15[%c1_40, %c92_41] : memref<2x368xf32, #tpu.memory_space<vmem>>, vector<1x23xf32>
    tpu.vector_store %arg15[%c1_40, %c92_41], %796 {strides = array<i32>} : memref<2x368xf32, #tpu.memory_space<vmem>>, vector<1x23xf32>,
    %798 = vector.extract_strided_slice %787 {offsets = [5, 0], sizes = [1, 23], strides = [1, 1]} : vector<16x23xf32> to vector<1x23xf32>
    %c1_42 = arith.constant 1 : index
    %c115_43 = arith.constant 115 : index
    %799 = vector.load %arg15[%c1_42, %c115_43] : memref<2x368xf32, #tpu.memory_space<vmem>>, vector<1x23xf32>
    tpu.vector_store %arg15[%c1_42, %c115_43], %798 {strides = array<i32>} : memref<2x368xf32, #tpu.memory_space<vmem>>, vector<1x23xf32>,
    %800 = vector.extract_strided_slice %787 {offsets = [6, 0], sizes = [1, 23], strides = [1, 1]} : vector<16x23xf32> to vector<1x23xf32>
    %c1_44 = arith.constant 1 : index
    %c138_45 = arith.constant 138 : index
    %801 = vector.load %arg15[%c1_44, %c138_45] : memref<2x368xf32, #tpu.memory_space<vmem>>, vector<1x23xf32>
    tpu.vector_store %arg15[%c1_44, %c138_45], %800 {strides = array<i32>} : memref<2x368xf32, #tpu.memory_space<vmem>>, vector<1x23xf32>,
    %802 = vector.extract_strided_slice %787 {offsets = [7, 0], sizes = [1, 23], strides = [1, 1]} : vector<16x23xf32> to vector<1x23xf32>
    %c1_46 = arith.constant 1 : index
    %c161_47 = arith.constant 161 : index
    %803 = vector.load %arg15[%c1_46, %c161_47] : memref<2x368xf32, #tpu.memory_space<vmem>>, vector<1x23xf32>
    tpu.vector_store %arg15[%c1_46, %c161_47], %802 {strides = array<i32>} : memref<2x368xf32, #tpu.memory_space<vmem>>, vector<1x23xf32>,
    %804 = vector.extract_strided_slice %787 {offsets = [8, 0], sizes = [1, 23], strides = [1, 1]} : vector<16x23xf32> to vector<1x23xf32>
    %c1_48 = arith.constant 1 : index
    %c184_49 = arith.constant 184 : index
    %805 = vector.load %arg15[%c1_48, %c184_49] : memref<2x368xf32, #tpu.memory_space<vmem>>, vector<1x23xf32>
    tpu.vector_store %arg15[%c1_48, %c184_49], %804 {strides = array<i32>} : memref<2x368xf32, #tpu.memory_space<vmem>>, vector<1x23xf32>,
    %806 = vector.extract_strided_slice %787 {offsets = [9, 0], sizes = [1, 23], strides = [1, 1]} : vector<16x23xf32> to vector<1x23xf32>
    %c1_50 = arith.constant 1 : index
    %c207_51 = arith.constant 207 : index
    %807 = vector.load %arg15[%c1_50, %c207_51] : memref<2x368xf32, #tpu.memory_space<vmem>>, vector<1x23xf32>
    tpu.vector_store %arg15[%c1_50, %c207_51], %806 {strides = array<i32>} : memref<2x368xf32, #tpu.memory_space<vmem>>, vector<1x23xf32>,
    %808 = vector.extract_strided_slice %787 {offsets = [10, 0], sizes = [1, 23], strides = [1, 1]} : vector<16x23xf32> to vector<1x23xf32>
    %c1_52 = arith.constant 1 : index
    %c230_53 = arith.constant 230 : index
    %809 = vector.load %arg15[%c1_52, %c230_53] : memref<2x368xf32, #tpu.memory_space<vmem>>, vector<1x23xf32>
    tpu.vector_store %arg15[%c1_52, %c230_53], %808 {strides = array<i32>} : memref<2x368xf32, #tpu.memory_space<vmem>>, vector<1x23xf32>,
    %810 = vector.extract_strided_slice %787 {offsets = [11, 0], sizes = [1, 23], strides = [1, 1]} : vector<16x23xf32> to vector<1x23xf32>
    %c1_54 = arith.constant 1 : index
    %c253_55 = arith.constant 253 : index
    %811 = vector.load %arg15[%c1_54, %c253_55] : memref<2x368xf32, #tpu.memory_space<vmem>>, vector<1x23xf32>
    tpu.vector_store %arg15[%c1_54, %c253_55], %810 {strides = array<i32>} : memref<2x368xf32, #tpu.memory_space<vmem>>, vector<1x23xf32>,
    %812 = vector.extract_strided_slice %787 {offsets = [12, 0], sizes = [1, 23], strides = [1, 1]} : vector<16x23xf32> to vector<1x23xf32>
    %c1_56 = arith.constant 1 : index
    %c276_57 = arith.constant 276 : index
    %813 = vector.load %arg15[%c1_56, %c276_57] : memref<2x368xf32, #tpu.memory_space<vmem>>, vector<1x23xf32>
    tpu.vector_store %arg15[%c1_56, %c276_57], %812 {strides = array<i32>} : memref<2x368xf32, #tpu.memory_space<vmem>>, vector<1x23xf32>,
    %814 = vector.extract_strided_slice %787 {offsets = [13, 0], sizes = [1, 23], strides = [1, 1]} : vector<16x23xf32> to vector<1x23xf32>
    %c1_58 = arith.constant 1 : index
    %c299_59 = arith.constant 299 : index
    %815 = vector.load %arg15[%c1_58, %c299_59] : memref<2x368xf32, #tpu.memory_space<vmem>>, vector<1x23xf32>
    tpu.vector_store %arg15[%c1_58, %c299_59], %814 {strides = array<i32>} : memref<2x368xf32, #tpu.memory_space<vmem>>, vector<1x23xf32>,
    %816 = vector.extract_strided_slice %787 {offsets = [14, 0], sizes = [1, 23], strides = [1, 1]} : vector<16x23xf32> to vector<1x23xf32>
    %c1_60 = arith.constant 1 : index
    %c322_61 = arith.constant 322 : index
    %817 = vector.load %arg15[%c1_60, %c322_61] : memref<2x368xf32, #tpu.memory_space<vmem>>, vector<1x23xf32>
    tpu.vector_store %arg15[%c1_60, %c322_61], %816 {strides = array<i32>} : memref<2x368xf32, #tpu.memory_space<vmem>>, vector<1x23xf32>,
    %818 = vector.extract_strided_slice %787 {offsets = [15, 0], sizes = [1, 23], strides = [1, 1]} : vector<16x23xf32> to vector<1x23xf32>
    %c1_62 = arith.constant 1 : index
    %c345_63 = arith.constant 345 : index
    %819 = vector.load %arg15[%c1_62, %c345_63] : memref<2x368xf32, #tpu.memory_space<vmem>>, vector<1x23xf32>
    tpu.vector_store %arg15[%c1_62, %c345_63], %818 {strides = array<i32>} : memref<2x368xf32, #tpu.memory_space<vmem>>, vector<1x23xf32>,
    %c0_64 = arith.constant 0 : index
    %c0_65 = arith.constant 0 : index
    %820 = vector.load %arg15[%c0_64, %c0_65] : memref<2x368xf32, #tpu.memory_space<vmem>>, vector<2x368xf32>
    %821 = arith.truncf %820 : vector<2x368xf32> to vector<2x368xbf16>
    %c0_66 = arith.constant 0 : index
    %c0_67 = arith.constant 0 : index
    %822 = vector.load %arg6[%c0_66, %c0_67] : memref<368x64xbf16, #tpu.memory_space<vmem>>, vector<368x64xbf16>
    %cst_68 = arith.constant dense<0.000000e+00> : vector<2x64xf32>
    %823 = tpu.matmul %821, %822, %cst_68 {dimension_numbers = #tpu.dot_dimension_numbers<[1], [0], [0], [1], [0, 0, 1, 1], [], []>} : vector<2x368xbf16>, vector<368x64xbf16>, vector<2x64xf32> -> vector<2x64xf32>
    %c0_69 = arith.constant 0 : index
    %c0_70 = arith.constant 0 : index
    %824 = vector.load %arg7[%c0_69, %c0_70] : memref<1x64xf32, #tpu.memory_space<vmem>>, vector<1x64xf32>
    %825 = vector.broadcast %824 : vector<1x64xf32> to vector<2x64xf32>
    %826 = arith.addf %823, %825 : vector<2x64xf32>
    %cst_71 = arith.constant 0.000000e+00 : f32
    %827 = vector.broadcast %cst_71 : f32 to vector<2x64xf32>
    %828 = arith.maximumf %826, %827 : vector<2x64xf32>
    %829 = arith.truncf %828 : vector<2x64xf32> to vector<2x64xbf16>
    %c0_72 = arith.constant 0 : index
    %c0_73 = arith.constant 0 : index
    %830 = vector.load %arg8[%c0_72, %c0_73] : memref<64x32xbf16, #tpu.memory_space<vmem>>, vector<64x32xbf16>
    %cst_74 = arith.constant dense<0.000000e+00> : vector<2x32xf32>
    %831 = tpu.matmul %829, %830, %cst_74 {dimension_numbers = #tpu.dot_dimension_numbers<[1], [0], [0], [1], [0, 0, 1, 1], [], []>} : vector<2x64xbf16>, vector<64x32xbf16>, vector<2x32xf32> -> vector<2x32xf32>
    %c0_75 = arith.constant 0 : index
    %c0_76 = arith.constant 0 : index
    %832 = vector.load %arg9[%c0_75, %c0_76] : memref<1x32xf32, #tpu.memory_space<vmem>>, vector<1x32xf32>
    %833 = vector.broadcast %832 : vector<1x32xf32> to vector<2x32xf32>
    %834 = arith.addf %831, %833 : vector<2x32xf32>
    %cst_77 = arith.constant 0.000000e+00 : f32
    %835 = vector.broadcast %cst_77 : f32 to vector<2x32xf32>
    %836 = arith.maximumf %834, %835 : vector<2x32xf32>
    %837 = arith.truncf %836 : vector<2x32xf32> to vector<2x32xbf16>
    %c0_78 = arith.constant 0 : index
    %c0_79 = arith.constant 0 : index
    %838 = vector.load %arg10[%c0_78, %c0_79] : memref<32x16xbf16, #tpu.memory_space<vmem>>, vector<32x16xbf16>
    %cst_80 = arith.constant dense<0.000000e+00> : vector<2x16xf32>
    %839 = tpu.matmul %837, %838, %cst_80 {dimension_numbers = #tpu.dot_dimension_numbers<[1], [0], [0], [1], [0, 0, 1, 1], [], []>} : vector<2x32xbf16>, vector<32x16xbf16>, vector<2x16xf32> -> vector<2x16xf32>
    %c0_81 = arith.constant 0 : index
    %c0_82 = arith.constant 0 : index
    %840 = vector.load %arg11[%c0_81, %c0_82] : memref<1x16xf32, #tpu.memory_space<vmem>>, vector<1x16xf32>
    %841 = vector.broadcast %840 : vector<1x16xf32> to vector<2x16xf32>
    %842 = arith.addf %839, %841 : vector<2x16xf32>
    %cst_83 = arith.constant 0.000000e+00 : f32
    %843 = vector.broadcast %cst_83 : f32 to vector<2x16xf32>
    %844 = arith.maximumf %842, %843 : vector<2x16xf32>
    %845 = arith.truncf %844 : vector<2x16xf32> to vector<2x16xbf16>
    %c0_84 = arith.constant 0 : index
    %c0_85 = arith.constant 0 : index
    %846 = vector.load %arg12[%c0_84, %c0_85] : memref<16x2xbf16, #tpu.memory_space<vmem>>, vector<16x2xbf16>
    %cst_86 = arith.constant dense<0.000000e+00> : vector<2x2xf32>
    %847 = tpu.matmul %845, %846, %cst_86 {dimension_numbers = #tpu.dot_dimension_numbers<[1], [0], [0], [1], [0, 0, 1, 1], [], []>} : vector<2x16xbf16>, vector<16x2xbf16>, vector<2x2xf32> -> vector<2x2xf32>
    %c0_87 = arith.constant 0 : index
    %c0_88 = arith.constant 0 : index
    %848 = vector.load %arg13[%c0_87, %c0_88] : memref<1x2xf32, #tpu.memory_space<vmem>>, vector<1x2xf32>
    %849 = vector.broadcast %848 : vector<1x2xf32> to vector<2x2xf32>
    %850 = arith.addf %847, %849 : vector<2x2xf32>
    %c0_89 = arith.constant 0 : index
    %c0_90 = arith.constant 0 : index
    %851 = vector.load %arg14[%c0_89, %c0_90] : memref<2x2xf32, #tpu.memory_space<vmem>>, vector<2x2xf32>
    tpu.vector_store %arg14[%c0_89, %c0_90], %850 {strides = array<i32>} : memref<2x2xf32, #tpu.memory_space<vmem>>, vector<2x2xf32>,
    return
  }
  func.func @transform_0(%arg0: i32) -> (i32, i32, i32) {
    %c0_i32 = arith.constant 0 : i32
    %c0_i32_0 = arith.constant 0 : i32
    %c0_i32_1 = arith.constant 0 : i32
    %c0_i32_2 = arith.constant 0 : i32
    return %c0_i32, %c0_i32_0, %c0_i32_1 : i32, i32, i32
  }
  func.func @transform_1(%arg0: i32) -> (i32, i32) {
    %c0_i32 = arith.constant 0 : i32
    %c0_i32_0 = arith.constant 0 : i32
    %c0_i32_1 = arith.constant 0 : i32
    return %c0_i32, %c0_i32_0 : i32, i32
  }
  func.func @transform_2(%arg0: i32) -> (i32, i32) {
    %c0_i32 = arith.constant 0 : i32
    %c0_i32_0 = arith.constant 0 : i32
    %c0_i32_1 = arith.constant 0 : i32
    return %c0_i32, %c0_i32_0 : i32, i32
  }
  func.func @transform_3(%arg0: i32) -> (i32, i32) {
    %c0_i32 = arith.constant 0 : i32
    %c0_i32_0 = arith.constant 0 : i32
    %c0_i32_1 = arith.constant 0 : i32
    return %c0_i32, %c0_i32_0 : i32, i32
  }
  func.func @transform_4(%arg0: i32) -> (i32, i32) {
    %c0_i32 = arith.constant 0 : i32
    %c0_i32_0 = arith.constant 0 : i32
    %c0_i32_1 = arith.constant 0 : i32
    return %c0_i32, %c0_i32_0 : i32, i32
  }
  func.func @transform_5(%arg0: i32) -> (i32, i32) {
    %c0_i32 = arith.constant 0 : i32
    %c0_i32_0 = arith.constant 0 : i32
    %c0_i32_1 = arith.constant 0 : i32
    return %c0_i32, %c0_i32_0 : i32, i32
  }
  func.func @transform_6(%arg0: i32) -> (i32, i32) {
    %c0_i32 = arith.constant 0 : i32
    %c0_i32_0 = arith.constant 0 : i32
    %c0_i32_1 = arith.constant 0 : i32
    return %c0_i32, %c0_i32_0 : i32, i32
  }
  func.func @transform_7(%arg0: i32) -> (i32, i32) {
    %c0_i32 = arith.constant 0 : i32
    %c0_i32_0 = arith.constant 0 : i32
    %c0_i32_1 = arith.constant 0 : i32
    return %c0_i32, %c0_i32_0 : i32, i32
  }
  func.func @transform_8(%arg0: i32) -> (i32, i32) {
    %c0_i32 = arith.constant 0 : i32
    %c0_i32_0 = arith.constant 0 : i32
    %c0_i32_1 = arith.constant 0 : i32
    return %c0_i32, %c0_i32_0 : i32, i32
  }
  func.func @transform_9(%arg0: i32) -> (i32, i32) {
    %c0_i32 = arith.constant 0 : i32
    %c0_i32_0 = arith.constant 0 : i32
    %c0_i32_1 = arith.constant 0 : i32
    return %c0_i32, %c0_i32_0 : i32, i32
  }
  func.func @transform_10(%arg0: i32) -> (i32, i32) {
    %c0_i32 = arith.constant 0 : i32
    %c0_i32_0 = arith.constant 0 : i32
    %c0_i32_1 = arith.constant 0 : i32
    return %c0_i32, %c0_i32_0 : i32, i32
  }
  func.func @transform_11(%arg0: i32) -> (i32, i32) {
    %c0_i32 = arith.constant 0 : i32
    %c0_i32_0 = arith.constant 0 : i32
    %c0_i32_1 = arith.constant 0 : i32
    return %c0_i32, %c0_i32_0 : i32, i32
  }
  func.func @transform_12(%arg0: i32) -> (i32, i32) {
    %c0_i32 = arith.constant 0 : i32
    %c0_i32_0 = arith.constant 0 : i32
    %c0_i32_1 = arith.constant 0 : i32
    return %c0_i32, %c0_i32_0 : i32, i32
  }
  func.func @transform_13(%arg0: i32) -> (i32, i32) {
    %c0_i32 = arith.constant 0 : i32
    %c0_i32_0 = arith.constant 0 : i32
    %c0_i32_1 = arith.constant 0 : i32
    return %c0_i32, %c0_i32_0 : i32, i32
  }
}

</mosaic_0001>

<llo_original>
// kernel: net_forward.1
$region0: #{net_forward.1}
  #allocation0 [shape = 'u32[]', space=smem, size = 0x4, offset = 0x4, fixed_abs, tag = 'smem constant byte address 0x4 - core index']
  #allocation1 [shape = 'u32[144,128]{1,0:T(1,128)}', space=vmem, size = 0x12000, scoped, tag = 'internal scratch']
  #allocation2 [shape = 'f32[2,368]{1,0:T(2,128)}', space=vmem, size = 0xc00, scoped, tag = 'scratch operand']
  %s0 = inlined_call_operand.vmem [shape: f32[2,2,40], index: 0, kind: input, shape index: {}]
  %s1 = inlined_call_operand.vmem [shape: f32[8,10], index: 1, kind: input, shape index: {}]
  %s2 = inlined_call_operand.vmem [shape: f32[8,1], index: 2, kind: input, shape index: {}]
  %s3 = inlined_call_operand.vmem [shape: f32[16,48], index: 3, kind: input, shape index: {}]
  %s4 = inlined_call_operand.vmem [shape: f32[16,1], index: 4, kind: input, shape index: {}]
  %s5 = inlined_call_operand.vmem [shape: bf16[368,64], index: 5, kind: input, shape index: {}]
  %s6 = inlined_call_operand.vmem [shape: f32[1,64], index: 6, kind: input, shape index: {}]
  %s7 = inlined_call_operand.vmem [shape: bf16[64,32], index: 7, kind: input, shape index: {}]
  %s8 = inlined_call_operand.vmem [shape: f32[1,32], index: 8, kind: input, shape index: {}]
  %s9 = inlined_call_operand.vmem [shape: bf16[32,16], index: 9, kind: input, shape index: {}]
  %s10 = inlined_call_operand.vmem [shape: f32[1,16], index: 10, kind: input, shape index: {}]
  %s11 = inlined_call_operand.vmem [shape: bf16[16,2], index: 11, kind: input, shape index: {}]
  %s12 = inlined_call_operand.vmem [shape: f32[1,2], index: 12, kind: input, shape index: {}]
  %s13 = inlined_call_operand.hbm [shape: f32[2,2], index: 13, kind: output, shape index: {}]
  %s14 = sld [smem:[#allocation0]]
  $region62: #{net_forward.1} parent=0
    _
  %s16 = ssub.s32 1, %s14
  %s17 = scalar_select 0, %s16, %s14
  $region1: #{net_forward.1} parent=0
    #allocation3 [shape = 'u8[1024]{0}', space=vmem, size = 0x400, scoped, tag = 'output window, operand 0, single buffered']
    #allocation4 [shape = 's32[1]{0}', space=sflag, size = 0x4, scoped, tag = 'scoped memory for net_forward.1']
    %18 = vsyncpa [#allocation4], 0
    // Predicated region
    $region2: #{net_forward.1} parent=1 // pred_check
      _
    $region3: #{net_forward.1} parent=1 // pred_check_branch
      %20 = sbr.rel (0) target = $region5
    $region4: #{net_forward.1} parent=1 // pred_region
      _
    $region5: #{net_forward.1} parent=1 // pred_fallthru
      _
    // Predicated region
    $region6: #{net_forward.1} parent=1 // pred_check
      _
    $region7: #{net_forward.1} parent=1 // pred_check_branch
      %22 = sbr.rel (0) target = $region9
    $region8: #{net_forward.1} parent=1 // pred_region
      _
    $region9: #{net_forward.1} parent=1 // pred_fallthru
      _
    // Predicated region
    $region10: #{net_forward.1} parent=1 // pred_check
      _
    $region11: #{net_forward.1} parent=1 // pred_check_branch
      %24 = sbr.rel (0) target = $region13
    $region12: #{net_forward.1} parent=1 // pred_region
      _
    $region13: #{net_forward.1} parent=1 // pred_fallthru
      _
    // Predicated region
    $region14: #{net_forward.1} parent=1 // pred_check
      _
    $region15: #{net_forward.1} parent=1 // pred_check_branch
      %26 = sbr.rel (0) target = $region17
    $region16: #{net_forward.1} parent=1 // pred_region
      _
    $region17: #{net_forward.1} parent=1 // pred_fallthru
      _
    // Predicated region
    $region18: #{net_forward.1} parent=1 // pred_check
      _
    $region19: #{net_forward.1} parent=1 // pred_check_branch
      %28 = sbr.rel (0) target = $region21
    $region20: #{net_forward.1} parent=1 // pred_region
      _
    $region21: #{net_forward.1} parent=1 // pred_fallthru
      _
    // Predicated region
    $region22: #{net_forward.1} parent=1 // pred_check
      _
    $region23: #{net_forward.1} parent=1 // pred_check_branch
      %30 = sbr.rel (0) target = $region25
    $region24: #{net_forward.1} parent=1 // pred_region
      _
    $region25: #{net_forward.1} parent=1 // pred_fallthru
      _
    // Predicated region
    $region26: #{net_forward.1} parent=1 // pred_check
      _
    $region27: #{net_forward.1} parent=1 // pred_check_branch
      %32 = sbr.rel (0) target = $region29
    $region28: #{net_forward.1} parent=1 // pred_region
      _
    $region29: #{net_forward.1} parent=1 // pred_fallthru
      _
    // Predicated region
    $region30: #{net_forward.1} parent=1 // pred_check
      _
    $region31: #{net_forward.1} parent=1 // pred_check_branch
      %34 = sbr.rel (0) target = $region33
    $region32: #{net_forward.1} parent=1 // pred_region
      _
    $region33: #{net_forward.1} parent=1 // pred_fallthru
      _
    // Predicated region
    $region34: #{net_forward.1} parent=1 // pred_check
      _
    $region35: #{net_forward.1} parent=1 // pred_check_branch
      %36 = sbr.rel (0) target = $region37
    $region36: #{net_forward.1} parent=1 // pred_region
      _
    $region37: #{net_forward.1} parent=1 // pred_fallthru
      _
    // Predicated region
    $region38: #{net_forward.1} parent=1 // pred_check
      _
    $region39: #{net_forward.1} parent=1 // pred_check_branch
      %38 = sbr.rel (0) target = $region41
    $region40: #{net_forward.1} parent=1 // pred_region
      _
    $region41: #{net_forward.1} parent=1 // pred_fallthru
      _
    // Predicated region
    $region42: #{net_forward.1} parent=1 // pred_check
      _
    $region43: #{net_forward.1} parent=1 // pred_check_branch
      %40 = sbr.rel (0) target = $region45
    $region44: #{net_forward.1} parent=1 // pred_region
      _
    $region45: #{net_forward.1} parent=1 // pred_fallthru
      _
    // Predicated region
    $region46: #{net_forward.1} parent=1 // pred_check
      _
    $region47: #{net_forward.1} parent=1 // pred_check_branch
      %42 = sbr.rel (0) target = $region49
    $region48: #{net_forward.1} parent=1 // pred_region
      _
    $region49: #{net_forward.1} parent=1 // pred_fallthru
      _
    // Predicated region
    $region50: #{net_forward.1} parent=1 // pred_check
      _
    $region51: #{net_forward.1} parent=1 // pred_check_branch
      %44 = sbr.rel (0) target = $region53
    $region52: #{net_forward.1} parent=1 // pred_region
      _
    $region53: #{net_forward.1} parent=1 // pred_fallthru
      _
    %v46 = vld [vmem:[%s1] sm:$0xff]
    %v47 = vld [vmem:[%s2] sm:$0xff]
    %v48 = vld [vmem:[%s3] sm:$0xff]
    %v49 = vld [vmem:[%s3 + $0x8] sm:$0xff]
    %v50 = vld [vmem:[%s4] sm:$0xff]
    %v51 = vld [vmem:[%s4 + $0x8] sm:$0xff]
    %v52 = vld [vmem:[%s0] sm:$0x3]
    %54 = vset.pattern.permute.xlu0 0
    %55 = vperm.xlu0 %54, %v47
    %v56 = vpop.permute.xlu0 %55
    %59 = vset.pattern.permute.xlu0 0
    %60 = vperm.xlu0 %59, %v46
    %v61 = vpop.permute.xlu0 %60
    %v63 = vlaneseq
    %v64 = vshrl.u32 %v63, 7
    %v65 = vsub.s32 0, %v64
    %v66 = vrot.slane %v52, %v65
    %v67 = vmul.f32 %v61, %v66
    %v68 = vadd.f32 %v56, %v67
    %69 = vset.pattern.permute.xlu0 1
    %70 = vperm.xlu0 %69, %v46
    %v71 = vpop.permute.xlu0 %70
    %v73 = vmul.f32 %v71, %v66
    %75 = vrot.lane.b32.xlu0 %v73, 127
    %v76 = vpop.permute.xlu0 %75
    %v78 = vadd.f32 %v68, %v76
    %79 = vset.pattern.permute.xlu0 2
    %80 = vperm.xlu0 %79, %v46
    %v81 = vpop.permute.xlu0 %80
    %v83 = vmul.f32 %v81, %v66
    %85 = vrot.lane.b32.xlu0 %v83, 126
    %v86 = vpop.permute.xlu0 %85
    %v88 = vadd.f32 %v78, %v86
    %89 = vset.pattern.permute.xlu0 3
    %90 = vperm.xlu0 %89, %v46
    %v91 = vpop.permute.xlu0 %90
    %v93 = vmul.f32 %v91, %v66
    %95 = vrot.lane.b32.xlu0 %v93, 125
    %v96 = vpop.permute.xlu0 %95
    %v98 = vadd.f32 %v88, %v96
    %99 = vset.pattern.permute.xlu0 4
    %100 = vperm.xlu0 %99, %v46
    %v101 = vpop.permute.xlu0 %100
    %v103 = vmul.f32 %v101, %v66
    %105 = vrot.lane.b32.xlu0 %v103, 124
    %v106 = vpop.permute.xlu0 %105
    %v108 = vadd.f32 %v98, %v106
    %109 = vset.pattern.permute.xlu0 5
    %110 = vperm.xlu0 %109, %v46
    %v111 = vpop.permute.xlu0 %110
    %v113 = vlaneseq
    %v114 = vshrl.u32 %v113, 7
    %v115 = vsub.s32 1, %v114
    %v116 = vrot.slane %v52, %v115
    %v117 = vmul.f32 %v111, %v116
    %v118 = vadd.f32 %v108, %v117
    %119 = vset.pattern.permute.xlu0 6
    %120 = vperm.xlu0 %119, %v46
    %v121 = vpop.permute.xlu0 %120
    %v123 = vmul.f32 %v121, %v116
    %125 = vrot.lane.b32.xlu0 %v123, 127
    %v126 = vpop.permute.xlu0 %125
    %v128 = vadd.f32 %v118, %v126
    %129 = vset.pattern.permute.xlu0 7
    %130 = vperm.xlu0 %129, %v46
    %v131 = vpop.permute.xlu0 %130
    %v133 = vmul.f32 %v131, %v116
    %135 = vrot.lane.b32.xlu0 %v133, 126
    %v136 = vpop.permute.xlu0 %135
    %v138 = vadd.f32 %v128, %v136
    %139 = vset.pattern.permute.xlu0 8
    %140 = vperm.xlu0 %139, %v46
    %v141 = vpop.permute.xlu0 %140
    %v143 = vmul.f32 %v141, %v116
    %145 = vrot.lane.b32.xlu0 %v143, 125
    %v146 = vpop.permute.xlu0 %145
    %v148 = vadd.f32 %v138, %v146
    %149 = vset.pattern.permute.xlu0 9
    %150 = vperm.xlu0 %149, %v46
    %v151 = vpop.permute.xlu0 %150
    %v153 = vmul.f32 %v151, %v116
    %155 = vrot.lane.b32.xlu0 %v153, 124
    %v156 = vpop.permute.xlu0 %155
    %v158 = vadd.f32 %v148, %v156
    %v159 = vmax.f32 %v158, 0.0
    %161 = vrot.lane.b32.xlu0 %v159, 127
    %v162 = vpop.permute.xlu0 %161
    %v164 = vmax.f32 %v159, %v162
    %165 = vrot.lane.b32.xlu0 %v159, 126
    %v166 = vpop.permute.xlu0 %165
    %v168 = vmax.f32 %v164, %v166
    %169 = vrot.lane.b32.xlu0 %v159, 125
    %v170 = vpop.permute.xlu0 %169
    %v172 = vmax.f32 %v168, %v170
    %173 = vrot.lane.b32.xlu0 %v159, 124
    %v174 = vpop.permute.xlu0 %173
    %v176 = vmax.f32 %v172, %v174
    %178 = vset.pattern.permute.xlu0 0
    %179 = vperm.xlu0 %178, %v50
    %v180 = vpop.permute.xlu0 %179
    %183 = vset.pattern.permute.xlu0 0
    %184 = vperm.xlu0 %183, %v51
    %v185 = vpop.permute.xlu0 %184
    %188 = vset.pattern.permute.xlu0 0
    %189 = vperm.xlu0 %188, %v48
    %v190 = vpop.permute.xlu0 %189
    %193 = vset.pattern.permute.xlu0 0
    %194 = vperm.xlu0 %193, %v49
    %v195 = vpop.permute.xlu0 %194
    %v197 = vlaneseq
    %v198 = vshrl.u32 %v197, 7
    %v199 = vsub.s32 0, %v198
    %v200 = vrot.slane %v176, %v199
    %v201 = vmul.f32 %v190, %v200
    %v202 = vmul.f32 %v195, %v200
    %v203 = vadd.f32 %v180, %v201
    %v204 = vadd.f32 %v185, %v202
    %205 = vset.pattern.permute.xlu0 1
    %206 = vperm.xlu0 %205, %v48
    %v207 = vpop.permute.xlu0 %206
    %209 = vset.pattern.permute.xlu0 1
    %210 = vperm.xlu0 %209, %v49
    %v211 = vpop.permute.xlu0 %210
    %v213 = vmul.f32 %v207, %v200
    %v214 = vmul.f32 %v211, %v200
    %217 = vrot.lane.b32.xlu0 %v213, 127
    %v218 = vpop.permute.xlu0 %217
    %219 = vrot.lane.b32.xlu0 %v214, 127
    %v220 = vpop.permute.xlu0 %219
    %v223 = vadd.f32 %v203, %v218
    %v224 = vadd.f32 %v204, %v220
    %225 = vset.pattern.permute.xlu0 2
    %226 = vperm.xlu0 %225, %v48
    %v227 = vpop.permute.xlu0 %226
    %229 = vset.pattern.permute.xlu0 2
    %230 = vperm.xlu0 %229, %v49
    %v231 = vpop.permute.xlu0 %230
    %v233 = vmul.f32 %v227, %v200
    %v234 = vmul.f32 %v231, %v200
    %237 = vrot.lane.b32.xlu0 %v233, 126
    %v238 = vpop.permute.xlu0 %237
    %239 = vrot.lane.b32.xlu0 %v234, 126
    %v240 = vpop.permute.xlu0 %239
    %v243 = vadd.f32 %v223, %v238
    %v244 = vadd.f32 %v224, %v240
    %245 = vset.pattern.permute.xlu0 3
    %246 = vperm.xlu0 %245, %v48
    %v247 = vpop.permute.xlu0 %246
    %249 = vset.pattern.permute.xlu0 3
    %250 = vperm.xlu0 %249, %v49
    %v251 = vpop.permute.xlu0 %250
    %v253 = vmul.f32 %v247, %v200
    %v254 = vmul.f32 %v251, %v200
    %257 = vrot.lane.b32.xlu0 %v253, 125
    %v258 = vpop.permute.xlu0 %257
    %259 = vrot.lane.b32.xlu0 %v254, 125
    %v260 = vpop.permute.xlu0 %259
    %v263 = vadd.f32 %v243, %v258
    %v264 = vadd.f32 %v244, %v260
    %265 = vset.pattern.permute.xlu0 4
    %266 = vperm.xlu0 %265, %v48
    %v267 = vpop.permute.xlu0 %266
    %269 = vset.pattern.permute.xlu0 4
    %270 = vperm.xlu0 %269, %v49
    %v271 = vpop.permute.xlu0 %270
    %v273 = vmul.f32 %v267, %v200
    %v274 = vmul.f32 %v271, %v200
    %277 = vrot.lane.b32.xlu0 %v273, 124
    %v278 = vpop.permute.xlu0 %277
    %279 = vrot.lane.b32.xlu0 %v274, 124
    %v280 = vpop.permute.xlu0 %279
    %v283 = vadd.f32 %v263, %v278
    %v284 = vadd.f32 %v264, %v280
    %285 = vset.pattern.permute.xlu0 5
    %286 = vperm.xlu0 %285, %v48
    %v287 = vpop.permute.xlu0 %286
    %289 = vset.pattern.permute.xlu0 5
    %290 = vperm.xlu0 %289, %v49
    %v291 = vpop.permute.xlu0 %290
    %v293 = vmul.f32 %v287, %v200
    %v294 = vmul.f32 %v291, %v200
    %297 = vrot.lane.b32.xlu0 %v293, 123
    %v298 = vpop.permute.xlu0 %297
    %299 = vrot.lane.b32.xlu0 %v294, 123
    %v300 = vpop.permute.xlu0 %299
    %v303 = vadd.f32 %v283, %v298
    %v304 = vadd.f32 %v284, %v300
    %305 = vset.pattern.permute.xlu0 6
    %306 = vperm.xlu0 %305, %v48
    %v307 = vpop.permute.xlu0 %306
    %309 = vset.pattern.permute.xlu0 6
    %310 = vperm.xlu0 %309, %v49
    %v311 = vpop.permute.xlu0 %310
    %v313 = vlaneseq
    %v314 = vshrl.u32 %v313, 7
    %v315 = vsub.s32 1, %v314
    %v316 = vrot.slane %v176, %v315
    %v317 = vmul.f32 %v307, %v316
    %v318 = vmul.f32 %v311, %v316
    %v319 = vadd.f32 %v303, %v317
    %v320 = vadd.f32 %v304, %v318
    %321 = vset.pattern.permute.xlu0 7
    %322 = vperm.xlu0 %321, %v48
    %v323 = vpop.permute.xlu0 %322
    %325 = vset.pattern.permute.xlu0 7
    %326 = vperm.xlu0 %325, %v49
    %v327 = vpop.permute.xlu0 %326
    %v329 = vmul.f32 %v323, %v316
    %v330 = vmul.f32 %v327, %v316
    %333 = vrot.lane.b32.xlu0 %v329, 127
    %v334 = vpop.permute.xlu0 %333
    %335 = vrot.lane.b32.xlu0 %v330, 127
    %v336 = vpop.permute.xlu0 %335
    %v339 = vadd.f32 %v319, %v334
    %v340 = vadd.f32 %v320, %v336
    %341 = vset.pattern.permute.xlu0 8
    %342 = vperm.xlu0 %341, %v48
    %v343 = vpop.permute.xlu0 %342
    %345 = vset.pattern.permute.xlu0 8
    %346 = vperm.xlu0 %345, %v49
    %v347 = vpop.permute.xlu0 %346
    %v349 = vmul.f32 %v343, %v316
    %v350 = vmul.f32 %v347, %v316
    %353 = vrot.lane.b32.xlu0 %v349, 126
    %v354 = vpop.permute.xlu0 %353
    %355 = vrot.lane.b32.xlu0 %v350, 126
    %v356 = vpop.permute.xlu0 %355
    %v359 = vadd.f32 %v339, %v354
    %v360 = vadd.f32 %v340, %v356
    %361 = vset.pattern.permute.xlu0 9
    %362 = vperm.xlu0 %361, %v48
    %v363 = vpop.permute.xlu0 %362
    %365 = vset.pattern.permute.xlu0 9
    %366 = vperm.xlu0 %365, %v49
    %v367 = vpop.permute.xlu0 %366
    %v369 = vmul.f32 %v363, %v316
    %v370 = vmul.f32 %v367, %v316
    %373 = vrot.lane.b32.xlu0 %v369, 125
    %v374 = vpop.permute.xlu0 %373
    %375 = vrot.lane.b32.xlu0 %v370, 125
    %v376 = vpop.permute.xlu0 %375
    %v379 = vadd.f32 %v359, %v374
    %v380 = vadd.f32 %v360, %v376
    %381 = vset.pattern.permute.xlu0 10
    %382 = vperm.xlu0 %381, %v48
    %v383 = vpop.permute.xlu0 %382
    %385 = vset.pattern.permute.xlu0 10
    %386 = vperm.xlu0 %385, %v49
    %v387 = vpop.permute.xlu0 %386
    %v389 = vmul.f32 %v383, %v316
    %v390 = vmul.f32 %v387, %v316
    %393 = vrot.lane.b32.xlu0 %v389, 124
    %v394 = vpop.permute.xlu0 %393
    %395 = vrot.lane.b32.xlu0 %v390, 124
    %v396 = vpop.permute.xlu0 %395
    %v399 = vadd.f32 %v379, %v394
    %v400 = vadd.f32 %v380, %v396
    %401 = vset.pattern.permute.xlu0 11
    %402 = vperm.xlu0 %401, %v48
    %v403 = vpop.permute.xlu0 %402
    %405 = vset.pattern.permute.xlu0 11
    %406 = vperm.xlu0 %405, %v49
    %v407 = vpop.permute.xlu0 %406
    %v409 = vmul.f32 %v403, %v316
    %v410 = vmul.f32 %v407, %v316
    %413 = vrot.lane.b32.xlu0 %v409, 123
    %v414 = vpop.permute.xlu0 %413
    %415 = vrot.lane.b32.xlu0 %v410, 123
    %v416 = vpop.permute.xlu0 %415
    %v419 = vadd.f32 %v399, %v414
    %v420 = vadd.f32 %v400, %v416
    %421 = vset.pattern.permute.xlu0 12
    %422 = vperm.xlu0 %421, %v48
    %v423 = vpop.permute.xlu0 %422
    %425 = vset.pattern.permute.xlu0 12
    %426 = vperm.xlu0 %425, %v49
    %v427 = vpop.permute.xlu0 %426
    %v429 = vlaneseq
    %v430 = vshrl.u32 %v429, 7
    %v431 = vsub.s32 2, %v430
    %v432 = vrot.slane %v176, %v431
    %v433 = vmul.f32 %v423, %v432
    %v434 = vmul.f32 %v427, %v432
    %v435 = vadd.f32 %v419, %v433
    %v436 = vadd.f32 %v420, %v434
    %437 = vset.pattern.permute.xlu0 13
    %438 = vperm.xlu0 %437, %v48
    %v439 = vpop.permute.xlu0 %438
    %441 = vset.pattern.permute.xlu0 13
    %442 = vperm.xlu0 %441, %v49
    %v443 = vpop.permute.xlu0 %442
    %v445 = vmul.f32 %v439, %v432
    %v446 = vmul.f32 %v443, %v432
    %449 = vrot.lane.b32.xlu0 %v445, 127
    %v450 = vpop.permute.xlu0 %449
    %451 = vrot.lane.b32.xlu0 %v446, 127
    %v452 = vpop.permute.xlu0 %451
    %v455 = vadd.f32 %v435, %v450
    %v456 = vadd.f32 %v436, %v452
    %457 = vset.pattern.permute.xlu0 14
    %458 = vperm.xlu0 %457, %v48
    %v459 = vpop.permute.xlu0 %458
    %461 = vset.pattern.permute.xlu0 14
    %462 = vperm.xlu0 %461, %v49
    %v463 = vpop.permute.xlu0 %462
    %v465 = vmul.f32 %v459, %v432
    %v466 = vmul.f32 %v463, %v432
    %469 = vrot.lane.b32.xlu0 %v465, 126
    %v470 = vpop.permute.xlu0 %469
    %471 = vrot.lane.b32.xlu0 %v466, 126
    %v472 = vpop.permute.xlu0 %471
    %v475 = vadd.f32 %v455, %v470
    %v476 = vadd.f32 %v456, %v472
    %477 = vset.pattern.permute.xlu0 15
    %478 = vperm.xlu0 %477, %v48
    %v479 = vpop.permute.xlu0 %478
    %481 = vset.pattern.permute.xlu0 15
    %482 = vperm.xlu0 %481, %v49
    %v483 = vpop.permute.xlu0 %482
    %v485 = vmul.f32 %v479, %v432
    %v486 = vmul.f32 %v483, %v432
    %489 = vrot.lane.b32.xlu0 %v485, 125
    %v490 = vpop.permute.xlu0 %489
    %491 = vrot.lane.b32.xlu0 %v486, 125
    %v492 = vpop.permute.xlu0 %491
    %v495 = vadd.f32 %v475, %v490
    %v496 = vadd.f32 %v476, %v492
    %497 = vset.pattern.permute.xlu0 16
    %498 = vperm.xlu0 %497, %v48
    %v499 = vpop.permute.xlu0 %498
    %501 = vset.pattern.permute.xlu0 16
    %502 = vperm.xlu0 %501, %v49
    %v503 = vpop.permute.xlu0 %502
    %v505 = vmul.f32 %v499, %v432
    %v506 = vmul.f32 %v503, %v432
    %509 = vrot.lane.b32.xlu0 %v505, 124
    %v510 = vpop.permute.xlu0 %509
    %511 = vrot.lane.b32.xlu0 %v506, 124
    %v512 = vpop.permute.xlu0 %511
    %v515 = vadd.f32 %v495, %v510
    %v516 = vadd.f32 %v496, %v512
    %517 = vset.pattern.permute.xlu0 17
    %518 = vperm.xlu0 %517, %v48
    %v519 = vpop.permute.xlu0 %518
    %521 = vset.pattern.permute.xlu0 17
    %522 = vperm.xlu0 %521, %v49
    %v523 = vpop.permute.xlu0 %522
    %v525 = vmul.f32 %v519, %v432
    %v526 = vmul.f32 %v523, %v432
    %529 = vrot.lane.b32.xlu0 %v525, 123
    %v530 = vpop.permute.xlu0 %529
    %531 = vrot.lane.b32.xlu0 %v526, 123
    %v532 = vpop.permute.xlu0 %531
    %v535 = vadd.f32 %v515, %v530
    %v536 = vadd.f32 %v516, %v532
    %537 = vset.pattern.permute.xlu0 18
    %538 = vperm.xlu0 %537, %v48
    %v539 = vpop.permute.xlu0 %538
    %541 = vset.pattern.permute.xlu0 18
    %542 = vperm.xlu0 %541, %v49
    %v543 = vpop.permute.xlu0 %542
    %v545 = vlaneseq
    %v546 = vshrl.u32 %v545, 7
    %v547 = vsub.s32 3, %v546
    %v548 = vrot.slane %v176, %v547
    %v549 = vmul.f32 %v539, %v548
    %v550 = vmul.f32 %v543, %v548
    %v551 = vadd.f32 %v535, %v549
    %v552 = vadd.f32 %v536, %v550
    %553 = vset.pattern.permute.xlu0 19
    %554 = vperm.xlu0 %553, %v48
    %v555 = vpop.permute.xlu0 %554
    %557 = vset.pattern.permute.xlu0 19
    %558 = vperm.xlu0 %557, %v49
    %v559 = vpop.permute.xlu0 %558
    %v561 = vmul.f32 %v555, %v548
    %v562 = vmul.f32 %v559, %v548
    %565 = vrot.lane.b32.xlu0 %v561, 127
    %v566 = vpop.permute.xlu0 %565
    %567 = vrot.lane.b32.xlu0 %v562, 127
    %v568 = vpop.permute.xlu0 %567
    %v571 = vadd.f32 %v551, %v566
    %v572 = vadd.f32 %v552, %v568
    %573 = vset.pattern.permute.xlu0 20
    %574 = vperm.xlu0 %573, %v48
    %v575 = vpop.permute.xlu0 %574
    %577 = vset.pattern.permute.xlu0 20
    %578 = vperm.xlu0 %577, %v49
    %v579 = vpop.permute.xlu0 %578
    %v581 = vmul.f32 %v575, %v548
    %v582 = vmul.f32 %v579, %v548
    %585 = vrot.lane.b32.xlu0 %v581, 126
    %v586 = vpop.permute.xlu0 %585
    %587 = vrot.lane.b32.xlu0 %v582, 126
    %v588 = vpop.permute.xlu0 %587
    %v591 = vadd.f32 %v571, %v586
    %v592 = vadd.f32 %v572, %v588
    %593 = vset.pattern.permute.xlu0 21
    %594 = vperm.xlu0 %593, %v48
    %v595 = vpop.permute.xlu0 %594
    %597 = vset.pattern.permute.xlu0 21
    %598 = vperm.xlu0 %597, %v49
    %v599 = vpop.permute.xlu0 %598
    %v601 = vmul.f32 %v595, %v548
    %v602 = vmul.f32 %v599, %v548
    %605 = vrot.lane.b32.xlu0 %v601, 125
    %v606 = vpop.permute.xlu0 %605
    %607 = vrot.lane.b32.xlu0 %v602, 125
    %v608 = vpop.permute.xlu0 %607
    %v611 = vadd.f32 %v591, %v606
    %v612 = vadd.f32 %v592, %v608
    %613 = vset.pattern.permute.xlu0 22
    %614 = vperm.xlu0 %613, %v48
    %v615 = vpop.permute.xlu0 %614
    %617 = vset.pattern.permute.xlu0 22
    %618 = vperm.xlu0 %617, %v49
    %v619 = vpop.permute.xlu0 %618
    %v621 = vmul.f32 %v615, %v548
    %v622 = vmul.f32 %v619, %v548
    %625 = vrot.lane.b32.xlu0 %v621, 124
    %v626 = vpop.permute.xlu0 %625
    %627 = vrot.lane.b32.xlu0 %v622, 124
    %v628 = vpop.permute.xlu0 %627
    %v631 = vadd.f32 %v611, %v626
    %v632 = vadd.f32 %v612, %v628
    %633 = vset.pattern.permute.xlu0 23
    %634 = vperm.xlu0 %633, %v48
    %v635 = vpop.permute.xlu0 %634
    %637 = vset.pattern.permute.xlu0 23
    %638 = vperm.xlu0 %637, %v49
    %v639 = vpop.permute.xlu0 %638
    %v641 = vmul.f32 %v635, %v548
    %v642 = vmul.f32 %v639, %v548
    %645 = vrot.lane.b32.xlu0 %v641, 123
    %v646 = vpop.permute.xlu0 %645
    %647 = vrot.lane.b32.xlu0 %v642, 123
    %v648 = vpop.permute.xlu0 %647
    %v651 = vadd.f32 %v631, %v646
    %v652 = vadd.f32 %v632, %v648
    %653 = vset.pattern.permute.xlu0 24
    %654 = vperm.xlu0 %653, %v48
    %v655 = vpop.permute.xlu0 %654
    %657 = vset.pattern.permute.xlu0 24
    %658 = vperm.xlu0 %657, %v49
    %v659 = vpop.permute.xlu0 %658
    %v661 = vlaneseq
    %v662 = vshrl.u32 %v661, 7
    %v663 = vsub.s32 4, %v662
    %v664 = vrot.slane %v176, %v663
    %v665 = vmul.f32 %v655, %v664
    %v666 = vmul.f32 %v659, %v664
    %v667 = vadd.f32 %v651, %v665
    %v668 = vadd.f32 %v652, %v666
    %669 = vset.pattern.permute.xlu0 25
    %670 = vperm.xlu0 %669, %v48
    %v671 = vpop.permute.xlu0 %670
    %673 = vset.pattern.permute.xlu0 25
    %674 = vperm.xlu0 %673, %v49
    %v675 = vpop.permute.xlu0 %674
    %v677 = vmul.f32 %v671, %v664
    %v678 = vmul.f32 %v675, %v664
    %681 = vrot.lane.b32.xlu0 %v677, 127
    %v682 = vpop.permute.xlu0 %681
    %683 = vrot.lane.b32.xlu0 %v678, 127
    %v684 = vpop.permute.xlu0 %683
    %v687 = vadd.f32 %v667, %v682
    %v688 = vadd.f32 %v668, %v684
    %689 = vset.pattern.permute.xlu0 26
    %690 = vperm.xlu0 %689, %v48
    %v691 = vpop.permute.xlu0 %690
    %693 = vset.pattern.permute.xlu0 26
    %694 = vperm.xlu0 %693, %v49
    %v695 = vpop.permute.xlu0 %694
    %v697 = vmul.f32 %v691, %v664
    %v698 = vmul.f32 %v695, %v664
    %701 = vrot.lane.b32.xlu0 %v697, 126
    %v702 = vpop.permute.xlu0 %701
    %703 = vrot.lane.b32.xlu0 %v698, 126
    %v704 = vpop.permute.xlu0 %703
    %v707 = vadd.f32 %v687, %v702
    %v708 = vadd.f32 %v688, %v704
    %709 = vset.pattern.permute.xlu0 27
    %710 = vperm.xlu0 %709, %v48
    %v711 = vpop.permute.xlu0 %710
    %713 = vset.pattern.permute.xlu0 27
    %714 = vperm.xlu0 %713, %v49
    %v715 = vpop.permute.xlu0 %714
    %v717 = vmul.f32 %v711, %v664
    %v718 = vmul.f32 %v715, %v664
    %721 = vrot.lane.b32.xlu0 %v717, 125
    %v722 = vpop.permute.xlu0 %721
    %723 = vrot.lane.b32.xlu0 %v718, 125
    %v724 = vpop.permute.xlu0 %723
    %v727 = vadd.f32 %v707, %v722
    %v728 = vadd.f32 %v708, %v724
    %729 = vset.pattern.permute.xlu0 28
    %730 = vperm.xlu0 %729, %v48
    %v731 = vpop.permute.xlu0 %730
    %733 = vset.pattern.permute.xlu0 28
    %734 = vperm.xlu0 %733, %v49
    %v735 = vpop.permute.xlu0 %734
    %v737 = vmul.f32 %v731, %v664
    %v738 = vmul.f32 %v735, %v664
    %741 = vrot.lane.b32.xlu0 %v737, 124
    %v742 = vpop.permute.xlu0 %741
    %743 = vrot.lane.b32.xlu0 %v738, 124
    %v744 = vpop.permute.xlu0 %743
    %v747 = vadd.f32 %v727, %v742
    %v748 = vadd.f32 %v728, %v744
    %749 = vset.pattern.permute.xlu0 29
    %750 = vperm.xlu0 %749, %v48
    %v751 = vpop.permute.xlu0 %750
    %753 = vset.pattern.permute.xlu0 29
    %754 = vperm.xlu0 %753, %v49
    %v755 = vpop.permute.xlu0 %754
    %v757 = vmul.f32 %v751, %v664
    %v758 = vmul.f32 %v755, %v664
    %761 = vrot.lane.b32.xlu0 %v757, 123
    %v762 = vpop.permute.xlu0 %761
    %763 = vrot.lane.b32.xlu0 %v758, 123
    %v764 = vpop.permute.xlu0 %763
    %v767 = vadd.f32 %v747, %v762
    %v768 = vadd.f32 %v748, %v764
    %769 = vset.pattern.permute.xlu0 30
    %770 = vperm.xlu0 %769, %v48
    %v771 = vpop.permute.xlu0 %770
    %773 = vset.pattern.permute.xlu0 30
    %774 = vperm.xlu0 %773, %v49
    %v775 = vpop.permute.xlu0 %774
    %v777 = vlaneseq
    %v778 = vshrl.u32 %v777, 7
    %v779 = vsub.s32 5, %v778
    %v780 = vrot.slane %v176, %v779
    %v781 = vmul.f32 %v771, %v780
    %v782 = vmul.f32 %v775, %v780
    %v783 = vadd.f32 %v767, %v781
    %v784 = vadd.f32 %v768, %v782
    %785 = vset.pattern.permute.xlu0 31
    %786 = vperm.xlu0 %785, %v48
    %v787 = vpop.permute.xlu0 %786
    %789 = vset.pattern.permute.xlu0 31
    %790 = vperm.xlu0 %789, %v49
    %v791 = vpop.permute.xlu0 %790
    %v793 = vmul.f32 %v787, %v780
    %v794 = vmul.f32 %v791, %v780
    %797 = vrot.lane.b32.xlu0 %v793, 127
    %v798 = vpop.permute.xlu0 %797
    %799 = vrot.lane.b32.xlu0 %v794, 127
    %v800 = vpop.permute.xlu0 %799
    %v803 = vadd.f32 %v783, %v798
    %v804 = vadd.f32 %v784, %v800
    %805 = vset.pattern.permute.xlu0 32
    %806 = vperm.xlu0 %805, %v48
    %v807 = vpop.permute.xlu0 %806
    %809 = vset.pattern.permute.xlu0 32
    %810 = vperm.xlu0 %809, %v49
    %v811 = vpop.permute.xlu0 %810
    %v813 = vmul.f32 %v807, %v780
    %v814 = vmul.f32 %v811, %v780
    %817 = vrot.lane.b32.xlu0 %v813, 126
    %v818 = vpop.permute.xlu0 %817
    %819 = vrot.lane.b32.xlu0 %v814, 126
    %v820 = vpop.permute.xlu0 %819
    %v823 = vadd.f32 %v803, %v818
    %v824 = vadd.f32 %v804, %v820
    %825 = vset.pattern.permute.xlu0 33
    %826 = vperm.xlu0 %825, %v48
    %v827 = vpop.permute.xlu0 %826
    %829 = vset.pattern.permute.xlu0 33
    %830 = vperm.xlu0 %829, %v49
    %v831 = vpop.permute.xlu0 %830
    %v833 = vmul.f32 %v827, %v780
    %v834 = vmul.f32 %v831, %v780
    %837 = vrot.lane.b32.xlu0 %v833, 125
    %v838 = vpop.permute.xlu0 %837
    %839 = vrot.lane.b32.xlu0 %v834, 125
    %v840 = vpop.permute.xlu0 %839
    %v843 = vadd.f32 %v823, %v838
    %v844 = vadd.f32 %v824, %v840
    %845 = vset.pattern.permute.xlu0 34
    %846 = vperm.xlu0 %845, %v48
    %v847 = vpop.permute.xlu0 %846
    %849 = vset.pattern.permute.xlu0 34
    %850 = vperm.xlu0 %849, %v49
    %v851 = vpop.permute.xlu0 %850
    %v853 = vmul.f32 %v847, %v780
    %v854 = vmul.f32 %v851, %v780
    %857 = vrot.lane.b32.xlu0 %v853, 124
    %v858 = vpop.permute.xlu0 %857
    %859 = vrot.lane.b32.xlu0 %v854, 124
    %v860 = vpop.permute.xlu0 %859
    %v863 = vadd.f32 %v843, %v858
    %v864 = vadd.f32 %v844, %v860
    %865 = vset.pattern.permute.xlu0 35
    %866 = vperm.xlu0 %865, %v48
    %v867 = vpop.permute.xlu0 %866
    %869 = vset.pattern.permute.xlu0 35
    %870 = vperm.xlu0 %869, %v49
    %v871 = vpop.permute.xlu0 %870
    %v873 = vmul.f32 %v867, %v780
    %v874 = vmul.f32 %v871, %v780
    %877 = vrot.lane.b32.xlu0 %v873, 123
    %v878 = vpop.permute.xlu0 %877
    %879 = vrot.lane.b32.xlu0 %v874, 123
    %v880 = vpop.permute.xlu0 %879
    %v883 = vadd.f32 %v863, %v878
    %v884 = vadd.f32 %v864, %v880
    %885 = vset.pattern.permute.xlu0 36
    %886 = vperm.xlu0 %885, %v48
    %v887 = vpop.permute.xlu0 %886
    %889 = vset.pattern.permute.xlu0 36
    %890 = vperm.xlu0 %889, %v49
    %v891 = vpop.permute.xlu0 %890
    %v893 = vlaneseq
    %v894 = vshrl.u32 %v893, 7
    %v895 = vsub.s32 6, %v894
    %v896 = vrot.slane %v176, %v895
    %v897 = vmul.f32 %v887, %v896
    %v898 = vmul.f32 %v891, %v896
    %v899 = vadd.f32 %v883, %v897
    %v900 = vadd.f32 %v884, %v898
    %901 = vset.pattern.permute.xlu0 37
    %902 = vperm.xlu0 %901, %v48
    %v903 = vpop.permute.xlu0 %902
    %905 = vset.pattern.permute.xlu0 37
    %906 = vperm.xlu0 %905, %v49
    %v907 = vpop.permute.xlu0 %906
    %v909 = vmul.f32 %v903, %v896
    %v910 = vmul.f32 %v907, %v896
    %913 = vrot.lane.b32.xlu0 %v909, 127
    %v914 = vpop.permute.xlu0 %913
    %915 = vrot.lane.b32.xlu0 %v910, 127
    %v916 = vpop.permute.xlu0 %915
    %v919 = vadd.f32 %v899, %v914
    %v920 = vadd.f32 %v900, %v916
    %921 = vset.pattern.permute.xlu0 38
    %922 = vperm.xlu0 %921, %v48
    %v923 = vpop.permute.xlu0 %922
    %925 = vset.pattern.permute.xlu0 38
    %926 = vperm.xlu0 %925, %v49
    %v927 = vpop.permute.xlu0 %926
    %v929 = vmul.f32 %v923, %v896
    %v930 = vmul.f32 %v927, %v896
    %933 = vrot.lane.b32.xlu0 %v929, 126
    %v934 = vpop.permute.xlu0 %933
    %935 = vrot.lane.b32.xlu0 %v930, 126
    %v936 = vpop.permute.xlu0 %935
    %v939 = vadd.f32 %v919, %v934
    %v940 = vadd.f32 %v920, %v936
    %941 = vset.pattern.permute.xlu0 39
    %942 = vperm.xlu0 %941, %v48
    %v943 = vpop.permute.xlu0 %942
    %945 = vset.pattern.permute.xlu0 39
    %946 = vperm.xlu0 %945, %v49
    %v947 = vpop.permute.xlu0 %946
    %v949 = vmul.f32 %v943, %v896
    %v950 = vmul.f32 %v947, %v896
    %953 = vrot.lane.b32.xlu0 %v949, 125
    %v954 = vpop.permute.xlu0 %953
    %955 = vrot.lane.b32.xlu0 %v950, 125
    %v956 = vpop.permute.xlu0 %955
    %v959 = vadd.f32 %v939, %v954
    %v960 = vadd.f32 %v940, %v956
    %961 = vset.pattern.permute.xlu0 40
    %962 = vperm.xlu0 %961, %v48
    %v963 = vpop.permute.xlu0 %962
    %965 = vset.pattern.permute.xlu0 40
    %966 = vperm.xlu0 %965, %v49
    %v967 = vpop.permute.xlu0 %966
    %v969 = vmul.f32 %v963, %v896
    %v970 = vmul.f32 %v967, %v896
    %973 = vrot.lane.b32.xlu0 %v969, 124
    %v974 = vpop.permute.xlu0 %973
    %975 = vrot.lane.b32.xlu0 %v970, 124
    %v976 = vpop.permute.xlu0 %975
    %v979 = vadd.f32 %v959, %v974
    %v980 = vadd.f32 %v960, %v976
    %981 = vset.pattern.permute.xlu0 41
    %982 = vperm.xlu0 %981, %v48
    %v983 = vpop.permute.xlu0 %982
    %985 = vset.pattern.permute.xlu0 41
    %986 = vperm.xlu0 %985, %v49
    %v987 = vpop.permute.xlu0 %986
    %v989 = vmul.f32 %v983, %v896
    %v990 = vmul.f32 %v987, %v896
    %993 = vrot.lane.b32.xlu0 %v989, 123
    %v994 = vpop.permute.xlu0 %993
    %995 = vrot.lane.b32.xlu0 %v990, 123
    %v996 = vpop.permute.xlu0 %995
    %v999 = vadd.f32 %v979, %v994
    %v1000 = vadd.f32 %v980, %v996
    %1001 = vset.pattern.permute.xlu0 42
    %1002 = vperm.xlu0 %1001, %v48
    %v1003 = vpop.permute.xlu0 %1002
    %1005 = vset.pattern.permute.xlu0 42
    %1006 = vperm.xlu0 %1005, %v49
    %v1007 = vpop.permute.xlu0 %1006
    %v1009 = vlaneseq
    %v1010 = vshrl.u32 %v1009, 7
    %v1011 = vsub.s32 7, %v1010
    %v1012 = vrot.slane %v176, %v1011
    %v1013 = vmul.f32 %v1003, %v1012
    %v1014 = vmul.f32 %v1007, %v1012
    %v1015 = vadd.f32 %v999, %v1013
    %v1016 = vadd.f32 %v1000, %v1014
    %1017 = vset.pattern.permute.xlu0 43
    %1018 = vperm.xlu0 %1017, %v48
    %v1019 = vpop.permute.xlu0 %1018
    %1021 = vset.pattern.permute.xlu0 43
    %1022 = vperm.xlu0 %1021, %v49
    %v1023 = vpop.permute.xlu0 %1022
    %v1025 = vmul.f32 %v1019, %v1012
    %v1026 = vmul.f32 %v1023, %v1012
    %1029 = vrot.lane.b32.xlu0 %v1025, 127
    %v1030 = vpop.permute.xlu0 %1029
    %1031 = vrot.lane.b32.xlu0 %v1026, 127
    %v1032 = vpop.permute.xlu0 %1031
    %v1035 = vadd.f32 %v1015, %v1030
    %v1036 = vadd.f32 %v1016, %v1032
    %1037 = vset.pattern.permute.xlu0 44
    %1038 = vperm.xlu0 %1037, %v48
    %v1039 = vpop.permute.xlu0 %1038
    %1041 = vset.pattern.permute.xlu0 44
    %1042 = vperm.xlu0 %1041, %v49
    %v1043 = vpop.permute.xlu0 %1042
    %v1045 = vmul.f32 %v1039, %v1012
    %v1046 = vmul.f32 %v1043, %v1012
    %1049 = vrot.lane.b32.xlu0 %v1045, 126
    %v1050 = vpop.permute.xlu0 %1049
    %1051 = vrot.lane.b32.xlu0 %v1046, 126
    %v1052 = vpop.permute.xlu0 %1051
    %v1055 = vadd.f32 %v1035, %v1050
    %v1056 = vadd.f32 %v1036, %v1052
    %1057 = vset.pattern.permute.xlu0 45
    %1058 = vperm.xlu0 %1057, %v48
    %v1059 = vpop.permute.xlu0 %1058
    %1061 = vset.pattern.permute.xlu0 45
    %1062 = vperm.xlu0 %1061, %v49
    %v1063 = vpop.permute.xlu0 %1062
    %v1065 = vmul.f32 %v1059, %v1012
    %v1066 = vmul.f32 %v1063, %v1012
    %1069 = vrot.lane.b32.xlu0 %v1065, 125
    %v1070 = vpop.permute.xlu0 %1069
    %1071 = vrot.lane.b32.xlu0 %v1066, 125
    %v1072 = vpop.permute.xlu0 %1071
    %v1075 = vadd.f32 %v1055, %v1070
    %v1076 = vadd.f32 %v1056, %v1072
    %1077 = vset.pattern.permute.xlu0 46
    %1078 = vperm.xlu0 %1077, %v48
    %v1079 = vpop.permute.xlu0 %1078
    %1081 = vset.pattern.permute.xlu0 46
    %1082 = vperm.xlu0 %1081, %v49
    %v1083 = vpop.permute.xlu0 %1082
    %v1085 = vmul.f32 %v1079, %v1012
    %v1086 = vmul.f32 %v1083, %v1012
    %1089 = vrot.lane.b32.xlu0 %v1085, 124
    %v1090 = vpop.permute.xlu0 %1089
    %1091 = vrot.lane.b32.xlu0 %v1086, 124
    %v1092 = vpop.permute.xlu0 %1091
    %v1095 = vadd.f32 %v1075, %v1090
    %v1096 = vadd.f32 %v1076, %v1092
    %1097 = vset.pattern.permute.xlu0 47
    %1098 = vperm.xlu0 %1097, %v48
    %v1099 = vpop.permute.xlu0 %1098
    %1101 = vset.pattern.permute.xlu0 47
    %1102 = vperm.xlu0 %1101, %v49
    %v1103 = vpop.permute.xlu0 %1102
    %v1105 = vmul.f32 %v1099, %v1012
    %v1106 = vmul.f32 %v1103, %v1012
    %1109 = vrot.lane.b32.xlu0 %v1105, 123
    %v1110 = vpop.permute.xlu0 %1109
    %1111 = vrot.lane.b32.xlu0 %v1106, 123
    %v1112 = vpop.permute.xlu0 %1111
    %v1115 = vadd.f32 %v1095, %v1110
    %v1116 = vadd.f32 %v1096, %v1112
    %v1117 = vmax.f32 %v1115, 0.0
    %v1118 = vmax.f32 %v1116, 0.0
    %1121 = vrot.lane.b32.xlu0 %v1117, 127
    %v1122 = vpop.permute.xlu0 %1121
    %1123 = vrot.lane.b32.xlu0 %v1118, 127
    %v1124 = vpop.permute.xlu0 %1123
    %v1127 = vmax.f32 %v1117, %v1122
    %v1128 = vmax.f32 %v1118, %v1124
    %1129 = vrot.lane.b32.xlu0 %v1117, 126
    %v1130 = vpop.permute.xlu0 %1129
    %1131 = vrot.lane.b32.xlu0 %v1118, 126
    %v1132 = vpop.permute.xlu0 %1131
    %v1135 = vmax.f32 %v1127, %v1130
    %v1136 = vmax.f32 %v1128, %v1132
    %1137 = vrot.lane.b32.xlu0 %v1117, 125
    %v1138 = vpop.permute.xlu0 %1137
    %1139 = vrot.lane.b32.xlu0 %v1118, 125
    %v1140 = vpop.permute.xlu0 %1139
    %v1143 = vmax.f32 %v1135, %v1138
    %v1144 = vmax.f32 %v1136, %v1140
    %1145 = vrot.lane.b32.xlu0 %v1117, 124
    %v1146 = vpop.permute.xlu0 %1145
    %1147 = vrot.lane.b32.xlu0 %v1118, 124
    %v1148 = vpop.permute.xlu0 %1147
    %v1151 = vmax.f32 %v1143, %v1146
    %v1152 = vmax.f32 %v1144, %v1148
    %vm1153 = vcmask 180224
    %1154 = vst.msk [vmem:[#allocation2] sm:$0x1] %vm1153, %v1151
    %v1157 = vunpack.c.l.s4 1983009808
    %v1158 = vunpack.c.0.s8 %v1157
    %v1159 = vlaneseq
    %v1160 = vshrl.u32 %v1159, 7
    %v1161 = vsub.s32 %v1158, %v1160
    %v1162 = vrot.slane %v1151, %v1161
    %v1163 = vrot.slane %v1162, 7
    %v1164 = vrot.slane %v1163, 2
    %1165 = vrot.lane.b32.xlu0 %v1164, 23
    %v1166 = vpop.permute.xlu0 %1165
    %vm1168 = vcmask 368824
    %1169 = vst.msk [vmem:[#allocation2] sm:$0x1] %vm1168, %v1166
    %v1170 = vcombine.high %v1162, %v1162
    %1171 = vrot.lane.b32.xlu0 %v1170, 46
    %v1172 = vpop.permute.xlu0 %1171
    %vm1174 = vcmask 557424
    %1175 = vst.msk [vmem:[#allocation2] sm:$0x1] %vm1174, %v1172
    %v1176 = vrot.slane %v1170, 7
    %v1177 = vrot.slane %v1176, 2
    %1178 = vrot.lane.b32.xlu0 %v1177, 69
    %v1179 = vpop.permute.xlu0 %1178
    %vm1181 = vcmask 746024
    %1182 = vst.msk [vmem:[#allocation2] sm:$0x1] %vm1181, %v1179
    %v1183 = vcombine.high %v1151, %v1151
    %v1185 = vunpack.c.l.s4 1983009808
    %v1186 = vunpack.c.0.s8 %v1185
    %v1187 = vlaneseq
    %v1188 = vshrl.u32 %v1187, 7
    %v1189 = vsub.s32 %v1186, %v1188
    %v1190 = vrot.slane %v1183, %v1189
    %1191 = vrot.lane.b32.xlu0 %v1190, 92
    %v1192 = vpop.permute.xlu0 %1191
    %vm1194 = vcmask 934624
    %1195 = vst.msk [vmem:[#allocation2] sm:$0x1] %vm1194, %v1192
    %v1196 = vrot.slane %v1190, 7
    %v1197 = vrot.slane %v1196, 2
    %1198 = vrot.lane.b32.xlu0 %v1197, 115
    %v1199 = vpop.permute.xlu0 %1198
    %v1200 = vrot.slane %v1199, 6
    %vm1201 = vcmask 941056
    %v1202 = vsel %vm1201, %v1200, %v1199
    %vm1204 = vcmask 1041304
    %vm1205 = vcmask 75778
    %vm1206 = vmor %vm1205, %vm1204
    %1207 = vst.msk [vmem:[#allocation2] sm:$0x5] %vm1206, %v1202
    %v1208 = vcombine.high %v1190, %v1190
    %1209 = vrot.lane.b32.xlu0 %v1208, 10
    %v1210 = vpop.permute.xlu0 %1209
    %vm1212 = vcmask 262224
    %1213 = vst.msk [vmem:[#allocation2 + $0x2] sm:$0x1] %vm1212, %v1210
    %v1214 = vrot.slane %v1208, 7
    %v1215 = vrot.slane %v1214, 2
    %1216 = vrot.lane.b32.xlu0 %v1215, 33
    %v1217 = vpop.permute.xlu0 %1216
    %vm1219 = vcmask 450824
    %1220 = vst.msk [vmem:[#allocation2 + $0x2] sm:$0x1] %vm1219, %v1217
    %v1223 = vunpack.c.l.s4 1983009808
    %v1224 = vunpack.c.0.s8 %v1223
    %v1225 = vlaneseq
    %v1226 = vshrl.u32 %v1225, 7
    %v1227 = vsub.s32 %v1224, %v1226
    %v1228 = vrot.slane %v1152, %v1227
    %1229 = vrot.lane.b32.xlu0 %v1228, 56
    %v1230 = vpop.permute.xlu0 %1229
    %vm1232 = vcmask 639424
    %1233 = vst.msk [vmem:[#allocation2 + $0x2] sm:$0x1] %vm1232, %v1230
    %v1234 = vrot.slane %v1228, 7
    %v1235 = vrot.slane %v1234, 2
    %1236 = vrot.lane.b32.xlu0 %v1235, 79
    %v1237 = vpop.permute.xlu0 %1236
    %vm1239 = vcmask 828024
    %1240 = vst.msk [vmem:[#allocation2 + $0x2] sm:$0x1] %vm1239, %v1237
    %v1241 = vcombine.high %v1228, %v1228
    %1242 = vrot.lane.b32.xlu0 %v1241, 102
    %v1243 = vpop.permute.xlu0 %1242
    %vm1245 = vcmask 1016624
    %1246 = vst.msk [vmem:[#allocation2 + $0x2] sm:$0x1] %vm1245, %v1243
    %v1247 = vrot.slane %v1241, 7
    %v1248 = vrot.slane %v1247, 2
    %1249 = vrot.lane.b32.xlu0 %v1248, 125
    %v1250 = vpop.permute.xlu0 %1249
    %v1251 = vrot.slane %v1250, 6
    %vm1252 = vcmask 1022976
    %v1253 = vsel %vm1252, %v1251, %v1250
    %vm1255 = vcmask 1041384
    %vm1256 = vcmask 157698
    %vm1257 = vmor %vm1256, %vm1255
    %1258 = vst.msk [vmem:[#allocation2 + $0x2] sm:$0x5] %vm1257, %v1253
    %v1259 = vcombine.high %v1152, %v1152
    %v1261 = vunpack.c.l.s4 1983009808
    %v1262 = vunpack.c.0.s8 %v1261
    %v1263 = vlaneseq
    %v1264 = vshrl.u32 %v1263, 7
    %v1265 = vsub.s32 %v1262, %v1264
    %v1266 = vrot.slane %v1259, %v1265
    %1267 = vrot.lane.b32.xlu0 %v1266, 20
    %v1268 = vpop.permute.xlu0 %1267
    %vm1270 = vcmask 344224
    %1271 = vst.msk [vmem:[#allocation2 + $0x4] sm:$0x1] %vm1270, %v1268
    %v1272 = vrot.slane %v1266, 7
    %v1273 = vrot.slane %v1272, 2
    %1274 = vrot.lane.b32.xlu0 %v1273, 43
    %v1275 = vpop.permute.xlu0 %1274
    %vm1277 = vcmask 532824
    %1278 = vst.msk [vmem:[#allocation2 + $0x4] sm:$0x1] %vm1277, %v1275
    %v1279 = vcombine.high %v1266, %v1266
    %1280 = vrot.lane.b32.xlu0 %v1279, 66
    %v1281 = vpop.permute.xlu0 %1280
    %vm1283 = vcmask 721424
    %1284 = vst.msk [vmem:[#allocation2 + $0x4] sm:$0x1] %vm1283, %v1281
    %v1285 = vrot.slane %v1279, 7
    %v1286 = vrot.slane %v1285, 2
    %1287 = vrot.lane.b32.xlu0 %v1286, 89
    %v1288 = vpop.permute.xlu0 %1287
    %vm1290 = vcmask 910024
    %1291 = vst.msk [vmem:[#allocation2 + $0x4] sm:$0x1] %vm1290, %v1288
    %s1292 = scalar_lea.vmem %s0, 2
    %v1293 = vld [vmem:[%s1292] sm:$0x3]
    %v1294 = vlaneseq
    %v1295 = vshrl.u32 %v1294, 7
    %v1296 = vsub.s32 0, %v1295
    %v1297 = vrot.slane %v1293, %v1296
    %v1298 = vmul.f32 %v61, %v1297
    %v1299 = vadd.f32 %v56, %v1298
    %v1300 = vmul.f32 %v71, %v1297
    %1302 = vrot.lane.b32.xlu0 %v1300, 127
    %v1303 = vpop.permute.xlu0 %1302
    %v1305 = vadd.f32 %v1299, %v1303
    %v1306 = vmul.f32 %v81, %v1297
    %1308 = vrot.lane.b32.xlu0 %v1306, 126
    %v1309 = vpop.permute.xlu0 %1308
    %v1311 = vadd.f32 %v1305, %v1309
    %v1312 = vmul.f32 %v91, %v1297
    %1314 = vrot.lane.b32.xlu0 %v1312, 125
    %v1315 = vpop.permute.xlu0 %1314
    %v1317 = vadd.f32 %v1311, %v1315
    %v1318 = vmul.f32 %v101, %v1297
    %1320 = vrot.lane.b32.xlu0 %v1318, 124
    %v1321 = vpop.permute.xlu0 %1320
    %v1323 = vadd.f32 %v1317, %v1321
    %v1324 = vlaneseq
    %v1325 = vshrl.u32 %v1324, 7
    %v1326 = vsub.s32 1, %v1325
    %v1327 = vrot.slane %v1293, %v1326
    %v1328 = vmul.f32 %v111, %v1327
    %v1329 = vadd.f32 %v1323, %v1328
    %v1330 = vmul.f32 %v121, %v1327
    %1332 = vrot.lane.b32.xlu0 %v1330, 127
    %v1333 = vpop.permute.xlu0 %1332
    %v1335 = vadd.f32 %v1329, %v1333
    %v1336 = vmul.f32 %v131, %v1327
    %1338 = vrot.lane.b32.xlu0 %v1336, 126
    %v1339 = vpop.permute.xlu0 %1338
    %v1341 = vadd.f32 %v1335, %v1339
    %v1342 = vmul.f32 %v141, %v1327
    %1344 = vrot.lane.b32.xlu0 %v1342, 125
    %v1345 = vpop.permute.xlu0 %1344
    %v1347 = vadd.f32 %v1341, %v1345
    %v1348 = vmul.f32 %v151, %v1327
    %1350 = vrot.lane.b32.xlu0 %v1348, 124
    %v1351 = vpop.permute.xlu0 %1350
    %v1353 = vadd.f32 %v1347, %v1351
    %v1354 = vmax.f32 %v1353, 0.0
    %1356 = vrot.lane.b32.xlu0 %v1354, 127
    %v1357 = vpop.permute.xlu0 %1356
    %v1359 = vmax.f32 %v1354, %v1357
    %1360 = vrot.lane.b32.xlu0 %v1354, 126
    %v1361 = vpop.permute.xlu0 %1360
    %v1363 = vmax.f32 %v1359, %v1361
    %1364 = vrot.lane.b32.xlu0 %v1354, 125
    %v1365 = vpop.permute.xlu0 %1364
    %v1367 = vmax.f32 %v1363, %v1365
    %1368 = vrot.lane.b32.xlu0 %v1354, 124
    %v1369 = vpop.permute.xlu0 %1368
    %v1371 = vmax.f32 %v1367, %v1369
    %v1372 = vlaneseq
    %v1373 = vshrl.u32 %v1372, 7
    %v1374 = vsub.s32 0, %v1373
    %v1375 = vrot.slane %v1371, %v1374
    %v1376 = vmul.f32 %v190, %v1375
    %v1377 = vmul.f32 %v195, %v1375
    %v1378 = vadd.f32 %v180, %v1376
    %v1379 = vadd.f32 %v185, %v1377
    %v1380 = vmul.f32 %v207, %v1375
    %v1381 = vmul.f32 %v211, %v1375
    %1384 = vrot.lane.b32.xlu0 %v1380, 127
    %v1385 = vpop.permute.xlu0 %1384
    %1386 = vrot.lane.b32.xlu0 %v1381, 127
    %v1387 = vpop.permute.xlu0 %1386
    %v1390 = vadd.f32 %v1378, %v1385
    %v1391 = vadd.f32 %v1379, %v1387
    %v1392 = vmul.f32 %v227, %v1375
    %v1393 = vmul.f32 %v231, %v1375
    %1396 = vrot.lane.b32.xlu0 %v1392, 126
    %v1397 = vpop.permute.xlu0 %1396
    %1398 = vrot.lane.b32.xlu0 %v1393, 126
    %v1399 = vpop.permute.xlu0 %1398
    %v1402 = vadd.f32 %v1390, %v1397
    %v1403 = vadd.f32 %v1391, %v1399
    %v1404 = vmul.f32 %v247, %v1375
    %v1405 = vmul.f32 %v251, %v1375
    %1408 = vrot.lane.b32.xlu0 %v1404, 125
    %v1409 = vpop.permute.xlu0 %1408
    %1410 = vrot.lane.b32.xlu0 %v1405, 125
    %v1411 = vpop.permute.xlu0 %1410
    %v1414 = vadd.f32 %v1402, %v1409
    %v1415 = vadd.f32 %v1403, %v1411
    %v1416 = vmul.f32 %v267, %v1375
    %v1417 = vmul.f32 %v271, %v1375
    %1420 = vrot.lane.b32.xlu0 %v1416, 124
    %v1421 = vpop.permute.xlu0 %1420
    %1422 = vrot.lane.b32.xlu0 %v1417, 124
    %v1423 = vpop.permute.xlu0 %1422
    %v1426 = vadd.f32 %v1414, %v1421
    %v1427 = vadd.f32 %v1415, %v1423
    %v1428 = vmul.f32 %v287, %v1375
    %v1429 = vmul.f32 %v291, %v1375
    %1432 = vrot.lane.b32.xlu0 %v1428, 123
    %v1433 = vpop.permute.xlu0 %1432
    %1434 = vrot.lane.b32.xlu0 %v1429, 123
    %v1435 = vpop.permute.xlu0 %1434
    %v1438 = vadd.f32 %v1426, %v1433
    %v1439 = vadd.f32 %v1427, %v1435
    %v1440 = vlaneseq
    %v1441 = vshrl.u32 %v1440, 7
    %v1442 = vsub.s32 1, %v1441
    %v1443 = vrot.slane %v1371, %v1442
    %v1444 = vmul.f32 %v307, %v1443
    %v1445 = vmul.f32 %v311, %v1443
    %v1446 = vadd.f32 %v1438, %v1444
    %v1447 = vadd.f32 %v1439, %v1445
    %v1448 = vmul.f32 %v323, %v1443
    %v1449 = vmul.f32 %v327, %v1443
    %1452 = vrot.lane.b32.xlu0 %v1448, 127
    %v1453 = vpop.permute.xlu0 %1452
    %1454 = vrot.lane.b32.xlu0 %v1449, 127
    %v1455 = vpop.permute.xlu0 %1454
    %v1458 = vadd.f32 %v1446, %v1453
    %v1459 = vadd.f32 %v1447, %v1455
    %v1460 = vmul.f32 %v343, %v1443
    %v1461 = vmul.f32 %v347, %v1443
    %1464 = vrot.lane.b32.xlu0 %v1460, 126
    %v1465 = vpop.permute.xlu0 %1464
    %1466 = vrot.lane.b32.xlu0 %v1461, 126
    %v1467 = vpop.permute.xlu0 %1466
    %v1470 = vadd.f32 %v1458, %v1465
    %v1471 = vadd.f32 %v1459, %v1467
    %v1472 = vmul.f32 %v363, %v1443
    %v1473 = vmul.f32 %v367, %v1443
    %1476 = vrot.lane.b32.xlu0 %v1472, 125
    %v1477 = vpop.permute.xlu0 %1476
    %1478 = vrot.lane.b32.xlu0 %v1473, 125
    %v1479 = vpop.permute.xlu0 %1478
    %v1482 = vadd.f32 %v1470, %v1477
    %v1483 = vadd.f32 %v1471, %v1479
    %v1484 = vmul.f32 %v383, %v1443
    %v1485 = vmul.f32 %v387, %v1443
    %1488 = vrot.lane.b32.xlu0 %v1484, 124
    %v1489 = vpop.permute.xlu0 %1488
    %1490 = vrot.lane.b32.xlu0 %v1485, 124
    %v1491 = vpop.permute.xlu0 %1490
    %v1494 = vadd.f32 %v1482, %v1489
    %v1495 = vadd.f32 %v1483, %v1491
    %v1496 = vmul.f32 %v403, %v1443
    %v1497 = vmul.f32 %v407, %v1443
    %1500 = vrot.lane.b32.xlu0 %v1496, 123
    %v1501 = vpop.permute.xlu0 %1500
    %1502 = vrot.lane.b32.xlu0 %v1497, 123
    %v1503 = vpop.permute.xlu0 %1502
    %v1506 = vadd.f32 %v1494, %v1501
    %v1507 = vadd.f32 %v1495, %v1503
    %v1508 = vlaneseq
    %v1509 = vshrl.u32 %v1508, 7
    %v1510 = vsub.s32 2, %v1509
    %v1511 = vrot.slane %v1371, %v1510
    %v1512 = vmul.f32 %v423, %v1511
    %v1513 = vmul.f32 %v427, %v1511
    %v1514 = vadd.f32 %v1506, %v1512
    %v1515 = vadd.f32 %v1507, %v1513
    %v1516 = vmul.f32 %v439, %v1511
    %v1517 = vmul.f32 %v443, %v1511
    %1520 = vrot.lane.b32.xlu0 %v1516, 127
    %v1521 = vpop.permute.xlu0 %1520
    %1522 = vrot.lane.b32.xlu0 %v1517, 127
    %v1523 = vpop.permute.xlu0 %1522
    %v1526 = vadd.f32 %v1514, %v1521
    %v1527 = vadd.f32 %v1515, %v1523
    %v1528 = vmul.f32 %v459, %v1511
    %v1529 = vmul.f32 %v463, %v1511
    %1532 = vrot.lane.b32.xlu0 %v1528, 126
    %v1533 = vpop.permute.xlu0 %1532
    %1534 = vrot.lane.b32.xlu0 %v1529, 126
    %v1535 = vpop.permute.xlu0 %1534
    %v1538 = vadd.f32 %v1526, %v1533
    %v1539 = vadd.f32 %v1527, %v1535
    %v1540 = vmul.f32 %v479, %v1511
    %v1541 = vmul.f32 %v483, %v1511
    %1544 = vrot.lane.b32.xlu0 %v1540, 125
    %v1545 = vpop.permute.xlu0 %1544
    %1546 = vrot.lane.b32.xlu0 %v1541, 125
    %v1547 = vpop.permute.xlu0 %1546
    %v1550 = vadd.f32 %v1538, %v1545
    %v1551 = vadd.f32 %v1539, %v1547
    %v1552 = vmul.f32 %v499, %v1511
    %v1553 = vmul.f32 %v503, %v1511
    %1556 = vrot.lane.b32.xlu0 %v1552, 124
    %v1557 = vpop.permute.xlu0 %1556
    %1558 = vrot.lane.b32.xlu0 %v1553, 124
    %v1559 = vpop.permute.xlu0 %1558
    %v1562 = vadd.f32 %v1550, %v1557
    %v1563 = vadd.f32 %v1551, %v1559
    %v1564 = vmul.f32 %v519, %v1511
    %v1565 = vmul.f32 %v523, %v1511
    %1568 = vrot.lane.b32.xlu0 %v1564, 123
    %v1569 = vpop.permute.xlu0 %1568
    %1570 = vrot.lane.b32.xlu0 %v1565, 123
    %v1571 = vpop.permute.xlu0 %1570
    %v1574 = vadd.f32 %v1562, %v1569
    %v1575 = vadd.f32 %v1563, %v1571
    %v1576 = vlaneseq
    %v1577 = vshrl.u32 %v1576, 7
    %v1578 = vsub.s32 3, %v1577
    %v1579 = vrot.slane %v1371, %v1578
    %v1580 = vmul.f32 %v539, %v1579
    %v1581 = vmul.f32 %v543, %v1579
    %v1582 = vadd.f32 %v1574, %v1580
    %v1583 = vadd.f32 %v1575, %v1581
    %v1584 = vmul.f32 %v555, %v1579
    %v1585 = vmul.f32 %v559, %v1579
    %1588 = vrot.lane.b32.xlu0 %v1584, 127
    %v1589 = vpop.permute.xlu0 %1588
    %1590 = vrot.lane.b32.xlu0 %v1585, 127
    %v1591 = vpop.permute.xlu0 %1590
    %v1594 = vadd.f32 %v1582, %v1589
    %v1595 = vadd.f32 %v1583, %v1591
    %v1596 = vmul.f32 %v575, %v1579
    %v1597 = vmul.f32 %v579, %v1579
    %1600 = vrot.lane.b32.xlu0 %v1596, 126
    %v1601 = vpop.permute.xlu0 %1600
    %1602 = vrot.lane.b32.xlu0 %v1597, 126
    %v1603 = vpop.permute.xlu0 %1602
    %v1606 = vadd.f32 %v1594, %v1601
    %v1607 = vadd.f32 %v1595, %v1603
    %v1608 = vmul.f32 %v595, %v1579
    %v1609 = vmul.f32 %v599, %v1579
    %1612 = vrot.lane.b32.xlu0 %v1608, 125
    %v1613 = vpop.permute.xlu0 %1612
    %1614 = vrot.lane.b32.xlu0 %v1609, 125
    %v1615 = vpop.permute.xlu0 %1614
    %v1618 = vadd.f32 %v1606, %v1613
    %v1619 = vadd.f32 %v1607, %v1615
    %v1620 = vmul.f32 %v615, %v1579
    %v1621 = vmul.f32 %v619, %v1579
    %1624 = vrot.lane.b32.xlu0 %v1620, 124
    %v1625 = vpop.permute.xlu0 %1624
    %1626 = vrot.lane.b32.xlu0 %v1621, 124
    %v1627 = vpop.permute.xlu0 %1626
    %v1630 = vadd.f32 %v1618, %v1625
    %v1631 = vadd.f32 %v1619, %v1627
    %v1632 = vmul.f32 %v635, %v1579
    %v1633 = vmul.f32 %v639, %v1579
    %1636 = vrot.lane.b32.xlu0 %v1632, 123
    %v1637 = vpop.permute.xlu0 %1636
    %1638 = vrot.lane.b32.xlu0 %v1633, 123
    %v1639 = vpop.permute.xlu0 %1638
    %v1642 = vadd.f32 %v1630, %v1637
    %v1643 = vadd.f32 %v1631, %v1639
    %v1644 = vlaneseq
    %v1645 = vshrl.u32 %v1644, 7
    %v1646 = vsub.s32 4, %v1645
    %v1647 = vrot.slane %v1371, %v1646
    %v1648 = vmul.f32 %v655, %v1647
    %v1649 = vmul.f32 %v659, %v1647
    %v1650 = vadd.f32 %v1642, %v1648
    %v1651 = vadd.f32 %v1643, %v1649
    %v1652 = vmul.f32 %v671, %v1647
    %v1653 = vmul.f32 %v675, %v1647
    %1656 = vrot.lane.b32.xlu0 %v1652, 127
    %v1657 = vpop.permute.xlu0 %1656
    %1658 = vrot.lane.b32.xlu0 %v1653, 127
    %v1659 = vpop.permute.xlu0 %1658
    %v1662 = vadd.f32 %v1650, %v1657
    %v1663 = vadd.f32 %v1651, %v1659
    %v1664 = vmul.f32 %v691, %v1647
    %v1665 = vmul.f32 %v695, %v1647
    %1668 = vrot.lane.b32.xlu0 %v1664, 126
    %v1669 = vpop.permute.xlu0 %1668
    %1670 = vrot.lane.b32.xlu0 %v1665, 126
    %v1671 = vpop.permute.xlu0 %1670
    %v1674 = vadd.f32 %v1662, %v1669
    %v1675 = vadd.f32 %v1663, %v1671
    %v1676 = vmul.f32 %v711, %v1647
    %v1677 = vmul.f32 %v715, %v1647
    %1680 = vrot.lane.b32.xlu0 %v1676, 125
    %v1681 = vpop.permute.xlu0 %1680
    %1682 = vrot.lane.b32.xlu0 %v1677, 125
    %v1683 = vpop.permute.xlu0 %1682
    %v1686 = vadd.f32 %v1674, %v1681
    %v1687 = vadd.f32 %v1675, %v1683
    %v1688 = vmul.f32 %v731, %v1647
    %v1689 = vmul.f32 %v735, %v1647
    %1692 = vrot.lane.b32.xlu0 %v1688, 124
    %v1693 = vpop.permute.xlu0 %1692
    %1694 = vrot.lane.b32.xlu0 %v1689, 124
    %v1695 = vpop.permute.xlu0 %1694
    %v1698 = vadd.f32 %v1686, %v1693
    %v1699 = vadd.f32 %v1687, %v1695
    %v1700 = vmul.f32 %v751, %v1647
    %v1701 = vmul.f32 %v755, %v1647
    %1704 = vrot.lane.b32.xlu0 %v1700, 123
    %v1705 = vpop.permute.xlu0 %1704
    %1706 = vrot.lane.b32.xlu0 %v1701, 123
    %v1707 = vpop.permute.xlu0 %1706
    %v1710 = vadd.f32 %v1698, %v1705
    %v1711 = vadd.f32 %v1699, %v1707
    %v1712 = vlaneseq
    %v1713 = vshrl.u32 %v1712, 7
    %v1714 = vsub.s32 5, %v1713
    %v1715 = vrot.slane %v1371, %v1714
    %v1716 = vmul.f32 %v771, %v1715
    %v1717 = vmul.f32 %v775, %v1715
    %v1718 = vadd.f32 %v1710, %v1716
    %v1719 = vadd.f32 %v1711, %v1717
    %v1720 = vmul.f32 %v787, %v1715
    %v1721 = vmul.f32 %v791, %v1715
    %1724 = vrot.lane.b32.xlu0 %v1720, 127
    %v1725 = vpop.permute.xlu0 %1724
    %1726 = vrot.lane.b32.xlu0 %v1721, 127
    %v1727 = vpop.permute.xlu0 %1726
    %v1730 = vadd.f32 %v1718, %v1725
    %v1731 = vadd.f32 %v1719, %v1727
    %v1732 = vmul.f32 %v807, %v1715
    %v1733 = vmul.f32 %v811, %v1715
    %1736 = vrot.lane.b32.xlu0 %v1732, 126
    %v1737 = vpop.permute.xlu0 %1736
    %1738 = vrot.lane.b32.xlu0 %v1733, 126
    %v1739 = vpop.permute.xlu0 %1738
    %v1742 = vadd.f32 %v1730, %v1737
    %v1743 = vadd.f32 %v1731, %v1739
    %v1744 = vmul.f32 %v827, %v1715
    %v1745 = vmul.f32 %v831, %v1715
    %1748 = vrot.lane.b32.xlu0 %v1744, 125
    %v1749 = vpop.permute.xlu0 %1748
    %1750 = vrot.lane.b32.xlu0 %v1745, 125
    %v1751 = vpop.permute.xlu0 %1750
    %v1754 = vadd.f32 %v1742, %v1749
    %v1755 = vadd.f32 %v1743, %v1751
    %v1756 = vmul.f32 %v847, %v1715
    %v1757 = vmul.f32 %v851, %v1715
    %1760 = vrot.lane.b32.xlu0 %v1756, 124
    %v1761 = vpop.permute.xlu0 %1760
    %1762 = vrot.lane.b32.xlu0 %v1757, 124
    %v1763 = vpop.permute.xlu0 %1762
    %v1766 = vadd.f32 %v1754, %v1761
    %v1767 = vadd.f32 %v1755, %v1763
    %v1768 = vmul.f32 %v867, %v1715
    %v1769 = vmul.f32 %v871, %v1715
    %1772 = vrot.lane.b32.xlu0 %v1768, 123
    %v1773 = vpop.permute.xlu0 %1772
    %1774 = vrot.lane.b32.xlu0 %v1769, 123
    %v1775 = vpop.permute.xlu0 %1774
    %v1778 = vadd.f32 %v1766, %v1773
    %v1779 = vadd.f32 %v1767, %v1775
    %v1780 = vlaneseq
    %v1781 = vshrl.u32 %v1780, 7
    %v1782 = vsub.s32 6, %v1781
    %v1783 = vrot.slane %v1371, %v1782
    %v1784 = vmul.f32 %v887, %v1783
    %v1785 = vmul.f32 %v891, %v1783
    %v1786 = vadd.f32 %v1778, %v1784
    %v1787 = vadd.f32 %v1779, %v1785
    %v1788 = vmul.f32 %v903, %v1783
    %v1789 = vmul.f32 %v907, %v1783
    %1792 = vrot.lane.b32.xlu0 %v1788, 127
    %v1793 = vpop.permute.xlu0 %1792
    %1794 = vrot.lane.b32.xlu0 %v1789, 127
    %v1795 = vpop.permute.xlu0 %1794
    %v1798 = vadd.f32 %v1786, %v1793
    %v1799 = vadd.f32 %v1787, %v1795
    %v1800 = vmul.f32 %v923, %v1783
    %v1801 = vmul.f32 %v927, %v1783
    %1804 = vrot.lane.b32.xlu0 %v1800, 126
    %v1805 = vpop.permute.xlu0 %1804
    %1806 = vrot.lane.b32.xlu0 %v1801, 126
    %v1807 = vpop.permute.xlu0 %1806
    %v1810 = vadd.f32 %v1798, %v1805
    %v1811 = vadd.f32 %v1799, %v1807
    %v1812 = vmul.f32 %v943, %v1783
    %v1813 = vmul.f32 %v947, %v1783
    %1816 = vrot.lane.b32.xlu0 %v1812, 125
    %v1817 = vpop.permute.xlu0 %1816
    %1818 = vrot.lane.b32.xlu0 %v1813, 125
    %v1819 = vpop.permute.xlu0 %1818
    %v1822 = vadd.f32 %v1810, %v1817
    %v1823 = vadd.f32 %v1811, %v1819
    %v1824 = vmul.f32 %v963, %v1783
    %v1825 = vmul.f32 %v967, %v1783
    %1828 = vrot.lane.b32.xlu0 %v1824, 124
    %v1829 = vpop.permute.xlu0 %1828
    %1830 = vrot.lane.b32.xlu0 %v1825, 124
    %v1831 = vpop.permute.xlu0 %1830
    %v1834 = vadd.f32 %v1822, %v1829
    %v1835 = vadd.f32 %v1823, %v1831
    %v1836 = vmul.f32 %v983, %v1783
    %v1837 = vmul.f32 %v987, %v1783
    %1840 = vrot.lane.b32.xlu0 %v1836, 123
    %v1841 = vpop.permute.xlu0 %1840
    %1842 = vrot.lane.b32.xlu0 %v1837, 123
    %v1843 = vpop.permute.xlu0 %1842
    %v1846 = vadd.f32 %v1834, %v1841
    %v1847 = vadd.f32 %v1835, %v1843
    %v1848 = vlaneseq
    %v1849 = vshrl.u32 %v1848, 7
    %v1850 = vsub.s32 7, %v1849
    %v1851 = vrot.slane %v1371, %v1850
    %v1852 = vmul.f32 %v1003, %v1851
    %v1853 = vmul.f32 %v1007, %v1851
    %v1854 = vadd.f32 %v1846, %v1852
    %v1855 = vadd.f32 %v1847, %v1853
    %v1856 = vmul.f32 %v1019, %v1851
    %v1857 = vmul.f32 %v1023, %v1851
    %1860 = vrot.lane.b32.xlu0 %v1856, 127
    %v1861 = vpop.permute.xlu0 %1860
    %1862 = vrot.lane.b32.xlu0 %v1857, 127
    %v1863 = vpop.permute.xlu0 %1862
    %v1866 = vadd.f32 %v1854, %v1861
    %v1867 = vadd.f32 %v1855, %v1863
    %v1868 = vmul.f32 %v1039, %v1851
    %v1869 = vmul.f32 %v1043, %v1851
    %1872 = vrot.lane.b32.xlu0 %v1868, 126
    %v1873 = vpop.permute.xlu0 %1872
    %1874 = vrot.lane.b32.xlu0 %v1869, 126
    %v1875 = vpop.permute.xlu0 %1874
    %v1878 = vadd.f32 %v1866, %v1873
    %v1879 = vadd.f32 %v1867, %v1875
    %v1880 = vmul.f32 %v1059, %v1851
    %v1881 = vmul.f32 %v1063, %v1851
    %1884 = vrot.lane.b32.xlu0 %v1880, 125
    %v1885 = vpop.permute.xlu0 %1884
    %1886 = vrot.lane.b32.xlu0 %v1881, 125
    %v1887 = vpop.permute.xlu0 %1886
    %v1890 = vadd.f32 %v1878, %v1885
    %v1891 = vadd.f32 %v1879, %v1887
    %v1892 = vmul.f32 %v1079, %v1851
    %v1893 = vmul.f32 %v1083, %v1851
    %1896 = vrot.lane.b32.xlu0 %v1892, 124
    %v1897 = vpop.permute.xlu0 %1896
    %1898 = vrot.lane.b32.xlu0 %v1893, 124
    %v1899 = vpop.permute.xlu0 %1898
    %v1902 = vadd.f32 %v1890, %v1897
    %v1903 = vadd.f32 %v1891, %v1899
    %v1904 = vmul.f32 %v1099, %v1851
    %v1905 = vmul.f32 %v1103, %v1851
    %1908 = vrot.lane.b32.xlu0 %v1904, 123
    %v1909 = vpop.permute.xlu0 %1908
    %1910 = vrot.lane.b32.xlu0 %v1905, 123
    %v1911 = vpop.permute.xlu0 %1910
    %v1914 = vadd.f32 %v1902, %v1909
    %v1915 = vadd.f32 %v1903, %v1911
    %v1916 = vmax.f32 %v1914, 0.0
    %v1917 = vmax.f32 %v1915, 0.0
    %1920 = vrot.lane.b32.xlu0 %v1916, 127
    %v1921 = vpop.permute.xlu0 %1920
    %1922 = vrot.lane.b32.xlu0 %v1917, 127
    %v1923 = vpop.permute.xlu0 %1922
    %v1926 = vmax.f32 %v1916, %v1921
    %v1927 = vmax.f32 %v1917, %v1923
    %1928 = vrot.lane.b32.xlu0 %v1916, 126
    %v1929 = vpop.permute.xlu0 %1928
    %1930 = vrot.lane.b32.xlu0 %v1917, 126
    %v1931 = vpop.permute.xlu0 %1930
    %v1934 = vmax.f32 %v1926, %v1929
    %v1935 = vmax.f32 %v1927, %v1931
    %1936 = vrot.lane.b32.xlu0 %v1916, 125
    %v1937 = vpop.permute.xlu0 %1936
    %1938 = vrot.lane.b32.xlu0 %v1917, 125
    %v1939 = vpop.permute.xlu0 %1938
    %v1942 = vmax.f32 %v1934, %v1937
    %v1943 = vmax.f32 %v1935, %v1939
    %1944 = vrot.lane.b32.xlu0 %v1916, 124
    %v1945 = vpop.permute.xlu0 %1944
    %1946 = vrot.lane.b32.xlu0 %v1917, 124
    %v1947 = vpop.permute.xlu0 %1946
    %v1950 = vmax.f32 %v1942, %v1945
    %v1951 = vmax.f32 %v1943, %v1947
    %1952 = vst.msk [vmem:[#allocation2 + $0x1] sm:$0x1] %vm1153, %v1950
    %v1955 = vunpack.c.l.s4 1983009808
    %v1956 = vunpack.c.0.s8 %v1955
    %v1957 = vlaneseq
    %v1958 = vshrl.u32 %v1957, 7
    %v1959 = vsub.s32 %v1956, %v1958
    %v1960 = vrot.slane %v1950, %v1959
    %v1961 = vrot.slane %v1960, 7
    %v1962 = vrot.slane %v1961, 2
    %1963 = vrot.lane.b32.xlu0 %v1962, 23
    %v1964 = vpop.permute.xlu0 %1963
    %1966 = vst.msk [vmem:[#allocation2 + $0x1] sm:$0x1] %vm1168, %v1964
    %v1967 = vcombine.high %v1960, %v1960
    %1968 = vrot.lane.b32.xlu0 %v1967, 46
    %v1969 = vpop.permute.xlu0 %1968
    %1971 = vst.msk [vmem:[#allocation2 + $0x1] sm:$0x1] %vm1174, %v1969
    %v1972 = vrot.slane %v1967, 7
    %v1973 = vrot.slane %v1972, 2
    %1974 = vrot.lane.b32.xlu0 %v1973, 69
    %v1975 = vpop.permute.xlu0 %1974
    %1977 = vst.msk [vmem:[#allocation2 + $0x1] sm:$0x1] %vm1181, %v1975
    %v1978 = vcombine.high %v1950, %v1950
    %v1980 = vunpack.c.l.s4 1983009808
    %v1981 = vunpack.c.0.s8 %v1980
    %v1982 = vlaneseq
    %v1983 = vshrl.u32 %v1982, 7
    %v1984 = vsub.s32 %v1981, %v1983
    %v1985 = vrot.slane %v1978, %v1984
    %1986 = vrot.lane.b32.xlu0 %v1985, 92
    %v1987 = vpop.permute.xlu0 %1986
    %1989 = vst.msk [vmem:[#allocation2 + $0x1] sm:$0x1] %vm1194, %v1987
    %v1990 = vrot.slane %v1985, 7
    %v1991 = vrot.slane %v1990, 2
    %1992 = vrot.lane.b32.xlu0 %v1991, 115
    %v1993 = vpop.permute.xlu0 %1992
    %v1994 = vrot.slane %v1993, 6
    %v1995 = vsel %vm1201, %v1994, %v1993
    %1997 = vst.msk [vmem:[#allocation2 + $0x1] sm:$0x5] %vm1206, %v1995
    %v1998 = vcombine.high %v1985, %v1985
    %1999 = vrot.lane.b32.xlu0 %v1998, 10
    %v2000 = vpop.permute.xlu0 %1999
    %2002 = vst.msk [vmem:[#allocation2 + $0x3] sm:$0x1] %vm1212, %v2000
    %v2003 = vrot.slane %v1998, 7
    %v2004 = vrot.slane %v2003, 2
    %2005 = vrot.lane.b32.xlu0 %v2004, 33
    %v2006 = vpop.permute.xlu0 %2005
    %2008 = vst.msk [vmem:[#allocation2 + $0x3] sm:$0x1] %vm1219, %v2006
    %v2011 = vunpack.c.l.s4 1983009808
    %v2012 = vunpack.c.0.s8 %v2011
    %v2013 = vlaneseq
    %v2014 = vshrl.u32 %v2013, 7
    %v2015 = vsub.s32 %v2012, %v2014
    %v2016 = vrot.slane %v1951, %v2015
    %2017 = vrot.lane.b32.xlu0 %v2016, 56
    %v2018 = vpop.permute.xlu0 %2017
    %2020 = vst.msk [vmem:[#allocation2 + $0x3] sm:$0x1] %vm1232, %v2018
    %v2021 = vrot.slane %v2016, 7
    %v2022 = vrot.slane %v2021, 2
    %2023 = vrot.lane.b32.xlu0 %v2022, 79
    %v2024 = vpop.permute.xlu0 %2023
    %2026 = vst.msk [vmem:[#allocation2 + $0x3] sm:$0x1] %vm1239, %v2024
    %v2027 = vcombine.high %v2016, %v2016
    %2028 = vrot.lane.b32.xlu0 %v2027, 102
    %v2029 = vpop.permute.xlu0 %2028
    %2031 = vst.msk [vmem:[#allocation2 + $0x3] sm:$0x1] %vm1245, %v2029
    %v2032 = vrot.slane %v2027, 7
    %v2033 = vrot.slane %v2032, 2
    %2034 = vrot.lane.b32.xlu0 %v2033, 125
    %v2035 = vpop.permute.xlu0 %2034
    %v2036 = vrot.slane %v2035, 6
    %v2037 = vsel %vm1252, %v2036, %v2035
    %2039 = vst.msk [vmem:[#allocation2 + $0x3] sm:$0x5] %vm1257, %v2037
    %v2040 = vcombine.high %v1951, %v1951
    %v2042 = vunpack.c.l.s4 1983009808
    %v2043 = vunpack.c.0.s8 %v2042
    %v2044 = vlaneseq
    %v2045 = vshrl.u32 %v2044, 7
    %v2046 = vsub.s32 %v2043, %v2045
    %v2047 = vrot.slane %v2040, %v2046
    %2048 = vrot.lane.b32.xlu0 %v2047, 20
    %v2049 = vpop.permute.xlu0 %2048
    %2051 = vst.msk [vmem:[#allocation2 + $0x5] sm:$0x1] %vm1270, %v2049
    %v2052 = vrot.slane %v2047, 7
    %v2053 = vrot.slane %v2052, 2
    %2054 = vrot.lane.b32.xlu0 %v2053, 43
    %v2055 = vpop.permute.xlu0 %2054
    %2057 = vst.msk [vmem:[#allocation2 + $0x5] sm:$0x1] %vm1277, %v2055
    %v2058 = vcombine.high %v2047, %v2047
    %2059 = vrot.lane.b32.xlu0 %v2058, 66
    %v2060 = vpop.permute.xlu0 %2059
    %2062 = vst.msk [vmem:[#allocation2 + $0x5] sm:$0x1] %vm1283, %v2060
    %v2063 = vrot.slane %v2058, 7
    %v2064 = vrot.slane %v2063, 2
    %2065 = vrot.lane.b32.xlu0 %v2064, 89
    %v2066 = vpop.permute.xlu0 %2065
    %2068 = vst.msk [vmem:[#allocation2 + $0x5] sm:$0x1] %vm1290, %v2066
    %v2069 = vld [vmem:[#allocation2] sm:$0x3f]
    %v2071 = vcombine.high %v2069, %v2069
    %v2073 = vunpack.c.l.s4 1983009808
    %v2074 = vunpack.c.0.s8 %v2073
    %v2075 = vlaneseq
    %v2076 = vshrl.u32 %v2075, 7
    %v2077 = vsub.s32 %v2074, %v2076
    %v2078 = vrot.slane %v2069, %v2077
    %v2080 = vunpack.c.l.s4 1983009808
    %v2081 = vunpack.c.0.s8 %v2080
    %v2082 = vlaneseq
    %v2083 = vshrl.u32 %v2082, 7
    %v2084 = vsub.s32 %v2081, %v2083
    %v2085 = vrot.slane %v2071, %v2084
    %v2086 = vcombine.high %v2078, %v2078
    %v2090 = vpack.c.bf16 %v2078, %v2078
    %v2091 = vpack.c.bf16 %v2086, %v2086
    %v2092 = vpack.c.bf16 %v2085, %v2085
    %v2093 = vld [vmem:[%s5] sm:$0xf]
    %v2094 = vld [vmem:[%s5 + $0x4] sm:$0xf]
    %v2095 = vld [vmem:[%s5 + $0x8] sm:$0xf]
    %v2096 = vld [vmem:[%s5 + $0xc] sm:$0xf]
    %v2097 = vld [vmem:[%s5 + $0x10] sm:$0xf]
    %v2098 = vld [vmem:[%s5 + $0x14] sm:$0xf]
    %v2099 = vld [vmem:[%s5 + $0x18] sm:$0xf]
    %v2100 = vld [vmem:[%s5 + $0x1c] sm:$0xf]
    %v2101 = vld [vmem:[%s5 + $0x20] sm:$0xf]
    %v2102 = vld [vmem:[%s5 + $0x24] sm:$0xf]
    %v2103 = vld [vmem:[%s5 + $0x28] sm:$0xf]
    %v2104 = vld [vmem:[%s5 + $0x2c] sm:$0xf]
    %v2105 = vld [vmem:[%s5 + $0x30] sm:$0xf]
    %v2106 = vld [vmem:[%s5 + $0x34] sm:$0xf]
    %v2107 = vld [vmem:[%s5 + $0x38] sm:$0xf]
    %v2108 = vld [vmem:[%s5 + $0x3c] sm:$0xf]
    %v2109 = vld [vmem:[%s5 + $0x40] sm:$0xf]
    %v2110 = vld [vmem:[%s5 + $0x44] sm:$0xf]
    %v2111 = vld [vmem:[%s5 + $0x48] sm:$0xf]
    %v2112 = vld [vmem:[%s5 + $0x4c] sm:$0xf]
    %v2113 = vld [vmem:[%s5 + $0x50] sm:$0xf]
    %v2114 = vld [vmem:[%s5 + $0x54] sm:$0xf]
    %v2115 = vld [vmem:[%s5 + $0x58] sm:$0xf]
    %v2116 = vld [vmem:[%s5 + $0x5c] sm:$0xf]
    %v2117 = vld [vmem:[%s5 + $0x60] sm:$0xf]
    %v2118 = vld [vmem:[%s5 + $0x64] sm:$0xf]
    %v2119 = vld [vmem:[%s5 + $0x68] sm:$0xf]
    %v2120 = vld [vmem:[%s5 + $0x6c] sm:$0xf]
    %v2121 = vld [vmem:[%s5 + $0x70] sm:$0xf]
    %v2122 = vld [vmem:[%s5 + $0x74] sm:$0xf]
    %v2123 = vld [vmem:[%s5 + $0x78] sm:$0xf]
    %v2124 = vld [vmem:[%s5 + $0x7c] sm:$0xf]
    %v2125 = vld [vmem:[%s5 + $0x80] sm:$0xf]
    %v2126 = vld [vmem:[%s5 + $0x84] sm:$0xf]
    %v2127 = vld [vmem:[%s5 + $0x88] sm:$0xf]
    %v2128 = vld [vmem:[%s5 + $0x8c] sm:$0xf]
    %v2129 = vld [vmem:[%s5 + $0x90] sm:$0xf]
    %v2130 = vld [vmem:[%s5 + $0x94] sm:$0xf]
    %v2131 = vld [vmem:[%s5 + $0x98] sm:$0xf]
    %v2132 = vld [vmem:[%s5 + $0x9c] sm:$0xf]
    %v2133 = vld [vmem:[%s5 + $0xa0] sm:$0xf]
    %v2134 = vld [vmem:[%s5 + $0xa4] sm:$0xf]
    %v2135 = vld [vmem:[%s5 + $0xa8] sm:$0xf]
    %v2136 = vld [vmem:[%s5 + $0xac] sm:$0xf]
    %v2137 = vld [vmem:[%s5 + $0xb0] sm:$0xf]
    %v2138 = vld [vmem:[%s5 + $0xb4] sm:$0xf]
    %v2139 = vld [vmem:[%s6] sm:$0x1]
    %v2141 = vlaneseq
    %v2142 = vshrl.u32 %v2141, 7
    %v2143 = vsub.s32 0, %v2142
    %v2144 = vrot.slane %v2139, %v2143
    %v2192 = vunpack.c.l.b16 %v2093
    %v2193 = vunpack.c.l.b16 %v2094
    %v2194 = vunpack.c.l.b16 %v2095
    %v2195 = vunpack.c.l.b16 %v2096
    %v2196 = vunpack.c.l.b16 %v2097
    %v2197 = vunpack.c.l.b16 %v2098
    %v2198 = vunpack.c.l.b16 %v2099
    %v2199 = vunpack.c.l.b16 %v2100
    %v2200 = vunpack.c.l.b16 %v2101
    %v2201 = vunpack.c.l.b16 %v2102
    %v2202 = vunpack.c.l.b16 %v2103
    %v2203 = vunpack.c.l.b16 %v2104
    %v2204 = vunpack.c.l.b16 %v2105
    %v2205 = vunpack.c.l.b16 %v2106
    %v2206 = vunpack.c.l.b16 %v2107
    %v2207 = vunpack.c.l.b16 %v2108
    %v2208 = vunpack.c.l.b16 %v2109
    %v2209 = vunpack.c.l.b16 %v2110
    %v2210 = vunpack.c.l.b16 %v2111
    %v2211 = vunpack.c.l.b16 %v2112
    %v2212 = vunpack.c.l.b16 %v2113
    %v2213 = vunpack.c.l.b16 %v2114
    %v2214 = vunpack.c.l.b16 %v2115
    %v2215 = vunpack.c.l.b16 %v2116
    %v2216 = vunpack.c.l.b16 %v2117
    %v2217 = vunpack.c.l.b16 %v2118
    %v2218 = vunpack.c.l.b16 %v2119
    %v2219 = vunpack.c.l.b16 %v2120
    %v2220 = vunpack.c.l.b16 %v2121
    %v2221 = vunpack.c.l.b16 %v2122
    %v2222 = vunpack.c.l.b16 %v2123
    %v2223 = vunpack.c.l.b16 %v2124
    %v2224 = vunpack.c.l.b16 %v2125
    %v2225 = vunpack.c.l.b16 %v2126
    %v2226 = vunpack.c.l.b16 %v2127
    %v2227 = vunpack.c.l.b16 %v2128
    %v2228 = vunpack.c.l.b16 %v2129
    %v2229 = vunpack.c.l.b16 %v2130
    %v2230 = vunpack.c.l.b16 %v2131
    %v2231 = vunpack.c.l.b16 %v2132
    %v2232 = vunpack.c.l.b16 %v2133
    %v2233 = vunpack.c.l.b16 %v2134
    %v2234 = vunpack.c.l.b16 %v2135
    %v2235 = vunpack.c.l.b16 %v2136
    %v2236 = vunpack.c.l.b16 %v2137
    %v2237 = vunpack.c.l.b16 %v2138
    %v2238 = vpack.c.b16 %v2193, %v2192
    %v2239 = vpack.c.b16 %v2195, %v2194
    %v2240 = vpack.c.b16 %v2197, %v2196
    %v2241 = vpack.c.b16 %v2199, %v2198
    %v2242 = vpack.c.b16 %v2201, %v2200
    %v2243 = vpack.c.b16 %v2203, %v2202
    %v2244 = vpack.c.b16 %v2205, %v2204
    %v2245 = vpack.c.b16 %v2207, %v2206
    %v2246 = vpack.c.b16 %v2209, %v2208
    %v2247 = vpack.c.b16 %v2211, %v2210
    %v2248 = vpack.c.b16 %v2213, %v2212
    %v2249 = vpack.c.b16 %v2215, %v2214
    %v2250 = vpack.c.b16 %v2217, %v2216
    %v2251 = vpack.c.b16 %v2219, %v2218
    %v2252 = vpack.c.b16 %v2221, %v2220
    %v2253 = vpack.c.b16 %v2223, %v2222
    %v2254 = vpack.c.b16 %v2225, %v2224
    %v2255 = vpack.c.b16 %v2227, %v2226
    %v2256 = vpack.c.b16 %v2229, %v2228
    %v2257 = vpack.c.b16 %v2231, %v2230
    %v2258 = vpack.c.b16 %v2233, %v2232
    %v2259 = vpack.c.b16 %v2235, %v2234
    %v2260 = vpack.c.b16 %v2237, %v2236
    %vm2284 = vcmask 916480
    %v2286 = vsel %vm2284, %v2092, 0
    %2288 = vmatprep.subr.bf16.mxu0 0
    %2289 = vmatpush1.bf16.msra.mxu0 %v2238
    %2290 = vmatprep.subr.bf16.mxu0 0
    %2291 = vmatpush1.bf16.msra.mxu0 %v2239
    %2292 = vmatprep.subr.bf16.mxu0 0
    %2293 = vmatpush1.bf16.msra.mxu0 %v2240
    %2294 = vmatprep.subr.bf16.mxu0 0
    %2295 = vmatpush1.bf16.msra.mxu0 %v2241
    %2296 = vmatprep.subr.bf16.mxu0 0
    %2297 = vmatpush1.bf16.msra.mxu0 %v2242
    %2298 = vmatprep.subr.bf16.mxu0 0
    %2299 = vmatpush1.bf16.msra.mxu0 %v2243
    %2300 = vmatprep.subr.bf16.mxu0 0
    %2301 = vmatpush1.bf16.msra.mxu0 %v2244
    %2302 = vmatprep.subr.bf16.mxu0 0
    %2303 = vmatpush1.bf16.msra.mxu0 %v2245
    %2304 = vmatprep.subr.bf16.mxu0 0
    %2305 = vmatpush1.bf16.msra.mxu0 %v2246
    %2306 = vmatprep.subr.bf16.mxu0 0
    %2307 = vmatpush1.bf16.msra.mxu0 %v2247
    %2308 = vmatprep.subr.bf16.mxu0 0
    %2309 = vmatpush1.bf16.msra.mxu0 %v2248
    %2310 = vmatprep.subr.bf16.mxu0 0
    %2311 = vmatpush1.bf16.msra.mxu0 %v2249
    %2312 = vmatprep.subr.bf16.mxu0 0
    %2313 = vmatpush1.bf16.msra.mxu0 %v2250
    %2314 = vmatprep.subr.bf16.mxu0 0
    %2315 = vmatpush1.bf16.msra.mxu0 %v2251
    %2316 = vmatprep.subr.bf16.mxu0 0
    %2317 = vmatpush1.bf16.msra.mxu0 %v2252
    %2318 = vmatprep.subr.bf16.mxu0 0
    %2319 = vmatpush1.bf16.msra.mxu0 %v2253
    %2320 = vmatprep.mubr.bf16.mxu0 %v2091
    %2321 = vmatmul.mubr.bf16.gmra.mrb[0].mxu0 %v2090
    %v2322 = vpop.f32.mrb[0].mxu0
    %v2323 = vadd.f32 %v2144, %v2322
    %v2324 = vpop.f32.mrb[0].mxu0
    %v2325 = vpop.f32.mrb[0].mxu0
    %v2326 = vpop.f32.mrb[0].mxu0
    %2327 = vdwg.mxu0
    %2328 = vmatprep.subr.bf16.mxu0 0
    %2329 = vmatpush1.bf16.msra.mxu0 %v2254
    %2330 = vmatprep.subr.bf16.mxu0 0
    %2331 = vmatpush1.bf16.msra.mxu0 %v2255
    %2332 = vmatprep.subr.bf16.mxu0 0
    %2333 = vmatpush1.bf16.msra.mxu0 %v2256
    %2334 = vmatprep.subr.bf16.mxu0 0
    %2335 = vmatpush1.bf16.msra.mxu0 %v2257
    %2336 = vmatprep.subr.bf16.mxu0 0
    %2337 = vmatpush1.bf16.msra.mxu0 %v2258
    %2338 = vmatprep.subr.bf16.mxu0 0
    %2339 = vmatpush1.bf16.msra.mxu0 %v2259
    %2340 = vmatprep.subr.bf16.mxu0 0
    %2341 = vmatpush1.bf16.msra.mxu0 %v2260
    %2342 = vmatprep.subr.bf16.mxu0 0
    %2343 = vmatpush1.bf16.msra.mxu0 0
    %2344 = vmatprep.subr.bf16.mxu0 0
    %2345 = vmatpush1.bf16.msra.mxu0 0
    %2346 = vmatprep.subr.bf16.mxu0 0
    %2347 = vmatpush1.bf16.msra.mxu0 0
    %2348 = vmatprep.subr.bf16.mxu0 0
    %2349 = vmatpush1.bf16.msra.mxu0 0
    %2350 = vmatprep.subr.bf16.mxu0 0
    %2351 = vmatpush1.bf16.msra.mxu0 0
    %2352 = vmatprep.subr.bf16.mxu0 0
    %2353 = vmatpush1.bf16.msra.mxu0 0
    %2354 = vmatprep.subr.bf16.mxu0 0
    %2355 = vmatpush1.bf16.msra.mxu0 0
    %2356 = vmatprep.subr.bf16.mxu0 0
    %2357 = vmatpush1.bf16.msra.mxu0 0
    %2358 = vmatprep.subr.bf16.mxu0 0
    %2359 = vmatpush1.bf16.msra.mxu0 0
    %2360 = vmatprep.mubr.bf16.mxu0 0
    %2361 = vmatmul.mubr.bf16.gmra.mrb[0].mxu0 %v2286
    %v2362 = vpop.f32.mrb[0].mxu0
    %v2363 = vadd.f32 %v2323, %v2362
    %v2364 = vpop.f32.mrb[0].mxu0
    %v2365 = vpop.f32.mrb[0].mxu0
    %v2366 = vpop.f32.mrb[0].mxu0
    %2367 = vdwg.mxu0
    %v2368 = vmax.f32 %v2363, 0.0
    %v2369 = vpack.c.bf16 %v2368, %v2368
    %v2370 = vld [vmem:[%s7] sm:$0xf]
    %v2371 = vld [vmem:[%s7 + $0x4] sm:$0xf]
    %v2372 = vld [vmem:[%s7 + $0x8] sm:$0xf]
    %v2373 = vld [vmem:[%s7 + $0xc] sm:$0xf]
    %v2374 = vld [vmem:[%s7 + $0x10] sm:$0xf]
    %v2375 = vld [vmem:[%s7 + $0x14] sm:$0xf]
    %v2376 = vld [vmem:[%s7 + $0x18] sm:$0xf]
    %v2377 = vld [vmem:[%s7 + $0x1c] sm:$0xf]
    %v2378 = vld [vmem:[%s8] sm:$0x1]
    %v2380 = vlaneseq
    %v2381 = vshrl.u32 %v2380, 7
    %v2382 = vsub.s32 0, %v2381
    %v2383 = vrot.slane %v2378, %v2382
    %v2393 = vunpack.c.l.b16 %v2370
    %v2394 = vunpack.c.l.b16 %v2371
    %v2395 = vunpack.c.l.b16 %v2372
    %v2396 = vunpack.c.l.b16 %v2373
    %v2397 = vunpack.c.l.b16 %v2374
    %v2398 = vunpack.c.l.b16 %v2375
    %v2399 = vunpack.c.l.b16 %v2376
    %v2400 = vunpack.c.l.b16 %v2377
    %v2401 = vpack.c.b16 %v2394, %v2393
    %v2402 = vpack.c.b16 %v2396, %v2395
    %v2403 = vpack.c.b16 %v2398, %v2397
    %v2404 = vpack.c.b16 %v2400, %v2399
    %vm2409 = vcmask 523264
    %v2411 = vsel %vm2409, %v2369, 0
    %2413 = vmatprep.subr.bf16.mxu0 0
    %2414 = vmatpush1.bf16.msra.mxu0 %v2401
    %2415 = vmatprep.subr.bf16.mxu0 0
    %2416 = vmatpush1.bf16.msra.mxu0 %v2402
    %2417 = vmatprep.subr.bf16.mxu0 0
    %2418 = vmatpush1.bf16.msra.mxu0 %v2403
    %2419 = vmatprep.subr.bf16.mxu0 0
    %2420 = vmatpush1.bf16.msra.mxu0 %v2404
    %2421 = vmatprep.subr.bf16.mxu0 0
    %2422 = vmatpush1.bf16.msra.mxu0 0
    %2423 = vmatprep.subr.bf16.mxu0 0
    %2424 = vmatpush1.bf16.msra.mxu0 0
    %2425 = vmatprep.subr.bf16.mxu0 0
    %2426 = vmatpush1.bf16.msra.mxu0 0
    %2427 = vmatprep.subr.bf16.mxu0 0
    %2428 = vmatpush1.bf16.msra.mxu0 0
    %2429 = vmatprep.subr.bf16.mxu0 0
    %2430 = vmatpush1.bf16.msra.mxu0 0
    %2431 = vmatprep.subr.bf16.mxu0 0
    %2432 = vmatpush1.bf16.msra.mxu0 0
    %2433 = vmatprep.subr.bf16.mxu0 0
    %2434 = vmatpush1.bf16.msra.mxu0 0
    %2435 = vmatprep.subr.bf16.mxu0 0
    %2436 = vmatpush1.bf16.msra.mxu0 0
    %2437 = vmatprep.subr.bf16.mxu0 0
    %2438 = vmatpush1.bf16.msra.mxu0 0
    %2439 = vmatprep.subr.bf16.mxu0 0
    %2440 = vmatpush1.bf16.msra.mxu0 0
    %2441 = vmatprep.subr.bf16.mxu0 0
    %2442 = vmatpush1.bf16.msra.mxu0 0
    %2443 = vmatprep.subr.bf16.mxu0 0
    %2444 = vmatpush1.bf16.msra.mxu0 0
    %2445 = vmatprep.mubr.bf16.mxu0 0
    %2446 = vmatmul.mubr.bf16.gmra.mrb[0].mxu0 %v2411
    %v2447 = vpop.f32.mrb[0].mxu0
    %v2448 = vadd.f32 %v2383, %v2447
    %v2449 = vpop.f32.mrb[0].mxu0
    %v2450 = vpop.f32.mrb[0].mxu0
    %v2451 = vpop.f32.mrb[0].mxu0
    %2452 = vdwg.mxu0
    %v2453 = vmax.f32 %v2448, 0.0
    %v2454 = vpack.c.bf16 %v2453, %v2453
    %v2455 = vld [vmem:[%s9] sm:$0xf]
    %v2456 = vld [vmem:[%s9 + $0x4] sm:$0xf]
    %v2457 = vld [vmem:[%s9 + $0x8] sm:$0xf]
    %v2458 = vld [vmem:[%s9 + $0xc] sm:$0xf]
    %v2459 = vld [vmem:[%s10] sm:$0x1]
    %v2461 = vlaneseq
    %v2462 = vshrl.u32 %v2461, 7
    %v2463 = vsub.s32 0, %v2462
    %v2464 = vrot.slane %v2459, %v2463
    %v2470 = vunpack.c.l.b16 %v2455
    %v2471 = vunpack.c.l.b16 %v2456
    %v2472 = vunpack.c.l.b16 %v2457
    %v2473 = vunpack.c.l.b16 %v2458
    %v2474 = vpack.c.b16 %v2471, %v2470
    %v2475 = vpack.c.b16 %v2473, %v2472
    %vm2478 = vcmask 261120
    %v2480 = vsel %vm2478, %v2454, 0
    %2482 = vmatprep.subr.bf16.mxu0 0
    %2483 = vmatpush1.bf16.msra.mxu0 %v2474
    %2484 = vmatprep.subr.bf16.mxu0 0
    %2485 = vmatpush1.bf16.msra.mxu0 %v2475
    %2486 = vmatprep.subr.bf16.mxu0 0
    %2487 = vmatpush1.bf16.msra.mxu0 0
    %2488 = vmatprep.subr.bf16.mxu0 0
    %2489 = vmatpush1.bf16.msra.mxu0 0
    %2490 = vmatprep.subr.bf16.mxu0 0
    %2491 = vmatpush1.bf16.msra.mxu0 0
    %2492 = vmatprep.subr.bf16.mxu0 0
    %2493 = vmatpush1.bf16.msra.mxu0 0
    %2494 = vmatprep.subr.bf16.mxu0 0
    %2495 = vmatpush1.bf16.msra.mxu0 0
    %2496 = vmatprep.subr.bf16.mxu0 0
    %2497 = vmatpush1.bf16.msra.mxu0 0
    %2498 = vmatprep.subr.bf16.mxu0 0
    %2499 = vmatpush1.bf16.msra.mxu0 0
    %2500 = vmatprep.subr.bf16.mxu0 0
    %2501 = vmatpush1.bf16.msra.mxu0 0
    %2502 = vmatprep.subr.bf16.mxu0 0
    %2503 = vmatpush1.bf16.msra.mxu0 0
    %2504 = vmatprep.subr.bf16.mxu0 0
    %2505 = vmatpush1.bf16.msra.mxu0 0
    %2506 = vmatprep.subr.bf16.mxu0 0
    %2507 = vmatpush1.bf16.msra.mxu0 0
    %2508 = vmatprep.subr.bf16.mxu0 0
    %2509 = vmatpush1.bf16.msra.mxu0 0
    %2510 = vmatprep.subr.bf16.mxu0 0
    %2511 = vmatpush1.bf16.msra.mxu0 0
    %2512 = vmatprep.subr.bf16.mxu0 0
    %2513 = vmatpush1.bf16.msra.mxu0 0
    %2514 = vmatprep.mubr.bf16.mxu0 0
    %2515 = vmatmul.mubr.bf16.gmra.mrb[0].mxu0 %v2480
    %v2516 = vpop.f32.mrb[0].mxu0
    %v2517 = vadd.f32 %v2464, %v2516
    %v2518 = vpop.f32.mrb[0].mxu0
    %v2519 = vpop.f32.mrb[0].mxu0
    %v2520 = vpop.f32.mrb[0].mxu0
    %2521 = vdwg.mxu0
    %v2522 = vmax.f32 %v2517, 0.0
    %v2523 = vpack.c.bf16 %v2522, %v2522
    %v2524 = vld [vmem:[%s11] sm:$0xf]
    %v2525 = vld [vmem:[%s11 + $0x4] sm:$0xf]
    %v2526 = vld [vmem:[%s12] sm:$0x1]
    %v2528 = vlaneseq
    %v2529 = vshrl.u32 %v2528, 7
    %v2530 = vsub.s32 0, %v2529
    %v2531 = vrot.slane %v2526, %v2530
    %v2535 = vunpack.c.l.b16 %v2524
    %v2536 = vunpack.c.l.b16 %v2525
    %v2537 = vpack.c.b16 %v2536, %v2535
    %vm2539 = vcmask 130048
    %v2541 = vsel %vm2539, %v2523, 0
    %2543 = vmatprep.subr.bf16.mxu0 0
    %2544 = vmatpush1.bf16.msra.mxu0 %v2537
    %2545 = vmatprep.subr.bf16.mxu0 0
    %2546 = vmatpush1.bf16.msra.mxu0 0
    %2547 = vmatprep.subr.bf16.mxu0 0
    %2548 = vmatpush1.bf16.msra.mxu0 0
    %2549 = vmatprep.subr.bf16.mxu0 0
    %2550 = vmatpush1.bf16.msra.mxu0 0
    %2551 = vmatprep.subr.bf16.mxu0 0
    %2552 = vmatpush1.bf16.msra.mxu0 0
    %2553 = vmatprep.subr.bf16.mxu0 0
    %2554 = vmatpush1.bf16.msra.mxu0 0
    %2555 = vmatprep.subr.bf16.mxu0 0
    %2556 = vmatpush1.bf16.msra.mxu0 0
    %2557 = vmatprep.subr.bf16.mxu0 0
    %2558 = vmatpush1.bf16.msra.mxu0 0
    %2559 = vmatprep.subr.bf16.mxu0 0
    %2560 = vmatpush1.bf16.msra.mxu0 0
    %2561 = vmatprep.subr.bf16.mxu0 0
    %2562 = vmatpush1.bf16.msra.mxu0 0
    %2563 = vmatprep.subr.bf16.mxu0 0
    %2564 = vmatpush1.bf16.msra.mxu0 0
    %2565 = vmatprep.subr.bf16.mxu0 0
    %2566 = vmatpush1.bf16.msra.mxu0 0
    %2567 = vmatprep.subr.bf16.mxu0 0
    %2568 = vmatpush1.bf16.msra.mxu0 0
    %2569 = vmatprep.subr.bf16.mxu0 0
    %2570 = vmatpush1.bf16.msra.mxu0 0
    %2571 = vmatprep.subr.bf16.mxu0 0
    %2572 = vmatpush1.bf16.msra.mxu0 0
    %2573 = vmatprep.subr.bf16.mxu0 0
    %2574 = vmatpush1.bf16.msra.mxu0 0
    %2575 = vmatprep.mubr.bf16.mxu0 0
    %2576 = vmatmul.mubr.bf16.gmra.mrb[0].mxu0 %v2541
    %v2577 = vpop.f32.mrb[0].mxu0
    %v2578 = vadd.f32 %v2531, %v2577
    %v2579 = vpop.f32.mrb[0].mxu0
    %v2580 = vpop.f32.mrb[0].mxu0
    %v2581 = vpop.f32.mrb[0].mxu0
    %2582 = vdwg.mxu0
    %vm2583 = vcmask 9216
    %2584 = vst.msk [vmem:[#allocation3] sm:$0x3] %vm2583, %v2578
    // Predicated region
    $region54: #{net_forward.1} parent=1 // pred_check
      _
    $region55: #{net_forward.1} parent=1 // pred_check_branch
      %2586 = sbr.rel (0) target = $region57
    $region56: #{net_forward.1} parent=1 // pred_region
      %s2588 = ssub.s32 32, 32
      %2589 = vsyncadd [#allocation4], %s2588
      %s2591 = sshll.u32 [#allocation3], 4
      %s2592 = int_to_ptr.vmem [resolvable:$true] %s2591
      %2594 = dma.vmem_to_hbm [thread:$0]  %s2592, 32, %s13, [#allocation4]
    $region57: #{net_forward.1} parent=1 // pred_fallthru
      _
    // Predicated region
    $region58: #{net_forward.1} parent=1 // pred_check
      _
    $region59: #{net_forward.1} parent=1 // pred_check_branch
      %2596 = sbr.rel (0) target = $region61
    $region60: #{net_forward.1} parent=1 // pred_region
      %2597 = dma.done [#allocation4], 32
    $region61: #{net_forward.1} parent=1 // pred_fallthru
      _
    %2598 = vsyncpa [#allocation4], 1

</llo_original>
